<compile_context>
chip_gen: v6e
topology: v6e:2x2x1
jax: 0.10.0
libtpu: 0.0.40
codegen_flags: <defaults>
</compile_context>

<pallas_src>
import math
import functools

import jax
import jax.numpy as jnp
from jax.experimental import pallas as pl
from jax.experimental.pallas import tpu as pltpu

N_HEAD = 2  # n_head from the module default


# ----------------------------------------------------------------------------
# Fused kernel: per-feature q/k/v projections + multi-head attention +
#               torch view-reshuffle + c_proj residual + LayerNorm + MLP.
# ----------------------------------------------------------------------------
def _fused_kernel(x_ref, kv_ref, wq_ref, wkv_ref, wproj_ref, lnw_ref,
                  w1_ref, w2_ref, o_ref, *, n_head):
    F_, B, Tq, C = x_ref.shape
    Tk = kv_ref.shape[1]
    hd = C // n_head
    scale = 1.0 / math.sqrt(hd)

    x = x_ref[...]                                     # (F, B, Tq, C)
    xf = x.reshape(F_, B * Tq, C)

    # ---- K/V projections for ALL features: one wide (lane-dense) matmul ----
    kv2 = kv_ref[...].reshape(B * Tk, C)
    kvp = jnp.dot(kv2, wkv_ref[...],
                  preferred_element_type=jnp.float32)            # (B*Tk, 2*F*C)
    kvp = kvp.reshape(B, Tk, 2 * F_ * C)

    # ---- Q projections: one feature-batched matmul ----
    q_all = jax.lax.dot_general(
        xf, wq_ref[...],
        dimension_numbers=(((2,), (1,)), ((0,), (0,))),
        preferred_element_type=jnp.float32)                      # (F, B*Tq, C)
    q_all = q_all.reshape(F_, B, Tq, C)

    # ---- attention per (feature, head); everything stays as VMEM values ----
    y = [[None] * F_ for _ in range(n_head)]                     # y[head][feature]
    for f in range(F_):
        k_f = kvp[:, :, (2 * f) * C:(2 * f + 1) * C]             # (B, Tk, C)
        v_f = kvp[:, :, (2 * f + 1) * C:(2 * f + 2) * C]         # (B, Tk, C)
        for h in range(n_head):
            qh = q_all[f, :, :, h * hd:(h + 1) * hd]             # (B, Tq, hd)
            kh = k_f[:, :, h * hd:(h + 1) * hd]                  # (B, Tk, hd)
            vh = v_f[:, :, h * hd:(h + 1) * hd]                  # (B, Tk, hd)
            att = jnp.einsum('btd,bsd->bts', qh, kh,
                             preferred_element_type=jnp.float32) * scale
            m = jnp.max(att, axis=-1, keepdims=True)
            e = jnp.exp(att - m)
            inv = pl.reciprocal(jnp.sum(e, axis=-1, keepdims=True), approx=True)
            p = e * inv                                          # softmax over keys
            y[h][f] = jnp.einsum('bts,bsd->btd', p, vh,
                                 preferred_element_type=jnp.float32)  # (B, Tq, hd)

    # ---- replicate torch's y.transpose(1,2).contiguous().view(B, c, T, C) ----
    # Per-batch flat source layout is (head, feature, t, hd); the view reads it
    # back as (feature, t, head*hd), which mixes features AND time positions.
    y_in = []
    for i in range(F_):                     # output ("view") feature index
        rows = []
        for t in range(Tq):
            pieces = []
            for j in range(n_head):         # hd-wide chunk of the output row
                L = (i * Tq + t) * n_head + j       # flat hd-chunk index
                slot, t_src = L // Tq, L % Tq
                h_src, f_src = slot // F_, slot % F_
                pieces.append(y[h_src][f_src][:, t_src:t_src + 1, :])   # (B,1,hd)
            rows.append(jnp.concatenate(pieces, axis=-1))               # (B,1,C)
        y_in.append(jnp.concatenate(rows, axis=1))                      # (B,Tq,C)
    y_in = jnp.stack(y_in, axis=0).reshape(F_, B * Tq, C)

    # ---- per-feature c_proj (feature-batched) + residual ----
    proj = jax.lax.dot_general(
        y_in, wproj_ref[...],
        dimension_numbers=(((2,), (1,)), ((0,), (0,))),
        preferred_element_type=jnp.float32)                      # (F, B*Tq, C)
    h1 = (xf + proj).reshape(F_ * B * Tq, C)      # resid_dropout == identity

    # ---- shared LayerNorm (weight only, bias=False, eps=1e-5) ----
    mu = jnp.mean(h1, axis=-1, keepdims=True)
    var = jnp.mean((h1 - mu) ** 2, axis=-1, keepdims=True)
    ln = (h1 - mu) * jax.lax.rsqrt(var + 1e-5) * lnw_ref[...]

    # ---- shared MLP: c_fc -> exact GELU (erf) -> c_proj (dropout == identity) ----
    mid = jnp.dot(ln, w1_ref[...], preferred_element_type=jnp.float32)
    mid = 0.5 * mid * (1.0 + jax.lax.erf(mid * (1.0 / math.sqrt(2.0))))
    mlp = jnp.dot(mid, w2_ref[...], preferred_element_type=jnp.float32)

    # single full store of the whole output block
    o_ref[...] = (h1 + mlp).reshape(F_, B, Tq, C)


# ----------------------------------------------------------------------------
# One-time parameter preparation (outside the per-call hot path):
# transpose PyTorch (out, in) weights to (in, out) and fuse K/V weights
# across features into a single lane-dense (C, 2*F*C) matrix.
# ----------------------------------------------------------------------------
def prepare_params(params):
    F_, C, _ = params['wq'].shape
    wq = jnp.transpose(params['wq'], (0, 2, 1))            # (F, C, C)  (in, out)
    wproj = jnp.transpose(params['wproj'], (0, 2, 1))      # (F, C, C)
    # columns laid out as [K_0 | V_0 | K_1 | V_1 | ...]
    wkv = jnp.concatenate(
        [jnp.concatenate([params['wk'][f].T, params['wv'][f].T], axis=1)
         for f in range(F_)], axis=1)                      # (C, 2*F*C)
    return {
        'wq': wq, 'wkv': wkv, 'wproj': wproj,
        'ln_w': params['ln_w'].reshape(1, C),
        'w1': params['w1'].T,                              # (C, factor*C)
        'w2': params['w2'].T,                              # (factor*C, C)
    }


@functools.partial(jax.jit, static_argnames=("n_head",))
def _fused_forward(xs, past_kv, wq, wkv, wproj, ln_w, w1, w2, n_head):
    x = jnp.stack(xs, axis=0)                              # (F, B, Tq, C)
    F_, B, Tq, C = x.shape
    vmem = lambda: pl.BlockSpec(memory_space=pltpu.MemorySpace.VMEM)
    out = pl.pallas_call(
        functools.partial(_fused_kernel, n_head=n_head),
        out_shape=jax.ShapeDtypeStruct((F_, B, Tq, C), jnp.float32),
        in_specs=[vmem() for _ in range(8)],
        out_specs=vmem(),
    )(x, past_kv, wq, wkv, wproj, ln_w, w1, w2)
    return tuple(out[i] for i in range(F_))


def multi_attention_forward(causal_decoder, past_kv, prep, n_head=N_HEAD):
    features = list(causal_decoder.keys())
    outs = _fused_forward(tuple(causal_decoder[f] for f in features), past_kv,
                          prep['wq'], prep['wkv'], prep['wproj'],
                          prep['ln_w'], prep['w1'], prep['w2'], n_head=n_head)
    return {f: outs[i] for i, f in enumerate(features)}


# ----------------------------------------------------------------------------
# Pure-JAX reference (mirrors the PyTorch forward exactly, eval mode).
# ----------------------------------------------------------------------------
def reference_forward(causal_decoder, past_kv, params, n_head=N_HEAD):
    features = list(causal_decoder.keys())
    F_ = len(features)
    q = jnp.stack([causal_decoder[f] @ params['wq'][i].T
                   for i, f in enumerate(features)], axis=1)
    k = jnp.stack([past_kv @ params['wk'][i].T for i in range(F_)], axis=1)
    v = jnp.stack([past_kv @ params['wv'][i].T for i in range(F_)], axis=1)
    B, c, T, C = q.shape
    Tk = k.shape[2]
    hd = C // n_head
    qh = jnp.transpose(q.reshape(B, c, T, n_head, hd), (0, 1, 3, 2, 4))
    kh = jnp.transpose(k.reshape(B, c, Tk, n_head, hd), (0, 1, 3, 2, 4))
    vh = jnp.transpose(v.reshape(B, c, Tk, n_head, hd), (0, 1, 3, 2, 4))
    att = jnp.einsum('bchtd,bchsd->bchts', qh, kh) * (1.0 / math.sqrt(hd))
    att = jax.nn.softmax(att, axis=-1)
    y = jnp.einsum('bchts,bchsd->bchtd', att, vh)
    # exact replication of: y.transpose(1, 2).contiguous().view(B, c, T, C)
    y = jnp.transpose(y, (0, 2, 1, 3, 4)).reshape(B, c, T, C)
    outs = {}
    for i, f in enumerate(features):
        h1 = causal_decoder[f] + y[:, i] @ params['wproj'][i].T
        mu = jnp.mean(h1, axis=-1, keepdims=True)
        var = jnp.mean((h1 - mu) ** 2, axis=-1, keepdims=True)
        ln = (h1 - mu) / jnp.sqrt(var + 1e-5) * params['ln_w']
        mid = jax.nn.gelu(ln @ params['w1'].T, approximate=False)
        outs[f] = h1 + mid @ params['w2'].T
    return outs


if __name__ == "__main__":
    B, Tq, Tk, C = 2, 8, 8, 32          # cov_emb=32, n_head=2, factor=1
    features = ["price", "promo", "weekday"]
    F_ = len(features)

    key = jax.random.PRNGKey(0)
    keys = jax.random.split(key, 12)
    s = 0.08
    params = {
        'wq':    s * jax.random.normal(keys[0], (F_, C, C), jnp.float32),
        'wk':    s * jax.random.normal(keys[1], (F_, C, C), jnp.float32),
        'wv':    s * jax.random.normal(keys[2], (F_, C, C), jnp.float32),
        'wproj': s * jax.random.normal(keys[3], (F_, C, C), jnp.float32),
        'ln_w':  jnp.ones((C,), jnp.float32),
        'w1':    s * jax.random.normal(keys[4], (C, C), jnp.float32),  # c_fc   (factor*C, C)
        'w2':    s * jax.random.normal(keys[5], (C, C), jnp.float32),  # c_proj (C, factor*C)
    }
    causal_decoder = {
        f: jax.random.normal(keys[6 + i], (B, Tq, C), jnp.float32)
        for i, f in enumerate(features)
    }
    past_kv = jax.random.normal(keys[10], (B, Tk, C), jnp.float32)

    prep = prepare_params(params)                 # one-time weight prep
    out = multi_attention_forward(causal_decoder, past_kv, prep)
    for f in features:
        jax.block_until_ready(out[f])

    ref = reference_forward(causal_decoder, past_kv, params)
    for f in features:
        # tolerance allows for the EUP approximate-reciprocal softmax denominator
        assert jnp.allclose(out[f], ref[f], atol=1e-3, rtol=1e-3), \
            f"mismatch for feature {f}"

    # TODO(synk): dropout (attn/resid/MLP) is eval-mode identity; no RNG dropout kernel.
    print("KERNEL_OK")
</pallas_src>

<mosaic_0001>
module attributes {stable_mosaic.version = 11 : i64} {
  func.func @_fused_kernel(%arg0: memref<3x2x8x32xf32, #tpu.memory_space<vmem>>, %arg1: memref<2x8x32xf32, #tpu.memory_space<vmem>>, %arg2: memref<3x32x32xf32, #tpu.memory_space<vmem>>, %arg3: memref<32x192xf32, #tpu.memory_space<vmem>>, %arg4: memref<3x32x32xf32, #tpu.memory_space<vmem>>, %arg5: memref<1x32xf32, #tpu.memory_space<vmem>>, %arg6: memref<32x32xf32, #tpu.memory_space<vmem>>, %arg7: memref<32x32xf32, #tpu.memory_space<vmem>>, %arg8: memref<3x2x8x32xf32, #tpu.memory_space<vmem>>) attributes {dimension_semantics = [], scalar_prefetch = 0 : i64, scratch_operands = 0 : i64, tpu.core_type = #tpu.core_type<tc>} {
    %c0 = arith.constant 0 : index
    %c0_0 = arith.constant 0 : index
    %c0_1 = arith.constant 0 : index
    %c0_2 = arith.constant 0 : index
    %0 = vector.load %arg0[%c0, %c0_0, %c0_1, %c0_2] : memref<3x2x8x32xf32, #tpu.memory_space<vmem>>, vector<3x2x8x32xf32>
    %1 = vector.shape_cast %0 : vector<3x2x8x32xf32> to vector<3x16x32xf32>
    %c0_3 = arith.constant 0 : index
    %c0_4 = arith.constant 0 : index
    %c0_5 = arith.constant 0 : index
    %2 = vector.load %arg1[%c0_3, %c0_4, %c0_5] : memref<2x8x32xf32, #tpu.memory_space<vmem>>, vector<2x8x32xf32>
    %3 = vector.shape_cast %2 : vector<2x8x32xf32> to vector<16x32xf32>
    %c0_6 = arith.constant 0 : index
    %c0_7 = arith.constant 0 : index
    %4 = vector.load %arg3[%c0_6, %c0_7] : memref<32x192xf32, #tpu.memory_space<vmem>>, vector<32x192xf32>
    %cst = arith.constant dense<0.000000e+00> : vector<16x192xf32>
    %5 = tpu.matmul %3, %4, %cst {dimension_numbers = #tpu.dot_dimension_numbers<[1], [0], [0], [1], [0, 0, 1, 1], [], []>} : vector<16x32xf32>, vector<32x192xf32>, vector<16x192xf32> -> vector<16x192xf32>
    %6 = vector.shape_cast %5 : vector<16x192xf32> to vector<2x8x192xf32>
    %c0_8 = arith.constant 0 : index
    %c0_9 = arith.constant 0 : index
    %c0_10 = arith.constant 0 : index
    %7 = vector.load %arg2[%c0_8, %c0_9, %c0_10] : memref<3x32x32xf32, #tpu.memory_space<vmem>>, vector<3x32x32xf32>
    %cst_11 = arith.constant dense<0.000000e+00> : vector<3x16x32xf32>
    %8 = tpu.matmul %1, %7, %cst_11 {dimension_numbers = #tpu.dot_dimension_numbers<[2], [1], [1], [2], [0, 0, 0, 1, 1, 2], [0], [0]>} : vector<3x16x32xf32>, vector<3x32x32xf32>, vector<3x16x32xf32> -> vector<3x16x32xf32>
    %9 = vector.shape_cast %8 : vector<3x16x32xf32> to vector<3x2x8x32xf32>
    %10 = vector.extract_strided_slice %6 {offsets = [0, 0, 0], sizes = [2, 8, 32], strides = [1, 1, 1]} : vector<2x8x192xf32> to vector<2x8x32xf32>
    %11 = vector.extract_strided_slice %6 {offsets = [0, 0, 32], sizes = [2, 8, 32], strides = [1, 1, 1]} : vector<2x8x192xf32> to vector<2x8x32xf32>
    %12 = vector.extract_strided_slice %9 {offsets = [0, 0, 0, 0], sizes = [1, 2, 8, 16], strides = [1, 1, 1, 1]} : vector<3x2x8x32xf32> to vector<1x2x8x16xf32>
    %13 = vector.shape_cast %12 : vector<1x2x8x16xf32> to vector<2x8x16xf32>
    %14 = vector.extract_strided_slice %10 {offsets = [0, 0, 0], sizes = [2, 8, 16], strides = [1, 1, 1]} : vector<2x8x32xf32> to vector<2x8x16xf32>
    %15 = vector.extract_strided_slice %11 {offsets = [0, 0, 0], sizes = [2, 8, 16], strides = [1, 1, 1]} : vector<2x8x32xf32> to vector<2x8x16xf32>
    "tpu.trace_start"() <{level = 10 : i32, message = "btd,bsd->bts"}> : () -> ()
    %cst_12 = arith.constant dense<0.000000e+00> : vector<2x8x8xf32>
    %16 = tpu.matmul %13, %14, %cst_12 {dimension_numbers = #tpu.dot_dimension_numbers<[2], [2], [1], [1], [0, 0, 0, 1, 1, 1], [0], [0]>} : vector<2x8x16xf32>, vector<2x8x16xf32>, vector<2x8x8xf32> -> vector<2x8x8xf32>
    "tpu.trace_stop"() : () -> ()
    %cst_13 = arith.constant 2.500000e-01 : f32
    %17 = vector.broadcast %cst_13 : f32 to vector<2x8x8xf32>
    %18 = arith.mulf %16, %17 : vector<2x8x8xf32>
    %cst_14 = arith.constant dense<0xFF800000> : vector<2x8xf32>
    %19 = vector.multi_reduction <maximumf>, %18, %cst_14 [2] : vector<2x8x8xf32> to vector<2x8xf32>
    %20 = vector.shape_cast %19 : vector<2x8xf32> to vector<2x8x1xf32>
    %21 = vector.broadcast %20 : vector<2x8x1xf32> to vector<2x8x8xf32>
    %22 = arith.subf %18, %21 : vector<2x8x8xf32>
    %23 = math.exp %22 : vector<2x8x8xf32>
    %cst_15 = arith.constant dense<0.000000e+00> : vector<2x8xf32>
    %24 = vector.multi_reduction <add>, %23, %cst_15 [2] : vector<2x8x8xf32> to vector<2x8xf32>
    %25 = vector.shape_cast %24 : vector<2x8xf32> to vector<2x8x1xf32>
    %26 = tpu.reciprocal %25 {approx = true} : vector<2x8x1xf32> -> vector<2x8x1xf32>
    %27 = vector.broadcast %26 : vector<2x8x1xf32> to vector<2x8x8xf32>
    %28 = arith.mulf %23, %27 : vector<2x8x8xf32>
    "tpu.trace_start"() <{level = 10 : i32, message = "bts,bsd->btd"}> : () -> ()
    %cst_16 = arith.constant dense<0.000000e+00> : vector<2x8x16xf32>
    %29 = tpu.matmul %28, %15, %cst_16 {dimension_numbers = #tpu.dot_dimension_numbers<[2], [1], [1], [2], [0, 0, 0, 1, 1, 2], [0], [0]>} : vector<2x8x8xf32>, vector<2x8x16xf32>, vector<2x8x16xf32> -> vector<2x8x16xf32>
    "tpu.trace_stop"() : () -> ()
    %30 = vector.extract_strided_slice %9 {offsets = [0, 0, 0, 16], sizes = [1, 2, 8, 16], strides = [1, 1, 1, 1]} : vector<3x2x8x32xf32> to vector<1x2x8x16xf32>
    %31 = vector.shape_cast %30 : vector<1x2x8x16xf32> to vector<2x8x16xf32>
    %32 = vector.extract_strided_slice %10 {offsets = [0, 0, 16], sizes = [2, 8, 16], strides = [1, 1, 1]} : vector<2x8x32xf32> to vector<2x8x16xf32>
    %33 = vector.extract_strided_slice %11 {offsets = [0, 0, 16], sizes = [2, 8, 16], strides = [1, 1, 1]} : vector<2x8x32xf32> to vector<2x8x16xf32>
    "tpu.trace_start"() <{level = 10 : i32, message = "btd,bsd->bts"}> : () -> ()
    %cst_17 = arith.constant dense<0.000000e+00> : vector<2x8x8xf32>
    %34 = tpu.matmul %31, %32, %cst_17 {dimension_numbers = #tpu.dot_dimension_numbers<[2], [2], [1], [1], [0, 0, 0, 1, 1, 1], [0], [0]>} : vector<2x8x16xf32>, vector<2x8x16xf32>, vector<2x8x8xf32> -> vector<2x8x8xf32>
    "tpu.trace_stop"() : () -> ()
    %cst_18 = arith.constant 2.500000e-01 : f32
    %35 = vector.broadcast %cst_18 : f32 to vector<2x8x8xf32>
    %36 = arith.mulf %34, %35 : vector<2x8x8xf32>
    %cst_19 = arith.constant dense<0xFF800000> : vector<2x8xf32>
    %37 = vector.multi_reduction <maximumf>, %36, %cst_19 [2] : vector<2x8x8xf32> to vector<2x8xf32>
    %38 = vector.shape_cast %37 : vector<2x8xf32> to vector<2x8x1xf32>
    %39 = vector.broadcast %38 : vector<2x8x1xf32> to vector<2x8x8xf32>
    %40 = arith.subf %36, %39 : vector<2x8x8xf32>
    %41 = math.exp %40 : vector<2x8x8xf32>
    %cst_20 = arith.constant dense<0.000000e+00> : vector<2x8xf32>
    %42 = vector.multi_reduction <add>, %41, %cst_20 [2] : vector<2x8x8xf32> to vector<2x8xf32>
    %43 = vector.shape_cast %42 : vector<2x8xf32> to vector<2x8x1xf32>
    %44 = tpu.reciprocal %43 {approx = true} : vector<2x8x1xf32> -> vector<2x8x1xf32>
    %45 = vector.broadcast %44 : vector<2x8x1xf32> to vector<2x8x8xf32>
    %46 = arith.mulf %41, %45 : vector<2x8x8xf32>
    "tpu.trace_start"() <{level = 10 : i32, message = "bts,bsd->btd"}> : () -> ()
    %cst_21 = arith.constant dense<0.000000e+00> : vector<2x8x16xf32>
    %47 = tpu.matmul %46, %33, %cst_21 {dimension_numbers = #tpu.dot_dimension_numbers<[2], [1], [1], [2], [0, 0, 0, 1, 1, 2], [0], [0]>} : vector<2x8x8xf32>, vector<2x8x16xf32>, vector<2x8x16xf32> -> vector<2x8x16xf32>
    "tpu.trace_stop"() : () -> ()
    %48 = vector.extract_strided_slice %6 {offsets = [0, 0, 64], sizes = [2, 8, 32], strides = [1, 1, 1]} : vector<2x8x192xf32> to vector<2x8x32xf32>
    %49 = vector.extract_strided_slice %6 {offsets = [0, 0, 96], sizes = [2, 8, 32], strides = [1, 1, 1]} : vector<2x8x192xf32> to vector<2x8x32xf32>
    %50 = vector.extract_strided_slice %9 {offsets = [1, 0, 0, 0], sizes = [1, 2, 8, 16], strides = [1, 1, 1, 1]} : vector<3x2x8x32xf32> to vector<1x2x8x16xf32>
    %51 = vector.shape_cast %50 : vector<1x2x8x16xf32> to vector<2x8x16xf32>
    %52 = vector.extract_strided_slice %48 {offsets = [0, 0, 0], sizes = [2, 8, 16], strides = [1, 1, 1]} : vector<2x8x32xf32> to vector<2x8x16xf32>
    %53 = vector.extract_strided_slice %49 {offsets = [0, 0, 0], sizes = [2, 8, 16], strides = [1, 1, 1]} : vector<2x8x32xf32> to vector<2x8x16xf32>
    "tpu.trace_start"() <{level = 10 : i32, message = "btd,bsd->bts"}> : () -> ()
    %cst_22 = arith.constant dense<0.000000e+00> : vector<2x8x8xf32>
    %54 = tpu.matmul %51, %52, %cst_22 {dimension_numbers = #tpu.dot_dimension_numbers<[2], [2], [1], [1], [0, 0, 0, 1, 1, 1], [0], [0]>} : vector<2x8x16xf32>, vector<2x8x16xf32>, vector<2x8x8xf32> -> vector<2x8x8xf32>
    "tpu.trace_stop"() : () -> ()
    %cst_23 = arith.constant 2.500000e-01 : f32
    %55 = vector.broadcast %cst_23 : f32 to vector<2x8x8xf32>
    %56 = arith.mulf %54, %55 : vector<2x8x8xf32>
    %cst_24 = arith.constant dense<0xFF800000> : vector<2x8xf32>
    %57 = vector.multi_reduction <maximumf>, %56, %cst_24 [2] : vector<2x8x8xf32> to vector<2x8xf32>
    %58 = vector.shape_cast %57 : vector<2x8xf32> to vector<2x8x1xf32>
    %59 = vector.broadcast %58 : vector<2x8x1xf32> to vector<2x8x8xf32>
    %60 = arith.subf %56, %59 : vector<2x8x8xf32>
    %61 = math.exp %60 : vector<2x8x8xf32>
    %cst_25 = arith.constant dense<0.000000e+00> : vector<2x8xf32>
    %62 = vector.multi_reduction <add>, %61, %cst_25 [2] : vector<2x8x8xf32> to vector<2x8xf32>
    %63 = vector.shape_cast %62 : vector<2x8xf32> to vector<2x8x1xf32>
    %64 = tpu.reciprocal %63 {approx = true} : vector<2x8x1xf32> -> vector<2x8x1xf32>
    %65 = vector.broadcast %64 : vector<2x8x1xf32> to vector<2x8x8xf32>
    %66 = arith.mulf %61, %65 : vector<2x8x8xf32>
    "tpu.trace_start"() <{level = 10 : i32, message = "bts,bsd->btd"}> : () -> ()
    %cst_26 = arith.constant dense<0.000000e+00> : vector<2x8x16xf32>
    %67 = tpu.matmul %66, %53, %cst_26 {dimension_numbers = #tpu.dot_dimension_numbers<[2], [1], [1], [2], [0, 0, 0, 1, 1, 2], [0], [0]>} : vector<2x8x8xf32>, vector<2x8x16xf32>, vector<2x8x16xf32> -> vector<2x8x16xf32>
    "tpu.trace_stop"() : () -> ()
    %68 = vector.extract_strided_slice %9 {offsets = [1, 0, 0, 16], sizes = [1, 2, 8, 16], strides = [1, 1, 1, 1]} : vector<3x2x8x32xf32> to vector<1x2x8x16xf32>
    %69 = vector.shape_cast %68 : vector<1x2x8x16xf32> to vector<2x8x16xf32>
    %70 = vector.extract_strided_slice %48 {offsets = [0, 0, 16], sizes = [2, 8, 16], strides = [1, 1, 1]} : vector<2x8x32xf32> to vector<2x8x16xf32>
    %71 = vector.extract_strided_slice %49 {offsets = [0, 0, 16], sizes = [2, 8, 16], strides = [1, 1, 1]} : vector<2x8x32xf32> to vector<2x8x16xf32>
    "tpu.trace_start"() <{level = 10 : i32, message = "btd,bsd->bts"}> : () -> ()
    %cst_27 = arith.constant dense<0.000000e+00> : vector<2x8x8xf32>
    %72 = tpu.matmul %69, %70, %cst_27 {dimension_numbers = #tpu.dot_dimension_numbers<[2], [2], [1], [1], [0, 0, 0, 1, 1, 1], [0], [0]>} : vector<2x8x16xf32>, vector<2x8x16xf32>, vector<2x8x8xf32> -> vector<2x8x8xf32>
    "tpu.trace_stop"() : () -> ()
    %cst_28 = arith.constant 2.500000e-01 : f32
    %73 = vector.broadcast %cst_28 : f32 to vector<2x8x8xf32>
    %74 = arith.mulf %72, %73 : vector<2x8x8xf32>
    %cst_29 = arith.constant dense<0xFF800000> : vector<2x8xf32>
    %75 = vector.multi_reduction <maximumf>, %74, %cst_29 [2] : vector<2x8x8xf32> to vector<2x8xf32>
    %76 = vector.shape_cast %75 : vector<2x8xf32> to vector<2x8x1xf32>
    %77 = vector.broadcast %76 : vector<2x8x1xf32> to vector<2x8x8xf32>
    %78 = arith.subf %74, %77 : vector<2x8x8xf32>
    %79 = math.exp %78 : vector<2x8x8xf32>
    %cst_30 = arith.constant dense<0.000000e+00> : vector<2x8xf32>
    %80 = vector.multi_reduction <add>, %79, %cst_30 [2] : vector<2x8x8xf32> to vector<2x8xf32>
    %81 = vector.shape_cast %80 : vector<2x8xf32> to vector<2x8x1xf32>
    %82 = tpu.reciprocal %81 {approx = true} : vector<2x8x1xf32> -> vector<2x8x1xf32>
    %83 = vector.broadcast %82 : vector<2x8x1xf32> to vector<2x8x8xf32>
    %84 = arith.mulf %79, %83 : vector<2x8x8xf32>
    "tpu.trace_start"() <{level = 10 : i32, message = "bts,bsd->btd"}> : () -> ()
    %cst_31 = arith.constant dense<0.000000e+00> : vector<2x8x16xf32>
    %85 = tpu.matmul %84, %71, %cst_31 {dimension_numbers = #tpu.dot_dimension_numbers<[2], [1], [1], [2], [0, 0, 0, 1, 1, 2], [0], [0]>} : vector<2x8x8xf32>, vector<2x8x16xf32>, vector<2x8x16xf32> -> vector<2x8x16xf32>
    "tpu.trace_stop"() : () -> ()
    %86 = vector.extract_strided_slice %6 {offsets = [0, 0, 128], sizes = [2, 8, 32], strides = [1, 1, 1]} : vector<2x8x192xf32> to vector<2x8x32xf32>
    %87 = vector.extract_strided_slice %6 {offsets = [0, 0, 160], sizes = [2, 8, 32], strides = [1, 1, 1]} : vector<2x8x192xf32> to vector<2x8x32xf32>
    %88 = vector.extract_strided_slice %9 {offsets = [2, 0, 0, 0], sizes = [1, 2, 8, 16], strides = [1, 1, 1, 1]} : vector<3x2x8x32xf32> to vector<1x2x8x16xf32>
    %89 = vector.shape_cast %88 : vector<1x2x8x16xf32> to vector<2x8x16xf32>
    %90 = vector.extract_strided_slice %86 {offsets = [0, 0, 0], sizes = [2, 8, 16], strides = [1, 1, 1]} : vector<2x8x32xf32> to vector<2x8x16xf32>
    %91 = vector.extract_strided_slice %87 {offsets = [0, 0, 0], sizes = [2, 8, 16], strides = [1, 1, 1]} : vector<2x8x32xf32> to vector<2x8x16xf32>
    "tpu.trace_start"() <{level = 10 : i32, message = "btd,bsd->bts"}> : () -> ()
    %cst_32 = arith.constant dense<0.000000e+00> : vector<2x8x8xf32>
    %92 = tpu.matmul %89, %90, %cst_32 {dimension_numbers = #tpu.dot_dimension_numbers<[2], [2], [1], [1], [0, 0, 0, 1, 1, 1], [0], [0]>} : vector<2x8x16xf32>, vector<2x8x16xf32>, vector<2x8x8xf32> -> vector<2x8x8xf32>
    "tpu.trace_stop"() : () -> ()
    %cst_33 = arith.constant 2.500000e-01 : f32
    %93 = vector.broadcast %cst_33 : f32 to vector<2x8x8xf32>
    %94 = arith.mulf %92, %93 : vector<2x8x8xf32>
    %cst_34 = arith.constant dense<0xFF800000> : vector<2x8xf32>
    %95 = vector.multi_reduction <maximumf>, %94, %cst_34 [2] : vector<2x8x8xf32> to vector<2x8xf32>
    %96 = vector.shape_cast %95 : vector<2x8xf32> to vector<2x8x1xf32>
    %97 = vector.broadcast %96 : vector<2x8x1xf32> to vector<2x8x8xf32>
    %98 = arith.subf %94, %97 : vector<2x8x8xf32>
    %99 = math.exp %98 : vector<2x8x8xf32>
    %cst_35 = arith.constant dense<0.000000e+00> : vector<2x8xf32>
    %100 = vector.multi_reduction <add>, %99, %cst_35 [2] : vector<2x8x8xf32> to vector<2x8xf32>
    %101 = vector.shape_cast %100 : vector<2x8xf32> to vector<2x8x1xf32>
    %102 = tpu.reciprocal %101 {approx = true} : vector<2x8x1xf32> -> vector<2x8x1xf32>
    %103 = vector.broadcast %102 : vector<2x8x1xf32> to vector<2x8x8xf32>
    %104 = arith.mulf %99, %103 : vector<2x8x8xf32>
    "tpu.trace_start"() <{level = 10 : i32, message = "bts,bsd->btd"}> : () -> ()
    %cst_36 = arith.constant dense<0.000000e+00> : vector<2x8x16xf32>
    %105 = tpu.matmul %104, %91, %cst_36 {dimension_numbers = #tpu.dot_dimension_numbers<[2], [1], [1], [2], [0, 0, 0, 1, 1, 2], [0], [0]>} : vector<2x8x8xf32>, vector<2x8x16xf32>, vector<2x8x16xf32> -> vector<2x8x16xf32>
    "tpu.trace_stop"() : () -> ()
    %106 = vector.extract_strided_slice %9 {offsets = [2, 0, 0, 16], sizes = [1, 2, 8, 16], strides = [1, 1, 1, 1]} : vector<3x2x8x32xf32> to vector<1x2x8x16xf32>
    %107 = vector.shape_cast %106 : vector<1x2x8x16xf32> to vector<2x8x16xf32>
    %108 = vector.extract_strided_slice %86 {offsets = [0, 0, 16], sizes = [2, 8, 16], strides = [1, 1, 1]} : vector<2x8x32xf32> to vector<2x8x16xf32>
    %109 = vector.extract_strided_slice %87 {offsets = [0, 0, 16], sizes = [2, 8, 16], strides = [1, 1, 1]} : vector<2x8x32xf32> to vector<2x8x16xf32>
    "tpu.trace_start"() <{level = 10 : i32, message = "btd,bsd->bts"}> : () -> ()
    %cst_37 = arith.constant dense<0.000000e+00> : vector<2x8x8xf32>
    %110 = tpu.matmul %107, %108, %cst_37 {dimension_numbers = #tpu.dot_dimension_numbers<[2], [2], [1], [1], [0, 0, 0, 1, 1, 1], [0], [0]>} : vector<2x8x16xf32>, vector<2x8x16xf32>, vector<2x8x8xf32> -> vector<2x8x8xf32>
    "tpu.trace_stop"() : () -> ()
    %cst_38 = arith.constant 2.500000e-01 : f32
    %111 = vector.broadcast %cst_38 : f32 to vector<2x8x8xf32>
    %112 = arith.mulf %110, %111 : vector<2x8x8xf32>
    %cst_39 = arith.constant dense<0xFF800000> : vector<2x8xf32>
    %113 = vector.multi_reduction <maximumf>, %112, %cst_39 [2] : vector<2x8x8xf32> to vector<2x8xf32>
    %114 = vector.shape_cast %113 : vector<2x8xf32> to vector<2x8x1xf32>
    %115 = vector.broadcast %114 : vector<2x8x1xf32> to vector<2x8x8xf32>
    %116 = arith.subf %112, %115 : vector<2x8x8xf32>
    %117 = math.exp %116 : vector<2x8x8xf32>
    %cst_40 = arith.constant dense<0.000000e+00> : vector<2x8xf32>
    %118 = vector.multi_reduction <add>, %117, %cst_40 [2] : vector<2x8x8xf32> to vector<2x8xf32>
    %119 = vector.shape_cast %118 : vector<2x8xf32> to vector<2x8x1xf32>
    %120 = tpu.reciprocal %119 {approx = true} : vector<2x8x1xf32> -> vector<2x8x1xf32>
    %121 = vector.broadcast %120 : vector<2x8x1xf32> to vector<2x8x8xf32>
    %122 = arith.mulf %117, %121 : vector<2x8x8xf32>
    "tpu.trace_start"() <{level = 10 : i32, message = "bts,bsd->btd"}> : () -> ()
    %cst_41 = arith.constant dense<0.000000e+00> : vector<2x8x16xf32>
    %123 = tpu.matmul %122, %109, %cst_41 {dimension_numbers = #tpu.dot_dimension_numbers<[2], [1], [1], [2], [0, 0, 0, 1, 1, 2], [0], [0]>} : vector<2x8x8xf32>, vector<2x8x16xf32>, vector<2x8x16xf32> -> vector<2x8x16xf32>
    "tpu.trace_stop"() : () -> ()
    %124 = vector.extract_strided_slice %29 {offsets = [0, 0, 0], sizes = [2, 1, 16], strides = [1, 1, 1]} : vector<2x8x16xf32> to vector<2x1x16xf32>
    %125 = vector.extract_strided_slice %29 {offsets = [0, 1, 0], sizes = [2, 1, 16], strides = [1, 1, 1]} : vector<2x8x16xf32> to vector<2x1x16xf32>
    %126 = tpu.concatenate %124, %125 in 2 : vector<2x1x16xf32>, vector<2x1x16xf32> -> vector<2x1x32xf32>
    %127 = vector.extract_strided_slice %29 {offsets = [0, 2, 0], sizes = [2, 1, 16], strides = [1, 1, 1]} : vector<2x8x16xf32> to vector<2x1x16xf32>
    %128 = vector.extract_strided_slice %29 {offsets = [0, 3, 0], sizes = [2, 1, 16], strides = [1, 1, 1]} : vector<2x8x16xf32> to vector<2x1x16xf32>
    %129 = tpu.concatenate %127, %128 in 2 : vector<2x1x16xf32>, vector<2x1x16xf32> -> vector<2x1x32xf32>
    %130 = vector.extract_strided_slice %29 {offsets = [0, 4, 0], sizes = [2, 1, 16], strides = [1, 1, 1]} : vector<2x8x16xf32> to vector<2x1x16xf32>
    %131 = vector.extract_strided_slice %29 {offsets = [0, 5, 0], sizes = [2, 1, 16], strides = [1, 1, 1]} : vector<2x8x16xf32> to vector<2x1x16xf32>
    %132 = tpu.concatenate %130, %131 in 2 : vector<2x1x16xf32>, vector<2x1x16xf32> -> vector<2x1x32xf32>
    %133 = vector.extract_strided_slice %29 {offsets = [0, 6, 0], sizes = [2, 1, 16], strides = [1, 1, 1]} : vector<2x8x16xf32> to vector<2x1x16xf32>
    %134 = vector.extract_strided_slice %29 {offsets = [0, 7, 0], sizes = [2, 1, 16], strides = [1, 1, 1]} : vector<2x8x16xf32> to vector<2x1x16xf32>
    %135 = tpu.concatenate %133, %134 in 2 : vector<2x1x16xf32>, vector<2x1x16xf32> -> vector<2x1x32xf32>
    %136 = vector.extract_strided_slice %67 {offsets = [0, 0, 0], sizes = [2, 1, 16], strides = [1, 1, 1]} : vector<2x8x16xf32> to vector<2x1x16xf32>
    %137 = vector.extract_strided_slice %67 {offsets = [0, 1, 0], sizes = [2, 1, 16], strides = [1, 1, 1]} : vector<2x8x16xf32> to vector<2x1x16xf32>
    %138 = tpu.concatenate %136, %137 in 2 : vector<2x1x16xf32>, vector<2x1x16xf32> -> vector<2x1x32xf32>
    %139 = vector.extract_strided_slice %67 {offsets = [0, 2, 0], sizes = [2, 1, 16], strides = [1, 1, 1]} : vector<2x8x16xf32> to vector<2x1x16xf32>
    %140 = vector.extract_strided_slice %67 {offsets = [0, 3, 0], sizes = [2, 1, 16], strides = [1, 1, 1]} : vector<2x8x16xf32> to vector<2x1x16xf32>
    %141 = tpu.concatenate %139, %140 in 2 : vector<2x1x16xf32>, vector<2x1x16xf32> -> vector<2x1x32xf32>
    %142 = vector.extract_strided_slice %67 {offsets = [0, 4, 0], sizes = [2, 1, 16], strides = [1, 1, 1]} : vector<2x8x16xf32> to vector<2x1x16xf32>
    %143 = vector.extract_strided_slice %67 {offsets = [0, 5, 0], sizes = [2, 1, 16], strides = [1, 1, 1]} : vector<2x8x16xf32> to vector<2x1x16xf32>
    %144 = tpu.concatenate %142, %143 in 2 : vector<2x1x16xf32>, vector<2x1x16xf32> -> vector<2x1x32xf32>
    %145 = vector.extract_strided_slice %67 {offsets = [0, 6, 0], sizes = [2, 1, 16], strides = [1, 1, 1]} : vector<2x8x16xf32> to vector<2x1x16xf32>
    %146 = vector.extract_strided_slice %67 {offsets = [0, 7, 0], sizes = [2, 1, 16], strides = [1, 1, 1]} : vector<2x8x16xf32> to vector<2x1x16xf32>
    %147 = tpu.concatenate %145, %146 in 2 : vector<2x1x16xf32>, vector<2x1x16xf32> -> vector<2x1x32xf32>
    %148 = tpu.concatenate %126, %129, %132, %135, %138, %141, %144, %147 in 1 : vector<2x1x32xf32>, vector<2x1x32xf32>, vector<2x1x32xf32>, vector<2x1x32xf32>, vector<2x1x32xf32>, vector<2x1x32xf32>, vector<2x1x32xf32>, vector<2x1x32xf32> -> vector<2x8x32xf32>
    %149 = vector.extract_strided_slice %105 {offsets = [0, 0, 0], sizes = [2, 1, 16], strides = [1, 1, 1]} : vector<2x8x16xf32> to vector<2x1x16xf32>
    %150 = vector.extract_strided_slice %105 {offsets = [0, 1, 0], sizes = [2, 1, 16], strides = [1, 1, 1]} : vector<2x8x16xf32> to vector<2x1x16xf32>
    %151 = tpu.concatenate %149, %150 in 2 : vector<2x1x16xf32>, vector<2x1x16xf32> -> vector<2x1x32xf32>
    %152 = vector.extract_strided_slice %105 {offsets = [0, 2, 0], sizes = [2, 1, 16], strides = [1, 1, 1]} : vector<2x8x16xf32> to vector<2x1x16xf32>
    %153 = vector.extract_strided_slice %105 {offsets = [0, 3, 0], sizes = [2, 1, 16], strides = [1, 1, 1]} : vector<2x8x16xf32> to vector<2x1x16xf32>
    %154 = tpu.concatenate %152, %153 in 2 : vector<2x1x16xf32>, vector<2x1x16xf32> -> vector<2x1x32xf32>
    %155 = vector.extract_strided_slice %105 {offsets = [0, 4, 0], sizes = [2, 1, 16], strides = [1, 1, 1]} : vector<2x8x16xf32> to vector<2x1x16xf32>
    %156 = vector.extract_strided_slice %105 {offsets = [0, 5, 0], sizes = [2, 1, 16], strides = [1, 1, 1]} : vector<2x8x16xf32> to vector<2x1x16xf32>
    %157 = tpu.concatenate %155, %156 in 2 : vector<2x1x16xf32>, vector<2x1x16xf32> -> vector<2x1x32xf32>
    %158 = vector.extract_strided_slice %105 {offsets = [0, 6, 0], sizes = [2, 1, 16], strides = [1, 1, 1]} : vector<2x8x16xf32> to vector<2x1x16xf32>
    %159 = vector.extract_strided_slice %105 {offsets = [0, 7, 0], sizes = [2, 1, 16], strides = [1, 1, 1]} : vector<2x8x16xf32> to vector<2x1x16xf32>
    %160 = tpu.concatenate %158, %159 in 2 : vector<2x1x16xf32>, vector<2x1x16xf32> -> vector<2x1x32xf32>
    %161 = vector.extract_strided_slice %47 {offsets = [0, 0, 0], sizes = [2, 1, 16], strides = [1, 1, 1]} : vector<2x8x16xf32> to vector<2x1x16xf32>
    %162 = vector.extract_strided_slice %47 {offsets = [0, 1, 0], sizes = [2, 1, 16], strides = [1, 1, 1]} : vector<2x8x16xf32> to vector<2x1x16xf32>
    %163 = tpu.concatenate %161, %162 in 2 : vector<2x1x16xf32>, vector<2x1x16xf32> -> vector<2x1x32xf32>
    %164 = vector.extract_strided_slice %47 {offsets = [0, 2, 0], sizes = [2, 1, 16], strides = [1, 1, 1]} : vector<2x8x16xf32> to vector<2x1x16xf32>
    %165 = vector.extract_strided_slice %47 {offsets = [0, 3, 0], sizes = [2, 1, 16], strides = [1, 1, 1]} : vector<2x8x16xf32> to vector<2x1x16xf32>
    %166 = tpu.concatenate %164, %165 in 2 : vector<2x1x16xf32>, vector<2x1x16xf32> -> vector<2x1x32xf32>
    %167 = vector.extract_strided_slice %47 {offsets = [0, 4, 0], sizes = [2, 1, 16], strides = [1, 1, 1]} : vector<2x8x16xf32> to vector<2x1x16xf32>
    %168 = vector.extract_strided_slice %47 {offsets = [0, 5, 0], sizes = [2, 1, 16], strides = [1, 1, 1]} : vector<2x8x16xf32> to vector<2x1x16xf32>
    %169 = tpu.concatenate %167, %168 in 2 : vector<2x1x16xf32>, vector<2x1x16xf32> -> vector<2x1x32xf32>
    %170 = vector.extract_strided_slice %47 {offsets = [0, 6, 0], sizes = [2, 1, 16], strides = [1, 1, 1]} : vector<2x8x16xf32> to vector<2x1x16xf32>
    %171 = vector.extract_strided_slice %47 {offsets = [0, 7, 0], sizes = [2, 1, 16], strides = [1, 1, 1]} : vector<2x8x16xf32> to vector<2x1x16xf32>
    %172 = tpu.concatenate %170, %171 in 2 : vector<2x1x16xf32>, vector<2x1x16xf32> -> vector<2x1x32xf32>
    %173 = tpu.concatenate %151, %154, %157, %160, %163, %166, %169, %172 in 1 : vector<2x1x32xf32>, vector<2x1x32xf32>, vector<2x1x32xf32>, vector<2x1x32xf32>, vector<2x1x32xf32>, vector<2x1x32xf32>, vector<2x1x32xf32>, vector<2x1x32xf32> -> vector<2x8x32xf32>
    %174 = vector.extract_strided_slice %85 {offsets = [0, 0, 0], sizes = [2, 1, 16], strides = [1, 1, 1]} : vector<2x8x16xf32> to vector<2x1x16xf32>
    %175 = vector.extract_strided_slice %85 {offsets = [0, 1, 0], sizes = [2, 1, 16], strides = [1, 1, 1]} : vector<2x8x16xf32> to vector<2x1x16xf32>
    %176 = tpu.concatenate %174, %175 in 2 : vector<2x1x16xf32>, vector<2x1x16xf32> -> vector<2x1x32xf32>
    %177 = vector.extract_strided_slice %85 {offsets = [0, 2, 0], sizes = [2, 1, 16], strides = [1, 1, 1]} : vector<2x8x16xf32> to vector<2x1x16xf32>
    %178 = vector.extract_strided_slice %85 {offsets = [0, 3, 0], sizes = [2, 1, 16], strides = [1, 1, 1]} : vector<2x8x16xf32> to vector<2x1x16xf32>
    %179 = tpu.concatenate %177, %178 in 2 : vector<2x1x16xf32>, vector<2x1x16xf32> -> vector<2x1x32xf32>
    %180 = vector.extract_strided_slice %85 {offsets = [0, 4, 0], sizes = [2, 1, 16], strides = [1, 1, 1]} : vector<2x8x16xf32> to vector<2x1x16xf32>
    %181 = vector.extract_strided_slice %85 {offsets = [0, 5, 0], sizes = [2, 1, 16], strides = [1, 1, 1]} : vector<2x8x16xf32> to vector<2x1x16xf32>
    %182 = tpu.concatenate %180, %181 in 2 : vector<2x1x16xf32>, vector<2x1x16xf32> -> vector<2x1x32xf32>
    %183 = vector.extract_strided_slice %85 {offsets = [0, 6, 0], sizes = [2, 1, 16], strides = [1, 1, 1]} : vector<2x8x16xf32> to vector<2x1x16xf32>
    %184 = vector.extract_strided_slice %85 {offsets = [0, 7, 0], sizes = [2, 1, 16], strides = [1, 1, 1]} : vector<2x8x16xf32> to vector<2x1x16xf32>
    %185 = tpu.concatenate %183, %184 in 2 : vector<2x1x16xf32>, vector<2x1x16xf32> -> vector<2x1x32xf32>
    %186 = vector.extract_strided_slice %123 {offsets = [0, 0, 0], sizes = [2, 1, 16], strides = [1, 1, 1]} : vector<2x8x16xf32> to vector<2x1x16xf32>
    %187 = vector.extract_strided_slice %123 {offsets = [0, 1, 0], sizes = [2, 1, 16], strides = [1, 1, 1]} : vector<2x8x16xf32> to vector<2x1x16xf32>
    %188 = tpu.concatenate %186, %187 in 2 : vector<2x1x16xf32>, vector<2x1x16xf32> -> vector<2x1x32xf32>
    %189 = vector.extract_strided_slice %123 {offsets = [0, 2, 0], sizes = [2, 1, 16], strides = [1, 1, 1]} : vector<2x8x16xf32> to vector<2x1x16xf32>
    %190 = vector.extract_strided_slice %123 {offsets = [0, 3, 0], sizes = [2, 1, 16], strides = [1, 1, 1]} : vector<2x8x16xf32> to vector<2x1x16xf32>
    %191 = tpu.concatenate %189, %190 in 2 : vector<2x1x16xf32>, vector<2x1x16xf32> -> vector<2x1x32xf32>
    %192 = vector.extract_strided_slice %123 {offsets = [0, 4, 0], sizes = [2, 1, 16], strides = [1, 1, 1]} : vector<2x8x16xf32> to vector<2x1x16xf32>
    %193 = vector.extract_strided_slice %123 {offsets = [0, 5, 0], sizes = [2, 1, 16], strides = [1, 1, 1]} : vector<2x8x16xf32> to vector<2x1x16xf32>
    %194 = tpu.concatenate %192, %193 in 2 : vector<2x1x16xf32>, vector<2x1x16xf32> -> vector<2x1x32xf32>
    %195 = vector.extract_strided_slice %123 {offsets = [0, 6, 0], sizes = [2, 1, 16], strides = [1, 1, 1]} : vector<2x8x16xf32> to vector<2x1x16xf32>
    %196 = vector.extract_strided_slice %123 {offsets = [0, 7, 0], sizes = [2, 1, 16], strides = [1, 1, 1]} : vector<2x8x16xf32> to vector<2x1x16xf32>
    %197 = tpu.concatenate %195, %196 in 2 : vector<2x1x16xf32>, vector<2x1x16xf32> -> vector<2x1x32xf32>
    %198 = tpu.concatenate %176, %179, %182, %185, %188, %191, %194, %197 in 1 : vector<2x1x32xf32>, vector<2x1x32xf32>, vector<2x1x32xf32>, vector<2x1x32xf32>, vector<2x1x32xf32>, vector<2x1x32xf32>, vector<2x1x32xf32>, vector<2x1x32xf32> -> vector<2x8x32xf32>
    %199 = vector.shape_cast %148 : vector<2x8x32xf32> to vector<1x2x8x32xf32>
    %200 = vector.shape_cast %173 : vector<2x8x32xf32> to vector<1x2x8x32xf32>
    %201 = vector.shape_cast %198 : vector<2x8x32xf32> to vector<1x2x8x32xf32>
    %202 = tpu.concatenate %199, %200, %201 in 0 : vector<1x2x8x32xf32>, vector<1x2x8x32xf32>, vector<1x2x8x32xf32> -> vector<3x2x8x32xf32>
    %203 = vector.shape_cast %202 : vector<3x2x8x32xf32> to vector<3x16x32xf32>
    %c0_42 = arith.constant 0 : index
    %c0_43 = arith.constant 0 : index
    %c0_44 = arith.constant 0 : index
    %204 = vector.load %arg4[%c0_42, %c0_43, %c0_44] : memref<3x32x32xf32, #tpu.memory_space<vmem>>, vector<3x32x32xf32>
    %cst_45 = arith.constant dense<0.000000e+00> : vector<3x16x32xf32>
    %205 = tpu.matmul %203, %204, %cst_45 {dimension_numbers = #tpu.dot_dimension_numbers<[2], [1], [1], [2], [0, 0, 0, 1, 1, 2], [0], [0]>} : vector<3x16x32xf32>, vector<3x32x32xf32>, vector<3x16x32xf32> -> vector<3x16x32xf32>
    %206 = arith.addf %1, %205 : vector<3x16x32xf32>
    %207 = vector.shape_cast %206 : vector<3x16x32xf32> to vector<48x32xf32>
    %cst_46 = arith.constant dense<0.000000e+00> : vector<48xf32>
    %208 = vector.multi_reduction <add>, %207, %cst_46 [1] : vector<48x32xf32> to vector<48xf32>
    %209 = vector.shape_cast %208 : vector<48xf32> to vector<48x1xf32>
    %cst_47 = arith.constant 3.200000e+01 : f32
    %210 = vector.broadcast %cst_47 : f32 to vector<48x1xf32>
    %211 = arith.divf %209, %210 : vector<48x1xf32>
    %212 = vector.broadcast %211 : vector<48x1xf32> to vector<48x32xf32>
    %213 = arith.subf %207, %212 : vector<48x32xf32>
    %214 = arith.mulf %213, %213 : vector<48x32xf32>
    %cst_48 = arith.constant dense<0.000000e+00> : vector<48xf32>
    %215 = vector.multi_reduction <add>, %214, %cst_48 [1] : vector<48x32xf32> to vector<48xf32>
    %216 = vector.shape_cast %215 : vector<48xf32> to vector<48x1xf32>
    %cst_49 = arith.constant 3.200000e+01 : f32
    %217 = vector.broadcast %cst_49 : f32 to vector<48x1xf32>
    %218 = arith.divf %216, %217 : vector<48x1xf32>
    %219 = vector.broadcast %211 : vector<48x1xf32> to vector<48x32xf32>
    %220 = arith.subf %207, %219 : vector<48x32xf32>
    %cst_50 = arith.constant 9.99999974E-6 : f32
    %221 = vector.broadcast %cst_50 : f32 to vector<48x1xf32>
    %222 = arith.addf %218, %221 : vector<48x1xf32>
    %223 = math.rsqrt %222 : vector<48x1xf32>
    %224 = vector.broadcast %223 : vector<48x1xf32> to vector<48x32xf32>
    %225 = arith.mulf %220, %224 : vector<48x32xf32>
    %c0_51 = arith.constant 0 : index
    %c0_52 = arith.constant 0 : index
    %226 = vector.load %arg5[%c0_51, %c0_52] : memref<1x32xf32, #tpu.memory_space<vmem>>, vector<1x32xf32>
    %227 = vector.broadcast %226 : vector<1x32xf32> to vector<48x32xf32>
    %228 = arith.mulf %225, %227 : vector<48x32xf32>
    %c0_53 = arith.constant 0 : index
    %c0_54 = arith.constant 0 : index
    %229 = vector.load %arg6[%c0_53, %c0_54] : memref<32x32xf32, #tpu.memory_space<vmem>>, vector<32x32xf32>
    %cst_55 = arith.constant dense<0.000000e+00> : vector<48x32xf32>
    %230 = tpu.matmul %228, %229, %cst_55 {dimension_numbers = #tpu.dot_dimension_numbers<[1], [0], [0], [1], [0, 0, 1, 1], [], []>} : vector<48x32xf32>, vector<32x32xf32>, vector<48x32xf32> -> vector<48x32xf32>
    %cst_56 = arith.constant 5.000000e-01 : f32
    %231 = vector.broadcast %cst_56 : f32 to vector<48x32xf32>
    %232 = arith.mulf %231, %230 : vector<48x32xf32>
    %cst_57 = arith.constant 0.707106769 : f32
    %233 = vector.broadcast %cst_57 : f32 to vector<48x32xf32>
    %234 = arith.mulf %230, %233 : vector<48x32xf32>
    %235 = math.erf %234 : vector<48x32xf32>
    %cst_58 = arith.constant 1.000000e+00 : f32
    %236 = vector.broadcast %cst_58 : f32 to vector<48x32xf32>
    %237 = arith.addf %236, %235 : vector<48x32xf32>
    %238 = arith.mulf %232, %237 : vector<48x32xf32>
    %c0_59 = arith.constant 0 : index
    %c0_60 = arith.constant 0 : index
    %239 = vector.load %arg7[%c0_59, %c0_60] : memref<32x32xf32, #tpu.memory_space<vmem>>, vector<32x32xf32>
    %cst_61 = arith.constant dense<0.000000e+00> : vector<48x32xf32>
    %240 = tpu.matmul %238, %239, %cst_61 {dimension_numbers = #tpu.dot_dimension_numbers<[1], [0], [0], [1], [0, 0, 1, 1], [], []>} : vector<48x32xf32>, vector<32x32xf32>, vector<48x32xf32> -> vector<48x32xf32>
    %241 = arith.addf %207, %240 : vector<48x32xf32>
    %242 = vector.shape_cast %241 : vector<48x32xf32> to vector<3x2x8x32xf32>
    %c0_62 = arith.constant 0 : index
    %c0_63 = arith.constant 0 : index
    %c0_64 = arith.constant 0 : index
    %c0_65 = arith.constant 0 : index
    %243 = vector.load %arg8[%c0_62, %c0_63, %c0_64, %c0_65] : memref<3x2x8x32xf32, #tpu.memory_space<vmem>>, vector<3x2x8x32xf32>
    tpu.vector_store %arg8[%c0_62, %c0_63, %c0_64, %c0_65], %242 {strides = array<i32>} : memref<3x2x8x32xf32, #tpu.memory_space<vmem>>, vector<3x2x8x32xf32>,
    return
  }
}

</mosaic_0001>

<llo_original>
// kernel: _fused_forward.1
$region0: #{_fused_forward.1}
  #allocation0 [shape = 'u32[]', space=smem, size = 0x4, offset = 0x4, fixed_abs, tag = 'smem constant byte address 0x4 - core index']
  #allocation1 [shape = 'u32[144,128]{1,0:T(1,128)}', space=vmem, size = 0x12000, scoped, tag = 'internal scratch']
  %s0 = inlined_call_operand.vmem [shape: f32[3,2,8,32], index: 0, kind: input, shape index: {}]
  %s1 = inlined_call_operand.hbm [shape: f32[2,8,32], index: 1, kind: input, shape index: {}]
  %s2 = inlined_call_operand.vmem [shape: f32[3,32,32], index: 2, kind: input, shape index: {}]
  %s3 = inlined_call_operand.hbm [shape: f32[32,192], index: 3, kind: input, shape index: {}]
  %s4 = inlined_call_operand.hbm [shape: f32[3,32,32], index: 4, kind: input, shape index: {}]
  %s5 = inlined_call_operand.vmem [shape: f32[1,32], index: 5, kind: input, shape index: {}]
  %s6 = inlined_call_operand.hbm [shape: f32[32,32], index: 6, kind: input, shape index: {}]
  %s7 = inlined_call_operand.hbm [shape: f32[32,32], index: 7, kind: input, shape index: {}]
  %s8 = inlined_call_operand.vmem [shape: f32[3,2,8,32], index: 8, kind: output, shape index: {}]
  %s9 = sld [smem:[#allocation0]]
  $region62: #{_fused_forward.1} parent=0
    _
  %s11 = ssub.s32 1, %s9
  %s12 = scalar_select 0, %s11, %s9
  $region1: #{_fused_forward.1} parent=0
    #allocation2 [shape = 'u8[8192]{0}', space=vmem, size = 0x2000, scoped, tag = 'input window, operand 1, single buffered']
    #allocation3 [shape = 's32[1]{0}', space=sflag, size = 0x4, scoped, tag = 'scoped memory for _fused_forward.1']
    #allocation4 [shape = 'u8[32768]{0}', space=vmem, size = 0x8000, scoped, tag = 'input window, operand 3, single buffered']
    #allocation5 [shape = 's32[1]{0}', space=sflag, size = 0x4, scoped, tag = 'scoped memory for _fused_forward.1']
    #allocation6 [shape = 'u8[49152]{0}', space=vmem, size = 0xc000, scoped, tag = 'input window, operand 4, single buffered']
    #allocation7 [shape = 'u8[16384]{0}', space=vmem, size = 0x4000, scoped, tag = 'input window, operand 6, single buffered']
    #allocation8 [shape = 's32[1]{0}', space=sflag, size = 0x4, scoped, tag = 'scoped memory for _fused_forward.1']
    #allocation9 [shape = 'u8[16384]{0}', space=vmem, size = 0x4000, scoped, tag = 'input window, operand 7, single buffered']
    %13 = vsyncpa [#allocation3], 0
    %14 = vsyncpa [#allocation5], 0
    %15 = vsyncpa [#allocation8], 0
    // Predicated region
    $region2: #{_fused_forward.1} parent=1 // pred_check
      _
    $region3: #{_fused_forward.1} parent=1 // pred_check_branch
      %17 = sbr.rel (0) target = $region5
    $region4: #{_fused_forward.1} parent=1 // pred_region
      _
    $region5: #{_fused_forward.1} parent=1 // pred_fallthru
      _
    // Predicated region
    $region6: #{_fused_forward.1} parent=1 // pred_check
      _
    $region7: #{_fused_forward.1} parent=1 // pred_check_branch
      %19 = sbr.rel (0) target = $region9
    $region8: #{_fused_forward.1} parent=1 // pred_region
      %s21 = ssub.s32 256, 256
      %22 = vsyncadd [#allocation3], %s21
      %s23 = sshll.u32 [#allocation2], 4
      %s24 = int_to_ptr.vmem [resolvable:$true] %s23
      %29 = dma.hbm_to_vmem [thread:$0]  %s1, 256, %s24, [#allocation3], 128, 128, 8
    $region9: #{_fused_forward.1} parent=1 // pred_fallthru
      _
    // Predicated region
    $region10: #{_fused_forward.1} parent=1 // pred_check
      _
    $region11: #{_fused_forward.1} parent=1 // pred_check_branch
      %31 = sbr.rel (0) target = $region13
    $region12: #{_fused_forward.1} parent=1 // pred_region
      _
    $region13: #{_fused_forward.1} parent=1 // pred_fallthru
      _
    // Predicated region
    $region14: #{_fused_forward.1} parent=1 // pred_check
      _
    $region15: #{_fused_forward.1} parent=1 // pred_check_branch
      %33 = sbr.rel (0) target = $region17
    $region16: #{_fused_forward.1} parent=1 // pred_region
      %s35 = ssub.s32 1024, 1024
      %36 = vsyncadd [#allocation5], %s35
      %s37 = sshll.u32 [#allocation4], 4
      %s38 = int_to_ptr.vmem [resolvable:$true] %s37
      %43 = dma.hbm_to_vmem [thread:$0]  %s3, 1024, %s38, [#allocation5], 256, 256, 16
    $region17: #{_fused_forward.1} parent=1 // pred_fallthru
      _
    // Predicated region
    $region18: #{_fused_forward.1} parent=1 // pred_check
      _
    $region19: #{_fused_forward.1} parent=1 // pred_check_branch
      %45 = sbr.rel (0) target = $region21
    $region20: #{_fused_forward.1} parent=1 // pred_region
      %s47 = ssub.s32 1536, 1536
      %48 = vsyncadd [#allocation5], %s47
      %s49 = sshll.u32 [#allocation6], 4
      %s50 = int_to_ptr.vmem [resolvable:$true] %s49
      %55 = dma.hbm_to_vmem [thread:$0]  %s4, 1536, %s50, [#allocation5], 128, 128, 8
    $region21: #{_fused_forward.1} parent=1 // pred_fallthru
      _
    // Predicated region
    $region22: #{_fused_forward.1} parent=1 // pred_check
      _
    $region23: #{_fused_forward.1} parent=1 // pred_check_branch
      %57 = sbr.rel (0) target = $region25
    $region24: #{_fused_forward.1} parent=1 // pred_region
      _
    $region25: #{_fused_forward.1} parent=1 // pred_fallthru
      _
    // Predicated region
    $region26: #{_fused_forward.1} parent=1 // pred_check
      _
    $region27: #{_fused_forward.1} parent=1 // pred_check_branch
      %59 = sbr.rel (0) target = $region29
    $region28: #{_fused_forward.1} parent=1 // pred_region
      %s61 = ssub.s32 512, 512
      %62 = vsyncadd [#allocation8], %s61
      %s63 = sshll.u32 [#allocation7], 4
      %s64 = int_to_ptr.vmem [resolvable:$true] %s63
      %69 = dma.hbm_to_vmem [thread:$0]  %s6, 512, %s64, [#allocation8], 128, 128, 8
    $region29: #{_fused_forward.1} parent=1 // pred_fallthru
      _
    // Predicated region
    $region30: #{_fused_forward.1} parent=1 // pred_check
      _
    $region31: #{_fused_forward.1} parent=1 // pred_check_branch
      %71 = sbr.rel (0) target = $region33
    $region32: #{_fused_forward.1} parent=1 // pred_region
      %s73 = ssub.s32 512, 512
      %74 = vsyncadd [#allocation8], %s73
      %s75 = sshll.u32 [#allocation9], 4
      %s76 = int_to_ptr.vmem [resolvable:$true] %s75
      %81 = dma.hbm_to_vmem [thread:$0]  %s7, 512, %s76, [#allocation8], 128, 128, 8
    $region33: #{_fused_forward.1} parent=1 // pred_fallthru
      _
    // Predicated region
    $region34: #{_fused_forward.1} parent=1 // pred_check
      _
    $region35: #{_fused_forward.1} parent=1 // pred_check_branch
      %83 = sbr.rel (0) target = $region37
    $region36: #{_fused_forward.1} parent=1 // pred_region
      %84 = dma.done [#allocation3], 256
    $region37: #{_fused_forward.1} parent=1 // pred_fallthru
      _
    // Predicated region
    $region38: #{_fused_forward.1} parent=1 // pred_check
      _
    $region39: #{_fused_forward.1} parent=1 // pred_check_branch
      %86 = sbr.rel (0) target = $region41
    $region40: #{_fused_forward.1} parent=1 // pred_region
      %87 = dma.done [#allocation5], 1024
    $region41: #{_fused_forward.1} parent=1 // pred_fallthru
      _
    // Predicated region
    $region42: #{_fused_forward.1} parent=1 // pred_check
      _
    $region43: #{_fused_forward.1} parent=1 // pred_check_branch
      %89 = sbr.rel (0) target = $region45
    $region44: #{_fused_forward.1} parent=1 // pred_region
      %90 = dma.done [#allocation5], 1536
    $region45: #{_fused_forward.1} parent=1 // pred_fallthru
      _
    // Predicated region
    $region46: #{_fused_forward.1} parent=1 // pred_check
      _
    $region47: #{_fused_forward.1} parent=1 // pred_check_branch
      %92 = sbr.rel (0) target = $region49
    $region48: #{_fused_forward.1} parent=1 // pred_region
      %93 = dma.done [#allocation8], 512
    $region49: #{_fused_forward.1} parent=1 // pred_fallthru
      _
    // Predicated region
    $region50: #{_fused_forward.1} parent=1 // pred_check
      _
    $region51: #{_fused_forward.1} parent=1 // pred_check_branch
      %95 = sbr.rel (0) target = $region53
    $region52: #{_fused_forward.1} parent=1 // pred_region
      %96 = dma.done [#allocation8], 512
    $region53: #{_fused_forward.1} parent=1 // pred_fallthru
      _
    %v97 = vld [vmem:[%s0] sm:$0xff]
    %v98 = vld [vmem:[%s0 + $0x8] sm:$0xff]
    %v99 = vld [vmem:[%s0 + $0x10] sm:$0xff]
    %v100 = vld [vmem:[%s0 + $0x18] sm:$0xff]
    %v101 = vld [vmem:[%s0 + $0x20] sm:$0xff]
    %v102 = vld [vmem:[%s0 + $0x28] sm:$0xff]
    %v103 = vld [vmem:[#allocation2] sm:$0xff]
    %v104 = vld [vmem:[#allocation2 + $0x8] sm:$0xff]
    %v105 = vld [vmem:[#allocation4] sm:$0xff]
    %v106 = vld [vmem:[#allocation4 + $0x8] sm:$0xff]
    %v107 = vld [vmem:[#allocation4 + $0x10] sm:$0xff]
    %v108 = vld [vmem:[#allocation4 + $0x18] sm:$0xff]
    %v109 = vld [vmem:[#allocation4 + $0x20] sm:$0xff]
    %v110 = vld [vmem:[#allocation4 + $0x28] sm:$0xff]
    %v111 = vld [vmem:[#allocation4 + $0x30] sm:$0xff]
    %v112 = vld [vmem:[#allocation4 + $0x38] sm:$0xff]
    %vm113 = vcmask 261120
    %v115 = vsel %vm113, %v103, 0
    %v118 = vsel %vm113, %v104, 0
    %120 = vmatprep.subr.mxu0 0.0
    %121 = vmatpush1.msra.mxu0 0.0
    %122 = vmatprep.subr.mxu0 0.0
    %123 = vmatpush1.msra.mxu0 0.0
    %124 = vmatprep.subr.mxu0 0.0
    %125 = vmatpush1.msra.mxu0 0.0
    %126 = vmatprep.subr.mxu0 0.0
    %127 = vmatpush1.msra.mxu0 0.0
    %128 = vmatprep.subr.mxu0 0.0
    %129 = vmatpush1.msra.mxu0 0.0
    %130 = vmatprep.subr.mxu0 0.0
    %131 = vmatpush1.msra.mxu0 0.0
    %132 = vmatprep.subr.mxu0 0.0
    %133 = vmatpush1.msra.mxu0 0.0
    %134 = vmatprep.subr.mxu0 0.0
    %135 = vmatpush1.msra.mxu0 0.0
    %136 = vmatprep.subr.mxu0 0.0
    %137 = vmatpush1.msra.mxu0 0.0
    %138 = vmatprep.subr.mxu0 0.0
    %139 = vmatpush1.msra.mxu0 0.0
    %140 = vmatprep.subr.mxu0 0.0
    %141 = vmatpush1.msra.mxu0 0.0
    %142 = vmatprep.subr.mxu0 0.0
    %143 = vmatpush1.msra.mxu0 0.0
    %144 = vmatprep.subr.mxu0 %v112
    %145 = vmatpush1.msra.mxu0 %v111
    %146 = vmatprep.subr.mxu0 %v110
    %147 = vmatpush1.msra.mxu0 %v109
    %148 = vmatprep.subr.mxu0 %v108
    %149 = vmatpush1.msra.mxu0 %v107
    %150 = vmatprep.subr.mxu0 %v106
    %151 = vmatpush1.msra.mxu0 %v105
    %152 = vmatprep.subr.mxu0 0.0
    %153 = vmatpush2.msra.mxu0 0.0
    %154 = vmatprep.subr.mxu0 0.0
    %155 = vmatpush2.msra.mxu0 0.0
    %156 = vmatprep.subr.mxu0 0.0
    %157 = vmatpush2.msra.mxu0 0.0
    %158 = vmatprep.subr.mxu0 0.0
    %159 = vmatpush2.msra.mxu0 0.0
    %160 = vmatprep.subr.mxu0 0.0
    %161 = vmatpush2.msra.mxu0 0.0
    %162 = vmatprep.subr.mxu0 0.0
    %163 = vmatpush2.msra.mxu0 0.0
    %164 = vmatprep.subr.mxu0 0.0
    %165 = vmatpush2.msra.mxu0 0.0
    %166 = vmatprep.subr.mxu0 0.0
    %167 = vmatpush2.msra.mxu0 0.0
    %168 = vmatprep.subr.mxu0 0.0
    %169 = vmatpush2.msra.mxu0 0.0
    %170 = vmatprep.subr.mxu0 0.0
    %171 = vmatpush2.msra.mxu0 0.0
    %172 = vmatprep.subr.mxu0 0.0
    %173 = vmatpush2.msra.mxu0 0.0
    %174 = vmatprep.subr.mxu0 0.0
    %175 = vmatpush2.msra.mxu0 0.0
    %176 = vmatprep.subr.mxu0 0.0
    %177 = vmatpush2.msra.mxu0 0.0
    %178 = vmatprep.subr.mxu0 0.0
    %179 = vmatpush2.msra.mxu0 0.0
    %180 = vmatprep.subr.mxu0 0.0
    %181 = vmatpush2.msra.mxu0 0.0
    %182 = vmatprep.subr.mxu0 0.0
    %183 = vmatpush2.msra.mxu0 0.0
    %184 = vmatprep.mubr.f32.mxu0 0.0
    %185 = vmatmul.mubr.f32.gmra.mxu0 %v115
    %v186 = vpop.f32.mrf.mxu0
    %v187 = vadd.f32 0.0, %v186
    %v188 = vpop.f32.mrf.mxu0
    %v189 = vadd.f32 0.0, %v188
    %190 = vmatprep.mubr.f32.mxu0 0.0
    %191 = vmatmul.mubr.f32.gmra.mxu0 %v118
    %v192 = vpop.f32.mrf.mxu0
    %v193 = vadd.f32 0.0, %v192
    %v194 = vpop.f32.mrf.mxu0
    %v195 = vadd.f32 0.0, %v194
    %196 = vdwg.mxu0
    %v197 = vld [vmem:[%s2] sm:$0xff]
    %v198 = vld [vmem:[%s2 + $0x8] sm:$0xff]
    %v199 = vld [vmem:[%s2 + $0x10] sm:$0xff]
    %v200 = vld [vmem:[%s2 + $0x18] sm:$0xff]
    %v201 = vld [vmem:[%s2 + $0x20] sm:$0xff]
    %v202 = vld [vmem:[%s2 + $0x28] sm:$0xff]
    %v203 = vld [vmem:[%s2 + $0x30] sm:$0xff]
    %v204 = vld [vmem:[%s2 + $0x38] sm:$0xff]
    %v205 = vld [vmem:[%s2 + $0x40] sm:$0xff]
    %v206 = vld [vmem:[%s2 + $0x48] sm:$0xff]
    %v207 = vld [vmem:[%s2 + $0x50] sm:$0xff]
    %v208 = vld [vmem:[%s2 + $0x58] sm:$0xff]
    %v210 = vsel %vm113, %v97, 0
    %v213 = vsel %vm113, %v98, 0
    %215 = vmatprep.subr.mxu0 0.0
    %216 = vmatpush1.msra.mxu0 0.0
    %217 = vmatprep.subr.mxu0 0.0
    %218 = vmatpush1.msra.mxu0 0.0
    %219 = vmatprep.subr.mxu0 0.0
    %220 = vmatpush1.msra.mxu0 0.0
    %221 = vmatprep.subr.mxu0 0.0
    %222 = vmatpush1.msra.mxu0 0.0
    %223 = vmatprep.subr.mxu0 0.0
    %224 = vmatpush1.msra.mxu0 0.0
    %225 = vmatprep.subr.mxu0 0.0
    %226 = vmatpush1.msra.mxu0 0.0
    %227 = vmatprep.subr.mxu0 0.0
    %228 = vmatpush1.msra.mxu0 0.0
    %229 = vmatprep.subr.mxu0 0.0
    %230 = vmatpush1.msra.mxu0 0.0
    %231 = vmatprep.subr.mxu0 0.0
    %232 = vmatpush1.msra.mxu0 0.0
    %233 = vmatprep.subr.mxu0 0.0
    %234 = vmatpush1.msra.mxu0 0.0
    %235 = vmatprep.subr.mxu0 0.0
    %236 = vmatpush1.msra.mxu0 0.0
    %237 = vmatprep.subr.mxu0 0.0
    %238 = vmatpush1.msra.mxu0 0.0
    %239 = vmatprep.subr.mxu0 0.0
    %240 = vmatpush1.msra.mxu0 %v200
    %241 = vmatprep.subr.mxu0 0.0
    %242 = vmatpush1.msra.mxu0 %v199
    %243 = vmatprep.subr.mxu0 0.0
    %244 = vmatpush1.msra.mxu0 %v198
    %245 = vmatprep.subr.mxu0 0.0
    %246 = vmatpush1.msra.mxu0 %v197
    %247 = vmatprep.subr.mxu0 0.0
    %248 = vmatpush2.msra.mxu0 0.0
    %249 = vmatprep.subr.mxu0 0.0
    %250 = vmatpush2.msra.mxu0 0.0
    %251 = vmatprep.subr.mxu0 0.0
    %252 = vmatpush2.msra.mxu0 0.0
    %253 = vmatprep.subr.mxu0 0.0
    %254 = vmatpush2.msra.mxu0 0.0
    %255 = vmatprep.subr.mxu0 0.0
    %256 = vmatpush2.msra.mxu0 0.0
    %257 = vmatprep.subr.mxu0 0.0
    %258 = vmatpush2.msra.mxu0 0.0
    %259 = vmatprep.subr.mxu0 0.0
    %260 = vmatpush2.msra.mxu0 0.0
    %261 = vmatprep.subr.mxu0 0.0
    %262 = vmatpush2.msra.mxu0 0.0
    %263 = vmatprep.subr.mxu0 0.0
    %264 = vmatpush2.msra.mxu0 0.0
    %265 = vmatprep.subr.mxu0 0.0
    %266 = vmatpush2.msra.mxu0 0.0
    %267 = vmatprep.subr.mxu0 0.0
    %268 = vmatpush2.msra.mxu0 0.0
    %269 = vmatprep.subr.mxu0 0.0
    %270 = vmatpush2.msra.mxu0 0.0
    %271 = vmatprep.subr.mxu0 0.0
    %272 = vmatpush2.msra.mxu0 0.0
    %273 = vmatprep.subr.mxu0 0.0
    %274 = vmatpush2.msra.mxu0 0.0
    %275 = vmatprep.subr.mxu0 0.0
    %276 = vmatpush2.msra.mxu0 0.0
    %277 = vmatprep.subr.mxu0 0.0
    %278 = vmatpush2.msra.mxu0 0.0
    %279 = vmatprep.mubr.f32.mxu0 0.0
    %280 = vmatmul.mubr.f32.gmra.mxu0 %v210
    %v281 = vpop.f32.mrf.mxu0
    %v282 = vadd.f32 0.0, %v281
    %v283 = vpop.f32.mrf.mxu0
    %284 = vmatprep.mubr.f32.mxu0 0.0
    %285 = vmatmul.mubr.f32.gmra.mxu0 %v213
    %v286 = vpop.f32.mrf.mxu0
    %v287 = vadd.f32 0.0, %v286
    %v288 = vpop.f32.mrf.mxu0
    %289 = vdwg.mxu0
    %v291 = vsel %vm113, %v99, 0
    %v294 = vsel %vm113, %v100, 0
    %296 = vmatprep.subr.mxu0 0.0
    %297 = vmatpush1.msra.mxu0 0.0
    %298 = vmatprep.subr.mxu0 0.0
    %299 = vmatpush1.msra.mxu0 0.0
    %300 = vmatprep.subr.mxu0 0.0
    %301 = vmatpush1.msra.mxu0 0.0
    %302 = vmatprep.subr.mxu0 0.0
    %303 = vmatpush1.msra.mxu0 0.0
    %304 = vmatprep.subr.mxu0 0.0
    %305 = vmatpush1.msra.mxu0 0.0
    %306 = vmatprep.subr.mxu0 0.0
    %307 = vmatpush1.msra.mxu0 0.0
    %308 = vmatprep.subr.mxu0 0.0
    %309 = vmatpush1.msra.mxu0 0.0
    %310 = vmatprep.subr.mxu0 0.0
    %311 = vmatpush1.msra.mxu0 0.0
    %312 = vmatprep.subr.mxu0 0.0
    %313 = vmatpush1.msra.mxu0 0.0
    %314 = vmatprep.subr.mxu0 0.0
    %315 = vmatpush1.msra.mxu0 0.0
    %316 = vmatprep.subr.mxu0 0.0
    %317 = vmatpush1.msra.mxu0 0.0
    %318 = vmatprep.subr.mxu0 0.0
    %319 = vmatpush1.msra.mxu0 0.0
    %320 = vmatprep.subr.mxu0 0.0
    %321 = vmatpush1.msra.mxu0 %v204
    %322 = vmatprep.subr.mxu0 0.0
    %323 = vmatpush1.msra.mxu0 %v203
    %324 = vmatprep.subr.mxu0 0.0
    %325 = vmatpush1.msra.mxu0 %v202
    %326 = vmatprep.subr.mxu0 0.0
    %327 = vmatpush1.msra.mxu0 %v201
    %328 = vmatprep.subr.mxu0 0.0
    %329 = vmatpush2.msra.mxu0 0.0
    %330 = vmatprep.subr.mxu0 0.0
    %331 = vmatpush2.msra.mxu0 0.0
    %332 = vmatprep.subr.mxu0 0.0
    %333 = vmatpush2.msra.mxu0 0.0
    %334 = vmatprep.subr.mxu0 0.0
    %335 = vmatpush2.msra.mxu0 0.0
    %336 = vmatprep.subr.mxu0 0.0
    %337 = vmatpush2.msra.mxu0 0.0
    %338 = vmatprep.subr.mxu0 0.0
    %339 = vmatpush2.msra.mxu0 0.0
    %340 = vmatprep.subr.mxu0 0.0
    %341 = vmatpush2.msra.mxu0 0.0
    %342 = vmatprep.subr.mxu0 0.0
    %343 = vmatpush2.msra.mxu0 0.0
    %344 = vmatprep.subr.mxu0 0.0
    %345 = vmatpush2.msra.mxu0 0.0
    %346 = vmatprep.subr.mxu0 0.0
    %347 = vmatpush2.msra.mxu0 0.0
    %348 = vmatprep.subr.mxu0 0.0
    %349 = vmatpush2.msra.mxu0 0.0
    %350 = vmatprep.subr.mxu0 0.0
    %351 = vmatpush2.msra.mxu0 0.0
    %352 = vmatprep.subr.mxu0 0.0
    %353 = vmatpush2.msra.mxu0 0.0
    %354 = vmatprep.subr.mxu0 0.0
    %355 = vmatpush2.msra.mxu0 0.0
    %356 = vmatprep.subr.mxu0 0.0
    %357 = vmatpush2.msra.mxu0 0.0
    %358 = vmatprep.subr.mxu0 0.0
    %359 = vmatpush2.msra.mxu0 0.0
    %360 = vmatprep.mubr.f32.mxu0 0.0
    %361 = vmatmul.mubr.f32.gmra.mxu0 %v291
    %v362 = vpop.f32.mrf.mxu0
    %v363 = vadd.f32 0.0, %v362
    %v364 = vpop.f32.mrf.mxu0
    %365 = vmatprep.mubr.f32.mxu0 0.0
    %366 = vmatmul.mubr.f32.gmra.mxu0 %v294
    %v367 = vpop.f32.mrf.mxu0
    %v368 = vadd.f32 0.0, %v367
    %v369 = vpop.f32.mrf.mxu0
    %370 = vdwg.mxu0
    %v372 = vsel %vm113, %v101, 0
    %v375 = vsel %vm113, %v102, 0
    %377 = vmatprep.subr.mxu0 0.0
    %378 = vmatpush1.msra.mxu0 0.0
    %379 = vmatprep.subr.mxu0 0.0
    %380 = vmatpush1.msra.mxu0 0.0
    %381 = vmatprep.subr.mxu0 0.0
    %382 = vmatpush1.msra.mxu0 0.0
    %383 = vmatprep.subr.mxu0 0.0
    %384 = vmatpush1.msra.mxu0 0.0
    %385 = vmatprep.subr.mxu0 0.0
    %386 = vmatpush1.msra.mxu0 0.0
    %387 = vmatprep.subr.mxu0 0.0
    %388 = vmatpush1.msra.mxu0 0.0
    %389 = vmatprep.subr.mxu0 0.0
    %390 = vmatpush1.msra.mxu0 0.0
    %391 = vmatprep.subr.mxu0 0.0
    %392 = vmatpush1.msra.mxu0 0.0
    %393 = vmatprep.subr.mxu0 0.0
    %394 = vmatpush1.msra.mxu0 0.0
    %395 = vmatprep.subr.mxu0 0.0
    %396 = vmatpush1.msra.mxu0 0.0
    %397 = vmatprep.subr.mxu0 0.0
    %398 = vmatpush1.msra.mxu0 0.0
    %399 = vmatprep.subr.mxu0 0.0
    %400 = vmatpush1.msra.mxu0 0.0
    %401 = vmatprep.subr.mxu0 0.0
    %402 = vmatpush1.msra.mxu0 %v208
    %403 = vmatprep.subr.mxu0 0.0
    %404 = vmatpush1.msra.mxu0 %v207
    %405 = vmatprep.subr.mxu0 0.0
    %406 = vmatpush1.msra.mxu0 %v206
    %407 = vmatprep.subr.mxu0 0.0
    %408 = vmatpush1.msra.mxu0 %v205
    %409 = vmatprep.subr.mxu0 0.0
    %410 = vmatpush2.msra.mxu0 0.0
    %411 = vmatprep.subr.mxu0 0.0
    %412 = vmatpush2.msra.mxu0 0.0
    %413 = vmatprep.subr.mxu0 0.0
    %414 = vmatpush2.msra.mxu0 0.0
    %415 = vmatprep.subr.mxu0 0.0
    %416 = vmatpush2.msra.mxu0 0.0
    %417 = vmatprep.subr.mxu0 0.0
    %418 = vmatpush2.msra.mxu0 0.0
    %419 = vmatprep.subr.mxu0 0.0
    %420 = vmatpush2.msra.mxu0 0.0
    %421 = vmatprep.subr.mxu0 0.0
    %422 = vmatpush2.msra.mxu0 0.0
    %423 = vmatprep.subr.mxu0 0.0
    %424 = vmatpush2.msra.mxu0 0.0
    %425 = vmatprep.subr.mxu0 0.0
    %426 = vmatpush2.msra.mxu0 0.0
    %427 = vmatprep.subr.mxu0 0.0
    %428 = vmatpush2.msra.mxu0 0.0
    %429 = vmatprep.subr.mxu0 0.0
    %430 = vmatpush2.msra.mxu0 0.0
    %431 = vmatprep.subr.mxu0 0.0
    %432 = vmatpush2.msra.mxu0 0.0
    %433 = vmatprep.subr.mxu0 0.0
    %434 = vmatpush2.msra.mxu0 0.0
    %435 = vmatprep.subr.mxu0 0.0
    %436 = vmatpush2.msra.mxu0 0.0
    %437 = vmatprep.subr.mxu0 0.0
    %438 = vmatpush2.msra.mxu0 0.0
    %439 = vmatprep.subr.mxu0 0.0
    %440 = vmatpush2.msra.mxu0 0.0
    %441 = vmatprep.mubr.f32.mxu0 0.0
    %442 = vmatmul.mubr.f32.gmra.mxu0 %v372
    %v443 = vpop.f32.mrf.mxu0
    %v444 = vadd.f32 0.0, %v443
    %v445 = vpop.f32.mrf.mxu0
    %446 = vmatprep.mubr.f32.mxu0 0.0
    %447 = vmatmul.mubr.f32.gmra.mxu0 %v375
    %v448 = vpop.f32.mrf.mxu0
    %v449 = vadd.f32 0.0, %v448
    %v450 = vpop.f32.mrf.mxu0
    %451 = vdwg.mxu0
    %vm452 = vcmask 130048
    %v454 = vsel %vm452, %v282, 0
    %v457 = vsel %vm452, %v187, 0
    %459 = vmatprep.subr.mxu0 0.0
    %460 = vmatpush1.xpose.msra.mxu0 0.0
    %461 = vmatprep.subr.mxu0 0.0
    %462 = vmatpush1.xpose.msra.mxu0 0.0
    %463 = vmatprep.subr.mxu0 0.0
    %464 = vmatpush1.xpose.msra.mxu0 0.0
    %465 = vmatprep.subr.mxu0 0.0
    %466 = vmatpush1.xpose.msra.mxu0 0.0
    %467 = vmatprep.subr.mxu0 0.0
    %468 = vmatpush1.xpose.msra.mxu0 0.0
    %469 = vmatprep.subr.mxu0 0.0
    %470 = vmatpush1.xpose.msra.mxu0 0.0
    %471 = vmatprep.subr.mxu0 0.0
    %472 = vmatpush1.xpose.msra.mxu0 0.0
    %473 = vmatprep.subr.mxu0 0.0
    %474 = vmatpush1.xpose.msra.mxu0 0.0
    %475 = vmatprep.subr.mxu0 0.0
    %476 = vmatpush1.xpose.msra.mxu0 0.0
    %477 = vmatprep.subr.mxu0 0.0
    %478 = vmatpush1.xpose.msra.mxu0 0.0
    %479 = vmatprep.subr.mxu0 0.0
    %480 = vmatpush1.xpose.msra.mxu0 0.0
    %481 = vmatprep.subr.mxu0 0.0
    %482 = vmatpush1.xpose.msra.mxu0 0.0
    %483 = vmatprep.subr.mxu0 0.0
    %484 = vmatpush1.xpose.msra.mxu0 0.0
    %485 = vmatprep.subr.mxu0 0.0
    %486 = vmatpush1.xpose.msra.mxu0 0.0
    %487 = vmatprep.subr.mxu0 0.0
    %488 = vmatpush1.xpose.msra.mxu0 0.0
    %489 = vmatprep.subr.mxu0 0.0
    %490 = vmatpush1.xpose.msra.mxu0 %v457
    %491 = vmatprep.subr.mxu0 0.0
    %492 = vmatpush2.xpose.msra.mxu0 0.0
    %493 = vmatprep.subr.mxu0 0.0
    %494 = vmatpush2.xpose.msra.mxu0 0.0
    %495 = vmatprep.subr.mxu0 0.0
    %496 = vmatpush2.xpose.msra.mxu0 0.0
    %497 = vmatprep.subr.mxu0 0.0
    %498 = vmatpush2.xpose.msra.mxu0 0.0
    %499 = vmatprep.subr.mxu0 0.0
    %500 = vmatpush2.xpose.msra.mxu0 0.0
    %501 = vmatprep.subr.mxu0 0.0
    %502 = vmatpush2.xpose.msra.mxu0 0.0
    %503 = vmatprep.subr.mxu0 0.0
    %504 = vmatpush2.xpose.msra.mxu0 0.0
    %505 = vmatprep.subr.mxu0 0.0
    %506 = vmatpush2.xpose.msra.mxu0 0.0
    %507 = vmatprep.subr.mxu0 0.0
    %508 = vmatpush2.xpose.msra.mxu0 0.0
    %509 = vmatprep.subr.mxu0 0.0
    %510 = vmatpush2.xpose.msra.mxu0 0.0
    %511 = vmatprep.subr.mxu0 0.0
    %512 = vmatpush2.xpose.msra.mxu0 0.0
    %513 = vmatprep.subr.mxu0 0.0
    %514 = vmatpush2.xpose.msra.mxu0 0.0
    %515 = vmatprep.subr.mxu0 0.0
    %516 = vmatpush2.xpose.msra.mxu0 0.0
    %517 = vmatprep.subr.mxu0 0.0
    %518 = vmatpush2.xpose.msra.mxu0 0.0
    %519 = vmatprep.subr.mxu0 0.0
    %520 = vmatpush2.xpose.msra.mxu0 0.0
    %521 = vmatprep.subr.mxu0 0.0
    %522 = vmatpush2.xpose.msra.mxu0 0.0
    %523 = vmatprep.mubr.f32.mxu0 0.0
    %524 = vmatmul.mubr.f32.gmra.mxu0 %v454
    %v525 = vpop.f32.mrf.mxu0
    %v526 = vadd.f32 0.0, %v525
    %v527 = vpop.f32.mrf.mxu0
    %528 = vdwg.mxu0
    %v530 = vsel %vm452, %v287, 0
    %v533 = vsel %vm452, %v193, 0
    %535 = vmatprep.subr.mxu0 0.0
    %536 = vmatpush1.xpose.msra.mxu0 0.0
    %537 = vmatprep.subr.mxu0 0.0
    %538 = vmatpush1.xpose.msra.mxu0 0.0
    %539 = vmatprep.subr.mxu0 0.0
    %540 = vmatpush1.xpose.msra.mxu0 0.0
    %541 = vmatprep.subr.mxu0 0.0
    %542 = vmatpush1.xpose.msra.mxu0 0.0
    %543 = vmatprep.subr.mxu0 0.0
    %544 = vmatpush1.xpose.msra.mxu0 0.0
    %545 = vmatprep.subr.mxu0 0.0
    %546 = vmatpush1.xpose.msra.mxu0 0.0
    %547 = vmatprep.subr.mxu0 0.0
    %548 = vmatpush1.xpose.msra.mxu0 0.0
    %549 = vmatprep.subr.mxu0 0.0
    %550 = vmatpush1.xpose.msra.mxu0 0.0
    %551 = vmatprep.subr.mxu0 0.0
    %552 = vmatpush1.xpose.msra.mxu0 0.0
    %553 = vmatprep.subr.mxu0 0.0
    %554 = vmatpush1.xpose.msra.mxu0 0.0
    %555 = vmatprep.subr.mxu0 0.0
    %556 = vmatpush1.xpose.msra.mxu0 0.0
    %557 = vmatprep.subr.mxu0 0.0
    %558 = vmatpush1.xpose.msra.mxu0 0.0
    %559 = vmatprep.subr.mxu0 0.0
    %560 = vmatpush1.xpose.msra.mxu0 0.0
    %561 = vmatprep.subr.mxu0 0.0
    %562 = vmatpush1.xpose.msra.mxu0 0.0
    %563 = vmatprep.subr.mxu0 0.0
    %564 = vmatpush1.xpose.msra.mxu0 0.0
    %565 = vmatprep.subr.mxu0 0.0
    %566 = vmatpush1.xpose.msra.mxu0 %v533
    %567 = vmatprep.subr.mxu0 0.0
    %568 = vmatpush2.xpose.msra.mxu0 0.0
    %569 = vmatprep.subr.mxu0 0.0
    %570 = vmatpush2.xpose.msra.mxu0 0.0
    %571 = vmatprep.subr.mxu0 0.0
    %572 = vmatpush2.xpose.msra.mxu0 0.0
    %573 = vmatprep.subr.mxu0 0.0
    %574 = vmatpush2.xpose.msra.mxu0 0.0
    %575 = vmatprep.subr.mxu0 0.0
    %576 = vmatpush2.xpose.msra.mxu0 0.0
    %577 = vmatprep.subr.mxu0 0.0
    %578 = vmatpush2.xpose.msra.mxu0 0.0
    %579 = vmatprep.subr.mxu0 0.0
    %580 = vmatpush2.xpose.msra.mxu0 0.0
    %581 = vmatprep.subr.mxu0 0.0
    %582 = vmatpush2.xpose.msra.mxu0 0.0
    %583 = vmatprep.subr.mxu0 0.0
    %584 = vmatpush2.xpose.msra.mxu0 0.0
    %585 = vmatprep.subr.mxu0 0.0
    %586 = vmatpush2.xpose.msra.mxu0 0.0
    %587 = vmatprep.subr.mxu0 0.0
    %588 = vmatpush2.xpose.msra.mxu0 0.0
    %589 = vmatprep.subr.mxu0 0.0
    %590 = vmatpush2.xpose.msra.mxu0 0.0
    %591 = vmatprep.subr.mxu0 0.0
    %592 = vmatpush2.xpose.msra.mxu0 0.0
    %593 = vmatprep.subr.mxu0 0.0
    %594 = vmatpush2.xpose.msra.mxu0 0.0
    %595 = vmatprep.subr.mxu0 0.0
    %596 = vmatpush2.xpose.msra.mxu0 0.0
    %597 = vmatprep.subr.mxu0 0.0
    %598 = vmatpush2.xpose.msra.mxu0 0.0
    %599 = vmatprep.mubr.f32.mxu0 0.0
    %600 = vmatmul.mubr.f32.gmra.mxu0 %v530
    %v601 = vpop.f32.mrf.mxu0
    %v602 = vadd.f32 0.0, %v601
    %v603 = vpop.f32.mrf.mxu0
    %604 = vdwg.mxu0
    %v605 = vmul.f32 %v526, 0.25
    %v606 = vmul.f32 %v602, 0.25
    %vm607 = vcmask 64512
    %v608 = vsel %vm607, %v605, -inf
    %609 = vmax.xlane.f32.xlu0 %v608
    %v610 = vpop.xlane.xlu0 %609
    %v611 = vsel %vm607, %v606, -inf
    %612 = vmax.xlane.f32.xlu0 %v611
    %v613 = vpop.xlane.xlu0 %612
    %v614 = vsub.f32 %v605, %v610
    %v615 = vsub.f32 %v606, %v613
    %v616 = vmul.f32 %v614, 1.442695
    %v617 = vpow.pop %v616
    %v618 = vmul.f32 %v615, 1.442695
    %v619 = vpow.pop %v618
    %v620 = vsel %vm607, %v617, 0.0
    %621 = vadd.xlane.f32.xlu0 %v620
    %v622 = vpop.xlane.xlu0 %621
    %v623 = vsel %vm607, %v619, 0.0
    %624 = vadd.xlane.f32.xlu0 %v623
    %v625 = vpop.xlane.xlu0 %624
    %v626 = vrcp.pop %v622
    %v627 = vrcp.pop %v625
    %v628 = vmul.f32 %v617, %v626
    %v629 = vmul.f32 %v619, %v627
    %630 = vrot.lane.b32.xlu0 %v187, 96
    %v631 = vpop.permute.xlu0 %630
    %v634 = vsel %vm607, %v628, 0
    %636 = vmatprep.subr.mxu0 0.0
    %637 = vmatpush1.msra.mxu0 0.0
    %638 = vmatprep.subr.mxu0 0.0
    %639 = vmatpush1.msra.mxu0 0.0
    %640 = vmatprep.subr.mxu0 0.0
    %641 = vmatpush1.msra.mxu0 0.0
    %642 = vmatprep.subr.mxu0 0.0
    %643 = vmatpush1.msra.mxu0 0.0
    %644 = vmatprep.subr.mxu0 0.0
    %645 = vmatpush1.msra.mxu0 0.0
    %646 = vmatprep.subr.mxu0 0.0
    %647 = vmatpush1.msra.mxu0 0.0
    %648 = vmatprep.subr.mxu0 0.0
    %649 = vmatpush1.msra.mxu0 0.0
    %650 = vmatprep.subr.mxu0 0.0
    %651 = vmatpush1.msra.mxu0 0.0
    %652 = vmatprep.subr.mxu0 0.0
    %653 = vmatpush1.msra.mxu0 0.0
    %654 = vmatprep.subr.mxu0 0.0
    %655 = vmatpush1.msra.mxu0 0.0
    %656 = vmatprep.subr.mxu0 0.0
    %657 = vmatpush1.msra.mxu0 0.0
    %658 = vmatprep.subr.mxu0 0.0
    %659 = vmatpush1.msra.mxu0 0.0
    %660 = vmatprep.subr.mxu0 0.0
    %661 = vmatpush1.msra.mxu0 0.0
    %662 = vmatprep.subr.mxu0 0.0
    %663 = vmatpush1.msra.mxu0 0.0
    %664 = vmatprep.subr.mxu0 0.0
    %665 = vmatpush1.msra.mxu0 0.0
    %666 = vmatprep.subr.mxu0 0.0
    %667 = vmatpush1.msra.mxu0 %v631
    %668 = vmatprep.subr.mxu0 0.0
    %669 = vmatpush2.msra.mxu0 0.0
    %670 = vmatprep.subr.mxu0 0.0
    %671 = vmatpush2.msra.mxu0 0.0
    %672 = vmatprep.subr.mxu0 0.0
    %673 = vmatpush2.msra.mxu0 0.0
    %674 = vmatprep.subr.mxu0 0.0
    %675 = vmatpush2.msra.mxu0 0.0
    %676 = vmatprep.subr.mxu0 0.0
    %677 = vmatpush2.msra.mxu0 0.0
    %678 = vmatprep.subr.mxu0 0.0
    %679 = vmatpush2.msra.mxu0 0.0
    %680 = vmatprep.subr.mxu0 0.0
    %681 = vmatpush2.msra.mxu0 0.0
    %682 = vmatprep.subr.mxu0 0.0
    %683 = vmatpush2.msra.mxu0 0.0
    %684 = vmatprep.subr.mxu0 0.0
    %685 = vmatpush2.msra.mxu0 0.0
    %686 = vmatprep.subr.mxu0 0.0
    %687 = vmatpush2.msra.mxu0 0.0
    %688 = vmatprep.subr.mxu0 0.0
    %689 = vmatpush2.msra.mxu0 0.0
    %690 = vmatprep.subr.mxu0 0.0
    %691 = vmatpush2.msra.mxu0 0.0
    %692 = vmatprep.subr.mxu0 0.0
    %693 = vmatpush2.msra.mxu0 0.0
    %694 = vmatprep.subr.mxu0 0.0
    %695 = vmatpush2.msra.mxu0 0.0
    %696 = vmatprep.subr.mxu0 0.0
    %697 = vmatpush2.msra.mxu0 0.0
    %698 = vmatprep.subr.mxu0 0.0
    %699 = vmatpush2.msra.mxu0 0.0
    %700 = vmatprep.mubr.f32.mxu0 0.0
    %701 = vmatmul.mubr.f32.gmra.mxu0 %v634
    %v702 = vpop.f32.mrf.mxu0
    %v703 = vadd.f32 0.0, %v702
    %v704 = vpop.f32.mrf.mxu0
    %705 = vdwg.mxu0
    %706 = vrot.lane.b32.xlu0 %v193, 96
    %v707 = vpop.permute.xlu0 %706
    %v710 = vsel %vm607, %v629, 0
    %712 = vmatprep.subr.mxu0 0.0
    %713 = vmatpush1.msra.mxu0 0.0
    %714 = vmatprep.subr.mxu0 0.0
    %715 = vmatpush1.msra.mxu0 0.0
    %716 = vmatprep.subr.mxu0 0.0
    %717 = vmatpush1.msra.mxu0 0.0
    %718 = vmatprep.subr.mxu0 0.0
    %719 = vmatpush1.msra.mxu0 0.0
    %720 = vmatprep.subr.mxu0 0.0
    %721 = vmatpush1.msra.mxu0 0.0
    %722 = vmatprep.subr.mxu0 0.0
    %723 = vmatpush1.msra.mxu0 0.0
    %724 = vmatprep.subr.mxu0 0.0
    %725 = vmatpush1.msra.mxu0 0.0
    %726 = vmatprep.subr.mxu0 0.0
    %727 = vmatpush1.msra.mxu0 0.0
    %728 = vmatprep.subr.mxu0 0.0
    %729 = vmatpush1.msra.mxu0 0.0
    %730 = vmatprep.subr.mxu0 0.0
    %731 = vmatpush1.msra.mxu0 0.0
    %732 = vmatprep.subr.mxu0 0.0
    %733 = vmatpush1.msra.mxu0 0.0
    %734 = vmatprep.subr.mxu0 0.0
    %735 = vmatpush1.msra.mxu0 0.0
    %736 = vmatprep.subr.mxu0 0.0
    %737 = vmatpush1.msra.mxu0 0.0
    %738 = vmatprep.subr.mxu0 0.0
    %739 = vmatpush1.msra.mxu0 0.0
    %740 = vmatprep.subr.mxu0 0.0
    %741 = vmatpush1.msra.mxu0 0.0
    %742 = vmatprep.subr.mxu0 0.0
    %743 = vmatpush1.msra.mxu0 %v707
    %744 = vmatprep.subr.mxu0 0.0
    %745 = vmatpush2.msra.mxu0 0.0
    %746 = vmatprep.subr.mxu0 0.0
    %747 = vmatpush2.msra.mxu0 0.0
    %748 = vmatprep.subr.mxu0 0.0
    %749 = vmatpush2.msra.mxu0 0.0
    %750 = vmatprep.subr.mxu0 0.0
    %751 = vmatpush2.msra.mxu0 0.0
    %752 = vmatprep.subr.mxu0 0.0
    %753 = vmatpush2.msra.mxu0 0.0
    %754 = vmatprep.subr.mxu0 0.0
    %755 = vmatpush2.msra.mxu0 0.0
    %756 = vmatprep.subr.mxu0 0.0
    %757 = vmatpush2.msra.mxu0 0.0
    %758 = vmatprep.subr.mxu0 0.0
    %759 = vmatpush2.msra.mxu0 0.0
    %760 = vmatprep.subr.mxu0 0.0
    %761 = vmatpush2.msra.mxu0 0.0
    %762 = vmatprep.subr.mxu0 0.0
    %763 = vmatpush2.msra.mxu0 0.0
    %764 = vmatprep.subr.mxu0 0.0
    %765 = vmatpush2.msra.mxu0 0.0
    %766 = vmatprep.subr.mxu0 0.0
    %767 = vmatpush2.msra.mxu0 0.0
    %768 = vmatprep.subr.mxu0 0.0
    %769 = vmatpush2.msra.mxu0 0.0
    %770 = vmatprep.subr.mxu0 0.0
    %771 = vmatpush2.msra.mxu0 0.0
    %772 = vmatprep.subr.mxu0 0.0
    %773 = vmatpush2.msra.mxu0 0.0
    %774 = vmatprep.subr.mxu0 0.0
    %775 = vmatpush2.msra.mxu0 0.0
    %776 = vmatprep.mubr.f32.mxu0 0.0
    %777 = vmatmul.mubr.f32.gmra.mxu0 %v710
    %v778 = vpop.f32.mrf.mxu0
    %v779 = vadd.f32 0.0, %v778
    %v780 = vpop.f32.mrf.mxu0
    %781 = vdwg.mxu0
    %782 = vrot.lane.b32.xlu0 %v282, 112
    %v783 = vpop.permute.xlu0 %782
    %784 = vrot.lane.b32.xlu0 %v187, 112
    %v785 = vpop.permute.xlu0 %784
    %v786 = vsel %vm452, %v783, 0
    %v788 = vsel %vm452, %v785, 0
    %790 = vmatprep.subr.mxu0 0.0
    %791 = vmatpush1.xpose.msra.mxu0 0.0
    %792 = vmatprep.subr.mxu0 0.0
    %793 = vmatpush1.xpose.msra.mxu0 0.0
    %794 = vmatprep.subr.mxu0 0.0
    %795 = vmatpush1.xpose.msra.mxu0 0.0
    %796 = vmatprep.subr.mxu0 0.0
    %797 = vmatpush1.xpose.msra.mxu0 0.0
    %798 = vmatprep.subr.mxu0 0.0
    %799 = vmatpush1.xpose.msra.mxu0 0.0
    %800 = vmatprep.subr.mxu0 0.0
    %801 = vmatpush1.xpose.msra.mxu0 0.0
    %802 = vmatprep.subr.mxu0 0.0
    %803 = vmatpush1.xpose.msra.mxu0 0.0
    %804 = vmatprep.subr.mxu0 0.0
    %805 = vmatpush1.xpose.msra.mxu0 0.0
    %806 = vmatprep.subr.mxu0 0.0
    %807 = vmatpush1.xpose.msra.mxu0 0.0
    %808 = vmatprep.subr.mxu0 0.0
    %809 = vmatpush1.xpose.msra.mxu0 0.0
    %810 = vmatprep.subr.mxu0 0.0
    %811 = vmatpush1.xpose.msra.mxu0 0.0
    %812 = vmatprep.subr.mxu0 0.0
    %813 = vmatpush1.xpose.msra.mxu0 0.0
    %814 = vmatprep.subr.mxu0 0.0
    %815 = vmatpush1.xpose.msra.mxu0 0.0
    %816 = vmatprep.subr.mxu0 0.0
    %817 = vmatpush1.xpose.msra.mxu0 0.0
    %818 = vmatprep.subr.mxu0 0.0
    %819 = vmatpush1.xpose.msra.mxu0 0.0
    %820 = vmatprep.subr.mxu0 0.0
    %821 = vmatpush1.xpose.msra.mxu0 %v788
    %822 = vmatprep.subr.mxu0 0.0
    %823 = vmatpush2.xpose.msra.mxu0 0.0
    %824 = vmatprep.subr.mxu0 0.0
    %825 = vmatpush2.xpose.msra.mxu0 0.0
    %826 = vmatprep.subr.mxu0 0.0
    %827 = vmatpush2.xpose.msra.mxu0 0.0
    %828 = vmatprep.subr.mxu0 0.0
    %829 = vmatpush2.xpose.msra.mxu0 0.0
    %830 = vmatprep.subr.mxu0 0.0
    %831 = vmatpush2.xpose.msra.mxu0 0.0
    %832 = vmatprep.subr.mxu0 0.0
    %833 = vmatpush2.xpose.msra.mxu0 0.0
    %834 = vmatprep.subr.mxu0 0.0
    %835 = vmatpush2.xpose.msra.mxu0 0.0
    %836 = vmatprep.subr.mxu0 0.0
    %837 = vmatpush2.xpose.msra.mxu0 0.0
    %838 = vmatprep.subr.mxu0 0.0
    %839 = vmatpush2.xpose.msra.mxu0 0.0
    %840 = vmatprep.subr.mxu0 0.0
    %841 = vmatpush2.xpose.msra.mxu0 0.0
    %842 = vmatprep.subr.mxu0 0.0
    %843 = vmatpush2.xpose.msra.mxu0 0.0
    %844 = vmatprep.subr.mxu0 0.0
    %845 = vmatpush2.xpose.msra.mxu0 0.0
    %846 = vmatprep.subr.mxu0 0.0
    %847 = vmatpush2.xpose.msra.mxu0 0.0
    %848 = vmatprep.subr.mxu0 0.0
    %849 = vmatpush2.xpose.msra.mxu0 0.0
    %850 = vmatprep.subr.mxu0 0.0
    %851 = vmatpush2.xpose.msra.mxu0 0.0
    %852 = vmatprep.subr.mxu0 0.0
    %853 = vmatpush2.xpose.msra.mxu0 0.0
    %854 = vmatprep.mubr.f32.mxu0 0.0
    %855 = vmatmul.mubr.f32.gmra.mxu0 %v786
    %v856 = vpop.f32.mrf.mxu0
    %v857 = vadd.f32 0.0, %v856
    %v858 = vpop.f32.mrf.mxu0
    %859 = vdwg.mxu0
    %860 = vrot.lane.b32.xlu0 %v287, 112
    %v861 = vpop.permute.xlu0 %860
    %862 = vrot.lane.b32.xlu0 %v193, 112
    %v863 = vpop.permute.xlu0 %862
    %v864 = vsel %vm452, %v861, 0
    %v866 = vsel %vm452, %v863, 0
    %868 = vmatprep.subr.mxu0 0.0
    %869 = vmatpush1.xpose.msra.mxu0 0.0
    %870 = vmatprep.subr.mxu0 0.0
    %871 = vmatpush1.xpose.msra.mxu0 0.0
    %872 = vmatprep.subr.mxu0 0.0
    %873 = vmatpush1.xpose.msra.mxu0 0.0
    %874 = vmatprep.subr.mxu0 0.0
    %875 = vmatpush1.xpose.msra.mxu0 0.0
    %876 = vmatprep.subr.mxu0 0.0
    %877 = vmatpush1.xpose.msra.mxu0 0.0
    %878 = vmatprep.subr.mxu0 0.0
    %879 = vmatpush1.xpose.msra.mxu0 0.0
    %880 = vmatprep.subr.mxu0 0.0
    %881 = vmatpush1.xpose.msra.mxu0 0.0
    %882 = vmatprep.subr.mxu0 0.0
    %883 = vmatpush1.xpose.msra.mxu0 0.0
    %884 = vmatprep.subr.mxu0 0.0
    %885 = vmatpush1.xpose.msra.mxu0 0.0
    %886 = vmatprep.subr.mxu0 0.0
    %887 = vmatpush1.xpose.msra.mxu0 0.0
    %888 = vmatprep.subr.mxu0 0.0
    %889 = vmatpush1.xpose.msra.mxu0 0.0
    %890 = vmatprep.subr.mxu0 0.0
    %891 = vmatpush1.xpose.msra.mxu0 0.0
    %892 = vmatprep.subr.mxu0 0.0
    %893 = vmatpush1.xpose.msra.mxu0 0.0
    %894 = vmatprep.subr.mxu0 0.0
    %895 = vmatpush1.xpose.msra.mxu0 0.0
    %896 = vmatprep.subr.mxu0 0.0
    %897 = vmatpush1.xpose.msra.mxu0 0.0
    %898 = vmatprep.subr.mxu0 0.0
    %899 = vmatpush1.xpose.msra.mxu0 %v866
    %900 = vmatprep.subr.mxu0 0.0
    %901 = vmatpush2.xpose.msra.mxu0 0.0
    %902 = vmatprep.subr.mxu0 0.0
    %903 = vmatpush2.xpose.msra.mxu0 0.0
    %904 = vmatprep.subr.mxu0 0.0
    %905 = vmatpush2.xpose.msra.mxu0 0.0
    %906 = vmatprep.subr.mxu0 0.0
    %907 = vmatpush2.xpose.msra.mxu0 0.0
    %908 = vmatprep.subr.mxu0 0.0
    %909 = vmatpush2.xpose.msra.mxu0 0.0
    %910 = vmatprep.subr.mxu0 0.0
    %911 = vmatpush2.xpose.msra.mxu0 0.0
    %912 = vmatprep.subr.mxu0 0.0
    %913 = vmatpush2.xpose.msra.mxu0 0.0
    %914 = vmatprep.subr.mxu0 0.0
    %915 = vmatpush2.xpose.msra.mxu0 0.0
    %916 = vmatprep.subr.mxu0 0.0
    %917 = vmatpush2.xpose.msra.mxu0 0.0
    %918 = vmatprep.subr.mxu0 0.0
    %919 = vmatpush2.xpose.msra.mxu0 0.0
    %920 = vmatprep.subr.mxu0 0.0
    %921 = vmatpush2.xpose.msra.mxu0 0.0
    %922 = vmatprep.subr.mxu0 0.0
    %923 = vmatpush2.xpose.msra.mxu0 0.0
    %924 = vmatprep.subr.mxu0 0.0
    %925 = vmatpush2.xpose.msra.mxu0 0.0
    %926 = vmatprep.subr.mxu0 0.0
    %927 = vmatpush2.xpose.msra.mxu0 0.0
    %928 = vmatprep.subr.mxu0 0.0
    %929 = vmatpush2.xpose.msra.mxu0 0.0
    %930 = vmatprep.subr.mxu0 0.0
    %931 = vmatpush2.xpose.msra.mxu0 0.0
    %932 = vmatprep.mubr.f32.mxu0 0.0
    %933 = vmatmul.mubr.f32.gmra.mxu0 %v864
    %v934 = vpop.f32.mrf.mxu0
    %v935 = vadd.f32 0.0, %v934
    %v936 = vpop.f32.mrf.mxu0
    %937 = vdwg.mxu0
    %v938 = vmul.f32 %v857, 0.25
    %v939 = vmul.f32 %v935, 0.25
    %v940 = vsel %vm607, %v938, -inf
    %941 = vmax.xlane.f32.xlu0 %v940
    %v942 = vpop.xlane.xlu0 %941
    %v943 = vsel %vm607, %v939, -inf
    %944 = vmax.xlane.f32.xlu0 %v943
    %v945 = vpop.xlane.xlu0 %944
    %v946 = vsub.f32 %v938, %v942
    %v947 = vsub.f32 %v939, %v945
    %v948 = vmul.f32 %v946, 1.442695
    %v949 = vpow.pop %v948
    %v950 = vmul.f32 %v947, 1.442695
    %v951 = vpow.pop %v950
    %v952 = vsel %vm607, %v949, 0.0
    %953 = vadd.xlane.f32.xlu0 %v952
    %v954 = vpop.xlane.xlu0 %953
    %v955 = vsel %vm607, %v951, 0.0
    %956 = vadd.xlane.f32.xlu0 %v955
    %v957 = vpop.xlane.xlu0 %956
    %v958 = vrcp.pop %v954
    %v959 = vrcp.pop %v957
    %v960 = vmul.f32 %v949, %v958
    %v961 = vmul.f32 %v951, %v959
    %962 = vrot.lane.b32.xlu0 %v187, 80
    %v963 = vpop.permute.xlu0 %962
    %v966 = vsel %vm607, %v960, 0
    %968 = vmatprep.subr.mxu0 0.0
    %969 = vmatpush1.msra.mxu0 0.0
    %970 = vmatprep.subr.mxu0 0.0
    %971 = vmatpush1.msra.mxu0 0.0
    %972 = vmatprep.subr.mxu0 0.0
    %973 = vmatpush1.msra.mxu0 0.0
    %974 = vmatprep.subr.mxu0 0.0
    %975 = vmatpush1.msra.mxu0 0.0
    %976 = vmatprep.subr.mxu0 0.0
    %977 = vmatpush1.msra.mxu0 0.0
    %978 = vmatprep.subr.mxu0 0.0
    %979 = vmatpush1.msra.mxu0 0.0
    %980 = vmatprep.subr.mxu0 0.0
    %981 = vmatpush1.msra.mxu0 0.0
    %982 = vmatprep.subr.mxu0 0.0
    %983 = vmatpush1.msra.mxu0 0.0
    %984 = vmatprep.subr.mxu0 0.0
    %985 = vmatpush1.msra.mxu0 0.0
    %986 = vmatprep.subr.mxu0 0.0
    %987 = vmatpush1.msra.mxu0 0.0
    %988 = vmatprep.subr.mxu0 0.0
    %989 = vmatpush1.msra.mxu0 0.0
    %990 = vmatprep.subr.mxu0 0.0
    %991 = vmatpush1.msra.mxu0 0.0
    %992 = vmatprep.subr.mxu0 0.0
    %993 = vmatpush1.msra.mxu0 0.0
    %994 = vmatprep.subr.mxu0 0.0
    %995 = vmatpush1.msra.mxu0 0.0
    %996 = vmatprep.subr.mxu0 0.0
    %997 = vmatpush1.msra.mxu0 0.0
    %998 = vmatprep.subr.mxu0 0.0
    %999 = vmatpush1.msra.mxu0 %v963
    %1000 = vmatprep.subr.mxu0 0.0
    %1001 = vmatpush2.msra.mxu0 0.0
    %1002 = vmatprep.subr.mxu0 0.0
    %1003 = vmatpush2.msra.mxu0 0.0
    %1004 = vmatprep.subr.mxu0 0.0
    %1005 = vmatpush2.msra.mxu0 0.0
    %1006 = vmatprep.subr.mxu0 0.0
    %1007 = vmatpush2.msra.mxu0 0.0
    %1008 = vmatprep.subr.mxu0 0.0
    %1009 = vmatpush2.msra.mxu0 0.0
    %1010 = vmatprep.subr.mxu0 0.0
    %1011 = vmatpush2.msra.mxu0 0.0
    %1012 = vmatprep.subr.mxu0 0.0
    %1013 = vmatpush2.msra.mxu0 0.0
    %1014 = vmatprep.subr.mxu0 0.0
    %1015 = vmatpush2.msra.mxu0 0.0
    %1016 = vmatprep.subr.mxu0 0.0
    %1017 = vmatpush2.msra.mxu0 0.0
    %1018 = vmatprep.subr.mxu0 0.0
    %1019 = vmatpush2.msra.mxu0 0.0
    %1020 = vmatprep.subr.mxu0 0.0
    %1021 = vmatpush2.msra.mxu0 0.0
    %1022 = vmatprep.subr.mxu0 0.0
    %1023 = vmatpush2.msra.mxu0 0.0
    %1024 = vmatprep.subr.mxu0 0.0
    %1025 = vmatpush2.msra.mxu0 0.0
    %1026 = vmatprep.subr.mxu0 0.0
    %1027 = vmatpush2.msra.mxu0 0.0
    %1028 = vmatprep.subr.mxu0 0.0
    %1029 = vmatpush2.msra.mxu0 0.0
    %1030 = vmatprep.subr.mxu0 0.0
    %1031 = vmatpush2.msra.mxu0 0.0
    %1032 = vmatprep.mubr.f32.mxu0 0.0
    %1033 = vmatmul.mubr.f32.gmra.mxu0 %v966
    %v1034 = vpop.f32.mrf.mxu0
    %v1035 = vadd.f32 0.0, %v1034
    %v1036 = vpop.f32.mrf.mxu0
    %1037 = vdwg.mxu0
    %1038 = vrot.lane.b32.xlu0 %v193, 80
    %v1039 = vpop.permute.xlu0 %1038
    %v1042 = vsel %vm607, %v961, 0
    %1044 = vmatprep.subr.mxu0 0.0
    %1045 = vmatpush1.msra.mxu0 0.0
    %1046 = vmatprep.subr.mxu0 0.0
    %1047 = vmatpush1.msra.mxu0 0.0
    %1048 = vmatprep.subr.mxu0 0.0
    %1049 = vmatpush1.msra.mxu0 0.0
    %1050 = vmatprep.subr.mxu0 0.0
    %1051 = vmatpush1.msra.mxu0 0.0
    %1052 = vmatprep.subr.mxu0 0.0
    %1053 = vmatpush1.msra.mxu0 0.0
    %1054 = vmatprep.subr.mxu0 0.0
    %1055 = vmatpush1.msra.mxu0 0.0
    %1056 = vmatprep.subr.mxu0 0.0
    %1057 = vmatpush1.msra.mxu0 0.0
    %1058 = vmatprep.subr.mxu0 0.0
    %1059 = vmatpush1.msra.mxu0 0.0
    %1060 = vmatprep.subr.mxu0 0.0
    %1061 = vmatpush1.msra.mxu0 0.0
    %1062 = vmatprep.subr.mxu0 0.0
    %1063 = vmatpush1.msra.mxu0 0.0
    %1064 = vmatprep.subr.mxu0 0.0
    %1065 = vmatpush1.msra.mxu0 0.0
    %1066 = vmatprep.subr.mxu0 0.0
    %1067 = vmatpush1.msra.mxu0 0.0
    %1068 = vmatprep.subr.mxu0 0.0
    %1069 = vmatpush1.msra.mxu0 0.0
    %1070 = vmatprep.subr.mxu0 0.0
    %1071 = vmatpush1.msra.mxu0 0.0
    %1072 = vmatprep.subr.mxu0 0.0
    %1073 = vmatpush1.msra.mxu0 0.0
    %1074 = vmatprep.subr.mxu0 0.0
    %1075 = vmatpush1.msra.mxu0 %v1039
    %1076 = vmatprep.subr.mxu0 0.0
    %1077 = vmatpush2.msra.mxu0 0.0
    %1078 = vmatprep.subr.mxu0 0.0
    %1079 = vmatpush2.msra.mxu0 0.0
    %1080 = vmatprep.subr.mxu0 0.0
    %1081 = vmatpush2.msra.mxu0 0.0
    %1082 = vmatprep.subr.mxu0 0.0
    %1083 = vmatpush2.msra.mxu0 0.0
    %1084 = vmatprep.subr.mxu0 0.0
    %1085 = vmatpush2.msra.mxu0 0.0
    %1086 = vmatprep.subr.mxu0 0.0
    %1087 = vmatpush2.msra.mxu0 0.0
    %1088 = vmatprep.subr.mxu0 0.0
    %1089 = vmatpush2.msra.mxu0 0.0
    %1090 = vmatprep.subr.mxu0 0.0
    %1091 = vmatpush2.msra.mxu0 0.0
    %1092 = vmatprep.subr.mxu0 0.0
    %1093 = vmatpush2.msra.mxu0 0.0
    %1094 = vmatprep.subr.mxu0 0.0
    %1095 = vmatpush2.msra.mxu0 0.0
    %1096 = vmatprep.subr.mxu0 0.0
    %1097 = vmatpush2.msra.mxu0 0.0
    %1098 = vmatprep.subr.mxu0 0.0
    %1099 = vmatpush2.msra.mxu0 0.0
    %1100 = vmatprep.subr.mxu0 0.0
    %1101 = vmatpush2.msra.mxu0 0.0
    %1102 = vmatprep.subr.mxu0 0.0
    %1103 = vmatpush2.msra.mxu0 0.0
    %1104 = vmatprep.subr.mxu0 0.0
    %1105 = vmatpush2.msra.mxu0 0.0
    %1106 = vmatprep.subr.mxu0 0.0
    %1107 = vmatpush2.msra.mxu0 0.0
    %1108 = vmatprep.mubr.f32.mxu0 0.0
    %1109 = vmatmul.mubr.f32.gmra.mxu0 %v1042
    %v1110 = vpop.f32.mrf.mxu0
    %v1111 = vadd.f32 0.0, %v1110
    %v1112 = vpop.f32.mrf.mxu0
    %1113 = vdwg.mxu0
    %1114 = vrot.lane.b32.xlu0 %v187, 64
    %v1115 = vpop.permute.xlu0 %1114
    %v1117 = vsel %vm452, %v363, 0
    %v1119 = vsel %vm452, %v1115, 0
    %1121 = vmatprep.subr.mxu0 0.0
    %1122 = vmatpush1.xpose.msra.mxu0 0.0
    %1123 = vmatprep.subr.mxu0 0.0
    %1124 = vmatpush1.xpose.msra.mxu0 0.0
    %1125 = vmatprep.subr.mxu0 0.0
    %1126 = vmatpush1.xpose.msra.mxu0 0.0
    %1127 = vmatprep.subr.mxu0 0.0
    %1128 = vmatpush1.xpose.msra.mxu0 0.0
    %1129 = vmatprep.subr.mxu0 0.0
    %1130 = vmatpush1.xpose.msra.mxu0 0.0
    %1131 = vmatprep.subr.mxu0 0.0
    %1132 = vmatpush1.xpose.msra.mxu0 0.0
    %1133 = vmatprep.subr.mxu0 0.0
    %1134 = vmatpush1.xpose.msra.mxu0 0.0
    %1135 = vmatprep.subr.mxu0 0.0
    %1136 = vmatpush1.xpose.msra.mxu0 0.0
    %1137 = vmatprep.subr.mxu0 0.0
    %1138 = vmatpush1.xpose.msra.mxu0 0.0
    %1139 = vmatprep.subr.mxu0 0.0
    %1140 = vmatpush1.xpose.msra.mxu0 0.0
    %1141 = vmatprep.subr.mxu0 0.0
    %1142 = vmatpush1.xpose.msra.mxu0 0.0
    %1143 = vmatprep.subr.mxu0 0.0
    %1144 = vmatpush1.xpose.msra.mxu0 0.0
    %1145 = vmatprep.subr.mxu0 0.0
    %1146 = vmatpush1.xpose.msra.mxu0 0.0
    %1147 = vmatprep.subr.mxu0 0.0
    %1148 = vmatpush1.xpose.msra.mxu0 0.0
    %1149 = vmatprep.subr.mxu0 0.0
    %1150 = vmatpush1.xpose.msra.mxu0 0.0
    %1151 = vmatprep.subr.mxu0 0.0
    %1152 = vmatpush1.xpose.msra.mxu0 %v1119
    %1153 = vmatprep.subr.mxu0 0.0
    %1154 = vmatpush2.xpose.msra.mxu0 0.0
    %1155 = vmatprep.subr.mxu0 0.0
    %1156 = vmatpush2.xpose.msra.mxu0 0.0
    %1157 = vmatprep.subr.mxu0 0.0
    %1158 = vmatpush2.xpose.msra.mxu0 0.0
    %1159 = vmatprep.subr.mxu0 0.0
    %1160 = vmatpush2.xpose.msra.mxu0 0.0
    %1161 = vmatprep.subr.mxu0 0.0
    %1162 = vmatpush2.xpose.msra.mxu0 0.0
    %1163 = vmatprep.subr.mxu0 0.0
    %1164 = vmatpush2.xpose.msra.mxu0 0.0
    %1165 = vmatprep.subr.mxu0 0.0
    %1166 = vmatpush2.xpose.msra.mxu0 0.0
    %1167 = vmatprep.subr.mxu0 0.0
    %1168 = vmatpush2.xpose.msra.mxu0 0.0
    %1169 = vmatprep.subr.mxu0 0.0
    %1170 = vmatpush2.xpose.msra.mxu0 0.0
    %1171 = vmatprep.subr.mxu0 0.0
    %1172 = vmatpush2.xpose.msra.mxu0 0.0
    %1173 = vmatprep.subr.mxu0 0.0
    %1174 = vmatpush2.xpose.msra.mxu0 0.0
    %1175 = vmatprep.subr.mxu0 0.0
    %1176 = vmatpush2.xpose.msra.mxu0 0.0
    %1177 = vmatprep.subr.mxu0 0.0
    %1178 = vmatpush2.xpose.msra.mxu0 0.0
    %1179 = vmatprep.subr.mxu0 0.0
    %1180 = vmatpush2.xpose.msra.mxu0 0.0
    %1181 = vmatprep.subr.mxu0 0.0
    %1182 = vmatpush2.xpose.msra.mxu0 0.0
    %1183 = vmatprep.subr.mxu0 0.0
    %1184 = vmatpush2.xpose.msra.mxu0 0.0
    %1185 = vmatprep.mubr.f32.mxu0 0.0
    %1186 = vmatmul.mubr.f32.gmra.mxu0 %v1117
    %v1187 = vpop.f32.mrf.mxu0
    %v1188 = vadd.f32 0.0, %v1187
    %v1189 = vpop.f32.mrf.mxu0
    %1190 = vdwg.mxu0
    %1191 = vrot.lane.b32.xlu0 %v193, 64
    %v1192 = vpop.permute.xlu0 %1191
    %v1194 = vsel %vm452, %v368, 0
    %v1196 = vsel %vm452, %v1192, 0
    %1198 = vmatprep.subr.mxu0 0.0
    %1199 = vmatpush1.xpose.msra.mxu0 0.0
    %1200 = vmatprep.subr.mxu0 0.0
    %1201 = vmatpush1.xpose.msra.mxu0 0.0
    %1202 = vmatprep.subr.mxu0 0.0
    %1203 = vmatpush1.xpose.msra.mxu0 0.0
    %1204 = vmatprep.subr.mxu0 0.0
    %1205 = vmatpush1.xpose.msra.mxu0 0.0
    %1206 = vmatprep.subr.mxu0 0.0
    %1207 = vmatpush1.xpose.msra.mxu0 0.0
    %1208 = vmatprep.subr.mxu0 0.0
    %1209 = vmatpush1.xpose.msra.mxu0 0.0
    %1210 = vmatprep.subr.mxu0 0.0
    %1211 = vmatpush1.xpose.msra.mxu0 0.0
    %1212 = vmatprep.subr.mxu0 0.0
    %1213 = vmatpush1.xpose.msra.mxu0 0.0
    %1214 = vmatprep.subr.mxu0 0.0
    %1215 = vmatpush1.xpose.msra.mxu0 0.0
    %1216 = vmatprep.subr.mxu0 0.0
    %1217 = vmatpush1.xpose.msra.mxu0 0.0
    %1218 = vmatprep.subr.mxu0 0.0
    %1219 = vmatpush1.xpose.msra.mxu0 0.0
    %1220 = vmatprep.subr.mxu0 0.0
    %1221 = vmatpush1.xpose.msra.mxu0 0.0
    %1222 = vmatprep.subr.mxu0 0.0
    %1223 = vmatpush1.xpose.msra.mxu0 0.0
    %1224 = vmatprep.subr.mxu0 0.0
    %1225 = vmatpush1.xpose.msra.mxu0 0.0
    %1226 = vmatprep.subr.mxu0 0.0
    %1227 = vmatpush1.xpose.msra.mxu0 0.0
    %1228 = vmatprep.subr.mxu0 0.0
    %1229 = vmatpush1.xpose.msra.mxu0 %v1196
    %1230 = vmatprep.subr.mxu0 0.0
    %1231 = vmatpush2.xpose.msra.mxu0 0.0
    %1232 = vmatprep.subr.mxu0 0.0
    %1233 = vmatpush2.xpose.msra.mxu0 0.0
    %1234 = vmatprep.subr.mxu0 0.0
    %1235 = vmatpush2.xpose.msra.mxu0 0.0
    %1236 = vmatprep.subr.mxu0 0.0
    %1237 = vmatpush2.xpose.msra.mxu0 0.0
    %1238 = vmatprep.subr.mxu0 0.0
    %1239 = vmatpush2.xpose.msra.mxu0 0.0
    %1240 = vmatprep.subr.mxu0 0.0
    %1241 = vmatpush2.xpose.msra.mxu0 0.0
    %1242 = vmatprep.subr.mxu0 0.0
    %1243 = vmatpush2.xpose.msra.mxu0 0.0
    %1244 = vmatprep.subr.mxu0 0.0
    %1245 = vmatpush2.xpose.msra.mxu0 0.0
    %1246 = vmatprep.subr.mxu0 0.0
    %1247 = vmatpush2.xpose.msra.mxu0 0.0
    %1248 = vmatprep.subr.mxu0 0.0
    %1249 = vmatpush2.xpose.msra.mxu0 0.0
    %1250 = vmatprep.subr.mxu0 0.0
    %1251 = vmatpush2.xpose.msra.mxu0 0.0
    %1252 = vmatprep.subr.mxu0 0.0
    %1253 = vmatpush2.xpose.msra.mxu0 0.0
    %1254 = vmatprep.subr.mxu0 0.0
    %1255 = vmatpush2.xpose.msra.mxu0 0.0
    %1256 = vmatprep.subr.mxu0 0.0
    %1257 = vmatpush2.xpose.msra.mxu0 0.0
    %1258 = vmatprep.subr.mxu0 0.0
    %1259 = vmatpush2.xpose.msra.mxu0 0.0
    %1260 = vmatprep.subr.mxu0 0.0
    %1261 = vmatpush2.xpose.msra.mxu0 0.0
    %1262 = vmatprep.mubr.f32.mxu0 0.0
    %1263 = vmatmul.mubr.f32.gmra.mxu0 %v1194
    %v1264 = vpop.f32.mrf.mxu0
    %v1265 = vadd.f32 0.0, %v1264
    %v1266 = vpop.f32.mrf.mxu0
    %1267 = vdwg.mxu0
    %v1268 = vmul.f32 %v1188, 0.25
    %v1269 = vmul.f32 %v1265, 0.25
    %v1270 = vsel %vm607, %v1268, -inf
    %1271 = vmax.xlane.f32.xlu0 %v1270
    %v1272 = vpop.xlane.xlu0 %1271
    %v1273 = vsel %vm607, %v1269, -inf
    %1274 = vmax.xlane.f32.xlu0 %v1273
    %v1275 = vpop.xlane.xlu0 %1274
    %v1276 = vsub.f32 %v1268, %v1272
    %v1277 = vsub.f32 %v1269, %v1275
    %v1278 = vmul.f32 %v1276, 1.442695
    %v1279 = vpow.pop %v1278
    %v1280 = vmul.f32 %v1277, 1.442695
    %v1281 = vpow.pop %v1280
    %v1282 = vsel %vm607, %v1279, 0.0
    %1283 = vadd.xlane.f32.xlu0 %v1282
    %v1284 = vpop.xlane.xlu0 %1283
    %v1285 = vsel %vm607, %v1281, 0.0
    %1286 = vadd.xlane.f32.xlu0 %v1285
    %v1287 = vpop.xlane.xlu0 %1286
    %v1288 = vrcp.pop %v1284
    %v1289 = vrcp.pop %v1287
    %v1290 = vmul.f32 %v1279, %v1288
    %v1291 = vmul.f32 %v1281, %v1289
    %1292 = vrot.lane.b32.xlu0 %v187, 32
    %v1293 = vpop.permute.xlu0 %1292
    %v1296 = vsel %vm607, %v1290, 0
    %1298 = vmatprep.subr.mxu0 0.0
    %1299 = vmatpush1.msra.mxu0 0.0
    %1300 = vmatprep.subr.mxu0 0.0
    %1301 = vmatpush1.msra.mxu0 0.0
    %1302 = vmatprep.subr.mxu0 0.0
    %1303 = vmatpush1.msra.mxu0 0.0
    %1304 = vmatprep.subr.mxu0 0.0
    %1305 = vmatpush1.msra.mxu0 0.0
    %1306 = vmatprep.subr.mxu0 0.0
    %1307 = vmatpush1.msra.mxu0 0.0
    %1308 = vmatprep.subr.mxu0 0.0
    %1309 = vmatpush1.msra.mxu0 0.0
    %1310 = vmatprep.subr.mxu0 0.0
    %1311 = vmatpush1.msra.mxu0 0.0
    %1312 = vmatprep.subr.mxu0 0.0
    %1313 = vmatpush1.msra.mxu0 0.0
    %1314 = vmatprep.subr.mxu0 0.0
    %1315 = vmatpush1.msra.mxu0 0.0
    %1316 = vmatprep.subr.mxu0 0.0
    %1317 = vmatpush1.msra.mxu0 0.0
    %1318 = vmatprep.subr.mxu0 0.0
    %1319 = vmatpush1.msra.mxu0 0.0
    %1320 = vmatprep.subr.mxu0 0.0
    %1321 = vmatpush1.msra.mxu0 0.0
    %1322 = vmatprep.subr.mxu0 0.0
    %1323 = vmatpush1.msra.mxu0 0.0
    %1324 = vmatprep.subr.mxu0 0.0
    %1325 = vmatpush1.msra.mxu0 0.0
    %1326 = vmatprep.subr.mxu0 0.0
    %1327 = vmatpush1.msra.mxu0 0.0
    %1328 = vmatprep.subr.mxu0 0.0
    %1329 = vmatpush1.msra.mxu0 %v1293
    %1330 = vmatprep.subr.mxu0 0.0
    %1331 = vmatpush2.msra.mxu0 0.0
    %1332 = vmatprep.subr.mxu0 0.0
    %1333 = vmatpush2.msra.mxu0 0.0
    %1334 = vmatprep.subr.mxu0 0.0
    %1335 = vmatpush2.msra.mxu0 0.0
    %1336 = vmatprep.subr.mxu0 0.0
    %1337 = vmatpush2.msra.mxu0 0.0
    %1338 = vmatprep.subr.mxu0 0.0
    %1339 = vmatpush2.msra.mxu0 0.0
    %1340 = vmatprep.subr.mxu0 0.0
    %1341 = vmatpush2.msra.mxu0 0.0
    %1342 = vmatprep.subr.mxu0 0.0
    %1343 = vmatpush2.msra.mxu0 0.0
    %1344 = vmatprep.subr.mxu0 0.0
    %1345 = vmatpush2.msra.mxu0 0.0
    %1346 = vmatprep.subr.mxu0 0.0
    %1347 = vmatpush2.msra.mxu0 0.0
    %1348 = vmatprep.subr.mxu0 0.0
    %1349 = vmatpush2.msra.mxu0 0.0
    %1350 = vmatprep.subr.mxu0 0.0
    %1351 = vmatpush2.msra.mxu0 0.0
    %1352 = vmatprep.subr.mxu0 0.0
    %1353 = vmatpush2.msra.mxu0 0.0
    %1354 = vmatprep.subr.mxu0 0.0
    %1355 = vmatpush2.msra.mxu0 0.0
    %1356 = vmatprep.subr.mxu0 0.0
    %1357 = vmatpush2.msra.mxu0 0.0
    %1358 = vmatprep.subr.mxu0 0.0
    %1359 = vmatpush2.msra.mxu0 0.0
    %1360 = vmatprep.subr.mxu0 0.0
    %1361 = vmatpush2.msra.mxu0 0.0
    %1362 = vmatprep.mubr.f32.mxu0 0.0
    %1363 = vmatmul.mubr.f32.gmra.mxu0 %v1296
    %v1364 = vpop.f32.mrf.mxu0
    %v1365 = vadd.f32 0.0, %v1364
    %v1366 = vpop.f32.mrf.mxu0
    %1367 = vdwg.mxu0
    %1368 = vrot.lane.b32.xlu0 %v193, 32
    %v1369 = vpop.permute.xlu0 %1368
    %v1372 = vsel %vm607, %v1291, 0
    %1374 = vmatprep.subr.mxu0 0.0
    %1375 = vmatpush1.msra.mxu0 0.0
    %1376 = vmatprep.subr.mxu0 0.0
    %1377 = vmatpush1.msra.mxu0 0.0
    %1378 = vmatprep.subr.mxu0 0.0
    %1379 = vmatpush1.msra.mxu0 0.0
    %1380 = vmatprep.subr.mxu0 0.0
    %1381 = vmatpush1.msra.mxu0 0.0
    %1382 = vmatprep.subr.mxu0 0.0
    %1383 = vmatpush1.msra.mxu0 0.0
    %1384 = vmatprep.subr.mxu0 0.0
    %1385 = vmatpush1.msra.mxu0 0.0
    %1386 = vmatprep.subr.mxu0 0.0
    %1387 = vmatpush1.msra.mxu0 0.0
    %1388 = vmatprep.subr.mxu0 0.0
    %1389 = vmatpush1.msra.mxu0 0.0
    %1390 = vmatprep.subr.mxu0 0.0
    %1391 = vmatpush1.msra.mxu0 0.0
    %1392 = vmatprep.subr.mxu0 0.0
    %1393 = vmatpush1.msra.mxu0 0.0
    %1394 = vmatprep.subr.mxu0 0.0
    %1395 = vmatpush1.msra.mxu0 0.0
    %1396 = vmatprep.subr.mxu0 0.0
    %1397 = vmatpush1.msra.mxu0 0.0
    %1398 = vmatprep.subr.mxu0 0.0
    %1399 = vmatpush1.msra.mxu0 0.0
    %1400 = vmatprep.subr.mxu0 0.0
    %1401 = vmatpush1.msra.mxu0 0.0
    %1402 = vmatprep.subr.mxu0 0.0
    %1403 = vmatpush1.msra.mxu0 0.0
    %1404 = vmatprep.subr.mxu0 0.0
    %1405 = vmatpush1.msra.mxu0 %v1369
    %1406 = vmatprep.subr.mxu0 0.0
    %1407 = vmatpush2.msra.mxu0 0.0
    %1408 = vmatprep.subr.mxu0 0.0
    %1409 = vmatpush2.msra.mxu0 0.0
    %1410 = vmatprep.subr.mxu0 0.0
    %1411 = vmatpush2.msra.mxu0 0.0
    %1412 = vmatprep.subr.mxu0 0.0
    %1413 = vmatpush2.msra.mxu0 0.0
    %1414 = vmatprep.subr.mxu0 0.0
    %1415 = vmatpush2.msra.mxu0 0.0
    %1416 = vmatprep.subr.mxu0 0.0
    %1417 = vmatpush2.msra.mxu0 0.0
    %1418 = vmatprep.subr.mxu0 0.0
    %1419 = vmatpush2.msra.mxu0 0.0
    %1420 = vmatprep.subr.mxu0 0.0
    %1421 = vmatpush2.msra.mxu0 0.0
    %1422 = vmatprep.subr.mxu0 0.0
    %1423 = vmatpush2.msra.mxu0 0.0
    %1424 = vmatprep.subr.mxu0 0.0
    %1425 = vmatpush2.msra.mxu0 0.0
    %1426 = vmatprep.subr.mxu0 0.0
    %1427 = vmatpush2.msra.mxu0 0.0
    %1428 = vmatprep.subr.mxu0 0.0
    %1429 = vmatpush2.msra.mxu0 0.0
    %1430 = vmatprep.subr.mxu0 0.0
    %1431 = vmatpush2.msra.mxu0 0.0
    %1432 = vmatprep.subr.mxu0 0.0
    %1433 = vmatpush2.msra.mxu0 0.0
    %1434 = vmatprep.subr.mxu0 0.0
    %1435 = vmatpush2.msra.mxu0 0.0
    %1436 = vmatprep.subr.mxu0 0.0
    %1437 = vmatpush2.msra.mxu0 0.0
    %1438 = vmatprep.mubr.f32.mxu0 0.0
    %1439 = vmatmul.mubr.f32.gmra.mxu0 %v1372
    %v1440 = vpop.f32.mrf.mxu0
    %v1441 = vadd.f32 0.0, %v1440
    %v1442 = vpop.f32.mrf.mxu0
    %1443 = vdwg.mxu0
    %1444 = vrot.lane.b32.xlu0 %v363, 112
    %v1445 = vpop.permute.xlu0 %1444
    %1446 = vrot.lane.b32.xlu0 %v187, 48
    %v1447 = vpop.permute.xlu0 %1446
    %v1448 = vsel %vm452, %v1445, 0
    %v1450 = vsel %vm452, %v1447, 0
    %1452 = vmatprep.subr.mxu0 0.0
    %1453 = vmatpush1.xpose.msra.mxu0 0.0
    %1454 = vmatprep.subr.mxu0 0.0
    %1455 = vmatpush1.xpose.msra.mxu0 0.0
    %1456 = vmatprep.subr.mxu0 0.0
    %1457 = vmatpush1.xpose.msra.mxu0 0.0
    %1458 = vmatprep.subr.mxu0 0.0
    %1459 = vmatpush1.xpose.msra.mxu0 0.0
    %1460 = vmatprep.subr.mxu0 0.0
    %1461 = vmatpush1.xpose.msra.mxu0 0.0
    %1462 = vmatprep.subr.mxu0 0.0
    %1463 = vmatpush1.xpose.msra.mxu0 0.0
    %1464 = vmatprep.subr.mxu0 0.0
    %1465 = vmatpush1.xpose.msra.mxu0 0.0
    %1466 = vmatprep.subr.mxu0 0.0
    %1467 = vmatpush1.xpose.msra.mxu0 0.0
    %1468 = vmatprep.subr.mxu0 0.0
    %1469 = vmatpush1.xpose.msra.mxu0 0.0
    %1470 = vmatprep.subr.mxu0 0.0
    %1471 = vmatpush1.xpose.msra.mxu0 0.0
    %1472 = vmatprep.subr.mxu0 0.0
    %1473 = vmatpush1.xpose.msra.mxu0 0.0
    %1474 = vmatprep.subr.mxu0 0.0
    %1475 = vmatpush1.xpose.msra.mxu0 0.0
    %1476 = vmatprep.subr.mxu0 0.0
    %1477 = vmatpush1.xpose.msra.mxu0 0.0
    %1478 = vmatprep.subr.mxu0 0.0
    %1479 = vmatpush1.xpose.msra.mxu0 0.0
    %1480 = vmatprep.subr.mxu0 0.0
    %1481 = vmatpush1.xpose.msra.mxu0 0.0
    %1482 = vmatprep.subr.mxu0 0.0
    %1483 = vmatpush1.xpose.msra.mxu0 %v1450
    %1484 = vmatprep.subr.mxu0 0.0
    %1485 = vmatpush2.xpose.msra.mxu0 0.0
    %1486 = vmatprep.subr.mxu0 0.0
    %1487 = vmatpush2.xpose.msra.mxu0 0.0
    %1488 = vmatprep.subr.mxu0 0.0
    %1489 = vmatpush2.xpose.msra.mxu0 0.0
    %1490 = vmatprep.subr.mxu0 0.0
    %1491 = vmatpush2.xpose.msra.mxu0 0.0
    %1492 = vmatprep.subr.mxu0 0.0
    %1493 = vmatpush2.xpose.msra.mxu0 0.0
    %1494 = vmatprep.subr.mxu0 0.0
    %1495 = vmatpush2.xpose.msra.mxu0 0.0
    %1496 = vmatprep.subr.mxu0 0.0
    %1497 = vmatpush2.xpose.msra.mxu0 0.0
    %1498 = vmatprep.subr.mxu0 0.0
    %1499 = vmatpush2.xpose.msra.mxu0 0.0
    %1500 = vmatprep.subr.mxu0 0.0
    %1501 = vmatpush2.xpose.msra.mxu0 0.0
    %1502 = vmatprep.subr.mxu0 0.0
    %1503 = vmatpush2.xpose.msra.mxu0 0.0
    %1504 = vmatprep.subr.mxu0 0.0
    %1505 = vmatpush2.xpose.msra.mxu0 0.0
    %1506 = vmatprep.subr.mxu0 0.0
    %1507 = vmatpush2.xpose.msra.mxu0 0.0
    %1508 = vmatprep.subr.mxu0 0.0
    %1509 = vmatpush2.xpose.msra.mxu0 0.0
    %1510 = vmatprep.subr.mxu0 0.0
    %1511 = vmatpush2.xpose.msra.mxu0 0.0
    %1512 = vmatprep.subr.mxu0 0.0
    %1513 = vmatpush2.xpose.msra.mxu0 0.0
    %1514 = vmatprep.subr.mxu0 0.0
    %1515 = vmatpush2.xpose.msra.mxu0 0.0
    %1516 = vmatprep.mubr.f32.mxu0 0.0
    %1517 = vmatmul.mubr.f32.gmra.mxu0 %v1448
    %v1518 = vpop.f32.mrf.mxu0
    %v1519 = vadd.f32 0.0, %v1518
    %v1520 = vpop.f32.mrf.mxu0
    %1521 = vdwg.mxu0
    %1522 = vrot.lane.b32.xlu0 %v368, 112
    %v1523 = vpop.permute.xlu0 %1522
    %1524 = vrot.lane.b32.xlu0 %v193, 48
    %v1525 = vpop.permute.xlu0 %1524
    %v1526 = vsel %vm452, %v1523, 0
    %v1528 = vsel %vm452, %v1525, 0
    %1530 = vmatprep.subr.mxu0 0.0
    %1531 = vmatpush1.xpose.msra.mxu0 0.0
    %1532 = vmatprep.subr.mxu0 0.0
    %1533 = vmatpush1.xpose.msra.mxu0 0.0
    %1534 = vmatprep.subr.mxu0 0.0
    %1535 = vmatpush1.xpose.msra.mxu0 0.0
    %1536 = vmatprep.subr.mxu0 0.0
    %1537 = vmatpush1.xpose.msra.mxu0 0.0
    %1538 = vmatprep.subr.mxu0 0.0
    %1539 = vmatpush1.xpose.msra.mxu0 0.0
    %1540 = vmatprep.subr.mxu0 0.0
    %1541 = vmatpush1.xpose.msra.mxu0 0.0
    %1542 = vmatprep.subr.mxu0 0.0
    %1543 = vmatpush1.xpose.msra.mxu0 0.0
    %1544 = vmatprep.subr.mxu0 0.0
    %1545 = vmatpush1.xpose.msra.mxu0 0.0
    %1546 = vmatprep.subr.mxu0 0.0
    %1547 = vmatpush1.xpose.msra.mxu0 0.0
    %1548 = vmatprep.subr.mxu0 0.0
    %1549 = vmatpush1.xpose.msra.mxu0 0.0
    %1550 = vmatprep.subr.mxu0 0.0
    %1551 = vmatpush1.xpose.msra.mxu0 0.0
    %1552 = vmatprep.subr.mxu0 0.0
    %1553 = vmatpush1.xpose.msra.mxu0 0.0
    %1554 = vmatprep.subr.mxu0 0.0
    %1555 = vmatpush1.xpose.msra.mxu0 0.0
    %1556 = vmatprep.subr.mxu0 0.0
    %1557 = vmatpush1.xpose.msra.mxu0 0.0
    %1558 = vmatprep.subr.mxu0 0.0
    %1559 = vmatpush1.xpose.msra.mxu0 0.0
    %1560 = vmatprep.subr.mxu0 0.0
    %1561 = vmatpush1.xpose.msra.mxu0 %v1528
    %1562 = vmatprep.subr.mxu0 0.0
    %1563 = vmatpush2.xpose.msra.mxu0 0.0
    %1564 = vmatprep.subr.mxu0 0.0
    %1565 = vmatpush2.xpose.msra.mxu0 0.0
    %1566 = vmatprep.subr.mxu0 0.0
    %1567 = vmatpush2.xpose.msra.mxu0 0.0
    %1568 = vmatprep.subr.mxu0 0.0
    %1569 = vmatpush2.xpose.msra.mxu0 0.0
    %1570 = vmatprep.subr.mxu0 0.0
    %1571 = vmatpush2.xpose.msra.mxu0 0.0
    %1572 = vmatprep.subr.mxu0 0.0
    %1573 = vmatpush2.xpose.msra.mxu0 0.0
    %1574 = vmatprep.subr.mxu0 0.0
    %1575 = vmatpush2.xpose.msra.mxu0 0.0
    %1576 = vmatprep.subr.mxu0 0.0
    %1577 = vmatpush2.xpose.msra.mxu0 0.0
    %1578 = vmatprep.subr.mxu0 0.0
    %1579 = vmatpush2.xpose.msra.mxu0 0.0
    %1580 = vmatprep.subr.mxu0 0.0
    %1581 = vmatpush2.xpose.msra.mxu0 0.0
    %1582 = vmatprep.subr.mxu0 0.0
    %1583 = vmatpush2.xpose.msra.mxu0 0.0
    %1584 = vmatprep.subr.mxu0 0.0
    %1585 = vmatpush2.xpose.msra.mxu0 0.0
    %1586 = vmatprep.subr.mxu0 0.0
    %1587 = vmatpush2.xpose.msra.mxu0 0.0
    %1588 = vmatprep.subr.mxu0 0.0
    %1589 = vmatpush2.xpose.msra.mxu0 0.0
    %1590 = vmatprep.subr.mxu0 0.0
    %1591 = vmatpush2.xpose.msra.mxu0 0.0
    %1592 = vmatprep.subr.mxu0 0.0
    %1593 = vmatpush2.xpose.msra.mxu0 0.0
    %1594 = vmatprep.mubr.f32.mxu0 0.0
    %1595 = vmatmul.mubr.f32.gmra.mxu0 %v1526
    %v1596 = vpop.f32.mrf.mxu0
    %v1597 = vadd.f32 0.0, %v1596
    %v1598 = vpop.f32.mrf.mxu0
    %1599 = vdwg.mxu0
    %v1600 = vmul.f32 %v1519, 0.25
    %v1601 = vmul.f32 %v1597, 0.25
    %v1602 = vsel %vm607, %v1600, -inf
    %1603 = vmax.xlane.f32.xlu0 %v1602
    %v1604 = vpop.xlane.xlu0 %1603
    %v1605 = vsel %vm607, %v1601, -inf
    %1606 = vmax.xlane.f32.xlu0 %v1605
    %v1607 = vpop.xlane.xlu0 %1606
    %v1608 = vsub.f32 %v1600, %v1604
    %v1609 = vsub.f32 %v1601, %v1607
    %v1610 = vmul.f32 %v1608, 1.442695
    %v1611 = vpow.pop %v1610
    %v1612 = vmul.f32 %v1609, 1.442695
    %v1613 = vpow.pop %v1612
    %v1614 = vsel %vm607, %v1611, 0.0
    %1615 = vadd.xlane.f32.xlu0 %v1614
    %v1616 = vpop.xlane.xlu0 %1615
    %v1617 = vsel %vm607, %v1613, 0.0
    %1618 = vadd.xlane.f32.xlu0 %v1617
    %v1619 = vpop.xlane.xlu0 %1618
    %v1620 = vrcp.pop %v1616
    %v1621 = vrcp.pop %v1619
    %v1622 = vmul.f32 %v1611, %v1620
    %v1623 = vmul.f32 %v1613, %v1621
    %1624 = vrot.lane.b32.xlu0 %v187, 16
    %v1625 = vpop.permute.xlu0 %1624
    %v1628 = vsel %vm607, %v1622, 0
    %1630 = vmatprep.subr.mxu0 0.0
    %1631 = vmatpush1.msra.mxu0 0.0
    %1632 = vmatprep.subr.mxu0 0.0
    %1633 = vmatpush1.msra.mxu0 0.0
    %1634 = vmatprep.subr.mxu0 0.0
    %1635 = vmatpush1.msra.mxu0 0.0
    %1636 = vmatprep.subr.mxu0 0.0
    %1637 = vmatpush1.msra.mxu0 0.0
    %1638 = vmatprep.subr.mxu0 0.0
    %1639 = vmatpush1.msra.mxu0 0.0
    %1640 = vmatprep.subr.mxu0 0.0
    %1641 = vmatpush1.msra.mxu0 0.0
    %1642 = vmatprep.subr.mxu0 0.0
    %1643 = vmatpush1.msra.mxu0 0.0
    %1644 = vmatprep.subr.mxu0 0.0
    %1645 = vmatpush1.msra.mxu0 0.0
    %1646 = vmatprep.subr.mxu0 0.0
    %1647 = vmatpush1.msra.mxu0 0.0
    %1648 = vmatprep.subr.mxu0 0.0
    %1649 = vmatpush1.msra.mxu0 0.0
    %1650 = vmatprep.subr.mxu0 0.0
    %1651 = vmatpush1.msra.mxu0 0.0
    %1652 = vmatprep.subr.mxu0 0.0
    %1653 = vmatpush1.msra.mxu0 0.0
    %1654 = vmatprep.subr.mxu0 0.0
    %1655 = vmatpush1.msra.mxu0 0.0
    %1656 = vmatprep.subr.mxu0 0.0
    %1657 = vmatpush1.msra.mxu0 0.0
    %1658 = vmatprep.subr.mxu0 0.0
    %1659 = vmatpush1.msra.mxu0 0.0
    %1660 = vmatprep.subr.mxu0 0.0
    %1661 = vmatpush1.msra.mxu0 %v1625
    %1662 = vmatprep.subr.mxu0 0.0
    %1663 = vmatpush2.msra.mxu0 0.0
    %1664 = vmatprep.subr.mxu0 0.0
    %1665 = vmatpush2.msra.mxu0 0.0
    %1666 = vmatprep.subr.mxu0 0.0
    %1667 = vmatpush2.msra.mxu0 0.0
    %1668 = vmatprep.subr.mxu0 0.0
    %1669 = vmatpush2.msra.mxu0 0.0
    %1670 = vmatprep.subr.mxu0 0.0
    %1671 = vmatpush2.msra.mxu0 0.0
    %1672 = vmatprep.subr.mxu0 0.0
    %1673 = vmatpush2.msra.mxu0 0.0
    %1674 = vmatprep.subr.mxu0 0.0
    %1675 = vmatpush2.msra.mxu0 0.0
    %1676 = vmatprep.subr.mxu0 0.0
    %1677 = vmatpush2.msra.mxu0 0.0
    %1678 = vmatprep.subr.mxu0 0.0
    %1679 = vmatpush2.msra.mxu0 0.0
    %1680 = vmatprep.subr.mxu0 0.0
    %1681 = vmatpush2.msra.mxu0 0.0
    %1682 = vmatprep.subr.mxu0 0.0
    %1683 = vmatpush2.msra.mxu0 0.0
    %1684 = vmatprep.subr.mxu0 0.0
    %1685 = vmatpush2.msra.mxu0 0.0
    %1686 = vmatprep.subr.mxu0 0.0
    %1687 = vmatpush2.msra.mxu0 0.0
    %1688 = vmatprep.subr.mxu0 0.0
    %1689 = vmatpush2.msra.mxu0 0.0
    %1690 = vmatprep.subr.mxu0 0.0
    %1691 = vmatpush2.msra.mxu0 0.0
    %1692 = vmatprep.subr.mxu0 0.0
    %1693 = vmatpush2.msra.mxu0 0.0
    %1694 = vmatprep.mubr.f32.mxu0 0.0
    %1695 = vmatmul.mubr.f32.gmra.mxu0 %v1628
    %v1696 = vpop.f32.mrf.mxu0
    %v1697 = vadd.f32 0.0, %v1696
    %v1698 = vpop.f32.mrf.mxu0
    %1699 = vdwg.mxu0
    %1700 = vrot.lane.b32.xlu0 %v193, 16
    %v1701 = vpop.permute.xlu0 %1700
    %v1704 = vsel %vm607, %v1623, 0
    %1706 = vmatprep.subr.mxu0 0.0
    %1707 = vmatpush1.msra.mxu0 0.0
    %1708 = vmatprep.subr.mxu0 0.0
    %1709 = vmatpush1.msra.mxu0 0.0
    %1710 = vmatprep.subr.mxu0 0.0
    %1711 = vmatpush1.msra.mxu0 0.0
    %1712 = vmatprep.subr.mxu0 0.0
    %1713 = vmatpush1.msra.mxu0 0.0
    %1714 = vmatprep.subr.mxu0 0.0
    %1715 = vmatpush1.msra.mxu0 0.0
    %1716 = vmatprep.subr.mxu0 0.0
    %1717 = vmatpush1.msra.mxu0 0.0
    %1718 = vmatprep.subr.mxu0 0.0
    %1719 = vmatpush1.msra.mxu0 0.0
    %1720 = vmatprep.subr.mxu0 0.0
    %1721 = vmatpush1.msra.mxu0 0.0
    %1722 = vmatprep.subr.mxu0 0.0
    %1723 = vmatpush1.msra.mxu0 0.0
    %1724 = vmatprep.subr.mxu0 0.0
    %1725 = vmatpush1.msra.mxu0 0.0
    %1726 = vmatprep.subr.mxu0 0.0
    %1727 = vmatpush1.msra.mxu0 0.0
    %1728 = vmatprep.subr.mxu0 0.0
    %1729 = vmatpush1.msra.mxu0 0.0
    %1730 = vmatprep.subr.mxu0 0.0
    %1731 = vmatpush1.msra.mxu0 0.0
    %1732 = vmatprep.subr.mxu0 0.0
    %1733 = vmatpush1.msra.mxu0 0.0
    %1734 = vmatprep.subr.mxu0 0.0
    %1735 = vmatpush1.msra.mxu0 0.0
    %1736 = vmatprep.subr.mxu0 0.0
    %1737 = vmatpush1.msra.mxu0 %v1701
    %1738 = vmatprep.subr.mxu0 0.0
    %1739 = vmatpush2.msra.mxu0 0.0
    %1740 = vmatprep.subr.mxu0 0.0
    %1741 = vmatpush2.msra.mxu0 0.0
    %1742 = vmatprep.subr.mxu0 0.0
    %1743 = vmatpush2.msra.mxu0 0.0
    %1744 = vmatprep.subr.mxu0 0.0
    %1745 = vmatpush2.msra.mxu0 0.0
    %1746 = vmatprep.subr.mxu0 0.0
    %1747 = vmatpush2.msra.mxu0 0.0
    %1748 = vmatprep.subr.mxu0 0.0
    %1749 = vmatpush2.msra.mxu0 0.0
    %1750 = vmatprep.subr.mxu0 0.0
    %1751 = vmatpush2.msra.mxu0 0.0
    %1752 = vmatprep.subr.mxu0 0.0
    %1753 = vmatpush2.msra.mxu0 0.0
    %1754 = vmatprep.subr.mxu0 0.0
    %1755 = vmatpush2.msra.mxu0 0.0
    %1756 = vmatprep.subr.mxu0 0.0
    %1757 = vmatpush2.msra.mxu0 0.0
    %1758 = vmatprep.subr.mxu0 0.0
    %1759 = vmatpush2.msra.mxu0 0.0
    %1760 = vmatprep.subr.mxu0 0.0
    %1761 = vmatpush2.msra.mxu0 0.0
    %1762 = vmatprep.subr.mxu0 0.0
    %1763 = vmatpush2.msra.mxu0 0.0
    %1764 = vmatprep.subr.mxu0 0.0
    %1765 = vmatpush2.msra.mxu0 0.0
    %1766 = vmatprep.subr.mxu0 0.0
    %1767 = vmatpush2.msra.mxu0 0.0
    %1768 = vmatprep.subr.mxu0 0.0
    %1769 = vmatpush2.msra.mxu0 0.0
    %1770 = vmatprep.mubr.f32.mxu0 0.0
    %1771 = vmatmul.mubr.f32.gmra.mxu0 %v1704
    %v1772 = vpop.f32.mrf.mxu0
    %v1773 = vadd.f32 0.0, %v1772
    %v1774 = vpop.f32.mrf.mxu0
    %1775 = vdwg.mxu0
    %v1777 = vsel %vm452, %v444, 0
    %v1780 = vsel %vm452, %v189, 0
    %1782 = vmatprep.subr.mxu0 0.0
    %1783 = vmatpush1.xpose.msra.mxu0 0.0
    %1784 = vmatprep.subr.mxu0 0.0
    %1785 = vmatpush1.xpose.msra.mxu0 0.0
    %1786 = vmatprep.subr.mxu0 0.0
    %1787 = vmatpush1.xpose.msra.mxu0 0.0
    %1788 = vmatprep.subr.mxu0 0.0
    %1789 = vmatpush1.xpose.msra.mxu0 0.0
    %1790 = vmatprep.subr.mxu0 0.0
    %1791 = vmatpush1.xpose.msra.mxu0 0.0
    %1792 = vmatprep.subr.mxu0 0.0
    %1793 = vmatpush1.xpose.msra.mxu0 0.0
    %1794 = vmatprep.subr.mxu0 0.0
    %1795 = vmatpush1.xpose.msra.mxu0 0.0
    %1796 = vmatprep.subr.mxu0 0.0
    %1797 = vmatpush1.xpose.msra.mxu0 0.0
    %1798 = vmatprep.subr.mxu0 0.0
    %1799 = vmatpush1.xpose.msra.mxu0 0.0
    %1800 = vmatprep.subr.mxu0 0.0
    %1801 = vmatpush1.xpose.msra.mxu0 0.0
    %1802 = vmatprep.subr.mxu0 0.0
    %1803 = vmatpush1.xpose.msra.mxu0 0.0
    %1804 = vmatprep.subr.mxu0 0.0
    %1805 = vmatpush1.xpose.msra.mxu0 0.0
    %1806 = vmatprep.subr.mxu0 0.0
    %1807 = vmatpush1.xpose.msra.mxu0 0.0
    %1808 = vmatprep.subr.mxu0 0.0
    %1809 = vmatpush1.xpose.msra.mxu0 0.0
    %1810 = vmatprep.subr.mxu0 0.0
    %1811 = vmatpush1.xpose.msra.mxu0 0.0
    %1812 = vmatprep.subr.mxu0 0.0
    %1813 = vmatpush1.xpose.msra.mxu0 %v1780
    %1814 = vmatprep.subr.mxu0 0.0
    %1815 = vmatpush2.xpose.msra.mxu0 0.0
    %1816 = vmatprep.subr.mxu0 0.0
    %1817 = vmatpush2.xpose.msra.mxu0 0.0
    %1818 = vmatprep.subr.mxu0 0.0
    %1819 = vmatpush2.xpose.msra.mxu0 0.0
    %1820 = vmatprep.subr.mxu0 0.0
    %1821 = vmatpush2.xpose.msra.mxu0 0.0
    %1822 = vmatprep.subr.mxu0 0.0
    %1823 = vmatpush2.xpose.msra.mxu0 0.0
    %1824 = vmatprep.subr.mxu0 0.0
    %1825 = vmatpush2.xpose.msra.mxu0 0.0
    %1826 = vmatprep.subr.mxu0 0.0
    %1827 = vmatpush2.xpose.msra.mxu0 0.0
    %1828 = vmatprep.subr.mxu0 0.0
    %1829 = vmatpush2.xpose.msra.mxu0 0.0
    %1830 = vmatprep.subr.mxu0 0.0
    %1831 = vmatpush2.xpose.msra.mxu0 0.0
    %1832 = vmatprep.subr.mxu0 0.0
    %1833 = vmatpush2.xpose.msra.mxu0 0.0
    %1834 = vmatprep.subr.mxu0 0.0
    %1835 = vmatpush2.xpose.msra.mxu0 0.0
    %1836 = vmatprep.subr.mxu0 0.0
    %1837 = vmatpush2.xpose.msra.mxu0 0.0
    %1838 = vmatprep.subr.mxu0 0.0
    %1839 = vmatpush2.xpose.msra.mxu0 0.0
    %1840 = vmatprep.subr.mxu0 0.0
    %1841 = vmatpush2.xpose.msra.mxu0 0.0
    %1842 = vmatprep.subr.mxu0 0.0
    %1843 = vmatpush2.xpose.msra.mxu0 0.0
    %1844 = vmatprep.subr.mxu0 0.0
    %1845 = vmatpush2.xpose.msra.mxu0 0.0
    %1846 = vmatprep.mubr.f32.mxu0 0.0
    %1847 = vmatmul.mubr.f32.gmra.mxu0 %v1777
    %v1848 = vpop.f32.mrf.mxu0
    %v1849 = vadd.f32 0.0, %v1848
    %v1850 = vpop.f32.mrf.mxu0
    %1851 = vdwg.mxu0
    %v1853 = vsel %vm452, %v449, 0
    %v1856 = vsel %vm452, %v195, 0
    %1858 = vmatprep.subr.mxu0 0.0
    %1859 = vmatpush1.xpose.msra.mxu0 0.0
    %1860 = vmatprep.subr.mxu0 0.0
    %1861 = vmatpush1.xpose.msra.mxu0 0.0
    %1862 = vmatprep.subr.mxu0 0.0
    %1863 = vmatpush1.xpose.msra.mxu0 0.0
    %1864 = vmatprep.subr.mxu0 0.0
    %1865 = vmatpush1.xpose.msra.mxu0 0.0
    %1866 = vmatprep.subr.mxu0 0.0
    %1867 = vmatpush1.xpose.msra.mxu0 0.0
    %1868 = vmatprep.subr.mxu0 0.0
    %1869 = vmatpush1.xpose.msra.mxu0 0.0
    %1870 = vmatprep.subr.mxu0 0.0
    %1871 = vmatpush1.xpose.msra.mxu0 0.0
    %1872 = vmatprep.subr.mxu0 0.0
    %1873 = vmatpush1.xpose.msra.mxu0 0.0
    %1874 = vmatprep.subr.mxu0 0.0
    %1875 = vmatpush1.xpose.msra.mxu0 0.0
    %1876 = vmatprep.subr.mxu0 0.0
    %1877 = vmatpush1.xpose.msra.mxu0 0.0
    %1878 = vmatprep.subr.mxu0 0.0
    %1879 = vmatpush1.xpose.msra.mxu0 0.0
    %1880 = vmatprep.subr.mxu0 0.0
    %1881 = vmatpush1.xpose.msra.mxu0 0.0
    %1882 = vmatprep.subr.mxu0 0.0
    %1883 = vmatpush1.xpose.msra.mxu0 0.0
    %1884 = vmatprep.subr.mxu0 0.0
    %1885 = vmatpush1.xpose.msra.mxu0 0.0
    %1886 = vmatprep.subr.mxu0 0.0
    %1887 = vmatpush1.xpose.msra.mxu0 0.0
    %1888 = vmatprep.subr.mxu0 0.0
    %1889 = vmatpush1.xpose.msra.mxu0 %v1856
    %1890 = vmatprep.subr.mxu0 0.0
    %1891 = vmatpush2.xpose.msra.mxu0 0.0
    %1892 = vmatprep.subr.mxu0 0.0
    %1893 = vmatpush2.xpose.msra.mxu0 0.0
    %1894 = vmatprep.subr.mxu0 0.0
    %1895 = vmatpush2.xpose.msra.mxu0 0.0
    %1896 = vmatprep.subr.mxu0 0.0
    %1897 = vmatpush2.xpose.msra.mxu0 0.0
    %1898 = vmatprep.subr.mxu0 0.0
    %1899 = vmatpush2.xpose.msra.mxu0 0.0
    %1900 = vmatprep.subr.mxu0 0.0
    %1901 = vmatpush2.xpose.msra.mxu0 0.0
    %1902 = vmatprep.subr.mxu0 0.0
    %1903 = vmatpush2.xpose.msra.mxu0 0.0
    %1904 = vmatprep.subr.mxu0 0.0
    %1905 = vmatpush2.xpose.msra.mxu0 0.0
    %1906 = vmatprep.subr.mxu0 0.0
    %1907 = vmatpush2.xpose.msra.mxu0 0.0
    %1908 = vmatprep.subr.mxu0 0.0
    %1909 = vmatpush2.xpose.msra.mxu0 0.0
    %1910 = vmatprep.subr.mxu0 0.0
    %1911 = vmatpush2.xpose.msra.mxu0 0.0
    %1912 = vmatprep.subr.mxu0 0.0
    %1913 = vmatpush2.xpose.msra.mxu0 0.0
    %1914 = vmatprep.subr.mxu0 0.0
    %1915 = vmatpush2.xpose.msra.mxu0 0.0
    %1916 = vmatprep.subr.mxu0 0.0
    %1917 = vmatpush2.xpose.msra.mxu0 0.0
    %1918 = vmatprep.subr.mxu0 0.0
    %1919 = vmatpush2.xpose.msra.mxu0 0.0
    %1920 = vmatprep.subr.mxu0 0.0
    %1921 = vmatpush2.xpose.msra.mxu0 0.0
    %1922 = vmatprep.mubr.f32.mxu0 0.0
    %1923 = vmatmul.mubr.f32.gmra.mxu0 %v1853
    %v1924 = vpop.f32.mrf.mxu0
    %v1925 = vadd.f32 0.0, %v1924
    %v1926 = vpop.f32.mrf.mxu0
    %1927 = vdwg.mxu0
    %v1928 = vmul.f32 %v1849, 0.25
    %v1929 = vmul.f32 %v1925, 0.25
    %v1930 = vsel %vm607, %v1928, -inf
    %1931 = vmax.xlane.f32.xlu0 %v1930
    %v1932 = vpop.xlane.xlu0 %1931
    %v1933 = vsel %vm607, %v1929, -inf
    %1934 = vmax.xlane.f32.xlu0 %v1933
    %v1935 = vpop.xlane.xlu0 %1934
    %v1936 = vsub.f32 %v1928, %v1932
    %v1937 = vsub.f32 %v1929, %v1935
    %v1938 = vmul.f32 %v1936, 1.442695
    %v1939 = vpow.pop %v1938
    %v1940 = vmul.f32 %v1937, 1.442695
    %v1941 = vpow.pop %v1940
    %v1942 = vsel %vm607, %v1939, 0.0
    %1943 = vadd.xlane.f32.xlu0 %v1942
    %v1944 = vpop.xlane.xlu0 %1943
    %v1945 = vsel %vm607, %v1941, 0.0
    %1946 = vadd.xlane.f32.xlu0 %v1945
    %v1947 = vpop.xlane.xlu0 %1946
    %v1948 = vrcp.pop %v1944
    %v1949 = vrcp.pop %v1947
    %v1950 = vmul.f32 %v1939, %v1948
    %v1951 = vmul.f32 %v1941, %v1949
    %1952 = vrot.lane.b32.xlu0 %v189, 96
    %v1953 = vpop.permute.xlu0 %1952
    %v1956 = vsel %vm607, %v1950, 0
    %1958 = vmatprep.subr.mxu0 0.0
    %1959 = vmatpush1.msra.mxu0 0.0
    %1960 = vmatprep.subr.mxu0 0.0
    %1961 = vmatpush1.msra.mxu0 0.0
    %1962 = vmatprep.subr.mxu0 0.0
    %1963 = vmatpush1.msra.mxu0 0.0
    %1964 = vmatprep.subr.mxu0 0.0
    %1965 = vmatpush1.msra.mxu0 0.0
    %1966 = vmatprep.subr.mxu0 0.0
    %1967 = vmatpush1.msra.mxu0 0.0
    %1968 = vmatprep.subr.mxu0 0.0
    %1969 = vmatpush1.msra.mxu0 0.0
    %1970 = vmatprep.subr.mxu0 0.0
    %1971 = vmatpush1.msra.mxu0 0.0
    %1972 = vmatprep.subr.mxu0 0.0
    %1973 = vmatpush1.msra.mxu0 0.0
    %1974 = vmatprep.subr.mxu0 0.0
    %1975 = vmatpush1.msra.mxu0 0.0
    %1976 = vmatprep.subr.mxu0 0.0
    %1977 = vmatpush1.msra.mxu0 0.0
    %1978 = vmatprep.subr.mxu0 0.0
    %1979 = vmatpush1.msra.mxu0 0.0
    %1980 = vmatprep.subr.mxu0 0.0
    %1981 = vmatpush1.msra.mxu0 0.0
    %1982 = vmatprep.subr.mxu0 0.0
    %1983 = vmatpush1.msra.mxu0 0.0
    %1984 = vmatprep.subr.mxu0 0.0
    %1985 = vmatpush1.msra.mxu0 0.0
    %1986 = vmatprep.subr.mxu0 0.0
    %1987 = vmatpush1.msra.mxu0 0.0
    %1988 = vmatprep.subr.mxu0 0.0
    %1989 = vmatpush1.msra.mxu0 %v1953
    %1990 = vmatprep.subr.mxu0 0.0
    %1991 = vmatpush2.msra.mxu0 0.0
    %1992 = vmatprep.subr.mxu0 0.0
    %1993 = vmatpush2.msra.mxu0 0.0
    %1994 = vmatprep.subr.mxu0 0.0
    %1995 = vmatpush2.msra.mxu0 0.0
    %1996 = vmatprep.subr.mxu0 0.0
    %1997 = vmatpush2.msra.mxu0 0.0
    %1998 = vmatprep.subr.mxu0 0.0
    %1999 = vmatpush2.msra.mxu0 0.0
    %2000 = vmatprep.subr.mxu0 0.0
    %2001 = vmatpush2.msra.mxu0 0.0
    %2002 = vmatprep.subr.mxu0 0.0
    %2003 = vmatpush2.msra.mxu0 0.0
    %2004 = vmatprep.subr.mxu0 0.0
    %2005 = vmatpush2.msra.mxu0 0.0
    %2006 = vmatprep.subr.mxu0 0.0
    %2007 = vmatpush2.msra.mxu0 0.0
    %2008 = vmatprep.subr.mxu0 0.0
    %2009 = vmatpush2.msra.mxu0 0.0
    %2010 = vmatprep.subr.mxu0 0.0
    %2011 = vmatpush2.msra.mxu0 0.0
    %2012 = vmatprep.subr.mxu0 0.0
    %2013 = vmatpush2.msra.mxu0 0.0
    %2014 = vmatprep.subr.mxu0 0.0
    %2015 = vmatpush2.msra.mxu0 0.0
    %2016 = vmatprep.subr.mxu0 0.0
    %2017 = vmatpush2.msra.mxu0 0.0
    %2018 = vmatprep.subr.mxu0 0.0
    %2019 = vmatpush2.msra.mxu0 0.0
    %2020 = vmatprep.subr.mxu0 0.0
    %2021 = vmatpush2.msra.mxu0 0.0
    %2022 = vmatprep.mubr.f32.mxu0 0.0
    %2023 = vmatmul.mubr.f32.gmra.mxu0 %v1956
    %v2024 = vpop.f32.mrf.mxu0
    %v2025 = vadd.f32 0.0, %v2024
    %v2026 = vpop.f32.mrf.mxu0
    %2027 = vdwg.mxu0
    %2028 = vrot.lane.b32.xlu0 %v195, 96
    %v2029 = vpop.permute.xlu0 %2028
    %v2032 = vsel %vm607, %v1951, 0
    %2034 = vmatprep.subr.mxu0 0.0
    %2035 = vmatpush1.msra.mxu0 0.0
    %2036 = vmatprep.subr.mxu0 0.0
    %2037 = vmatpush1.msra.mxu0 0.0
    %2038 = vmatprep.subr.mxu0 0.0
    %2039 = vmatpush1.msra.mxu0 0.0
    %2040 = vmatprep.subr.mxu0 0.0
    %2041 = vmatpush1.msra.mxu0 0.0
    %2042 = vmatprep.subr.mxu0 0.0
    %2043 = vmatpush1.msra.mxu0 0.0
    %2044 = vmatprep.subr.mxu0 0.0
    %2045 = vmatpush1.msra.mxu0 0.0
    %2046 = vmatprep.subr.mxu0 0.0
    %2047 = vmatpush1.msra.mxu0 0.0
    %2048 = vmatprep.subr.mxu0 0.0
    %2049 = vmatpush1.msra.mxu0 0.0
    %2050 = vmatprep.subr.mxu0 0.0
    %2051 = vmatpush1.msra.mxu0 0.0
    %2052 = vmatprep.subr.mxu0 0.0
    %2053 = vmatpush1.msra.mxu0 0.0
    %2054 = vmatprep.subr.mxu0 0.0
    %2055 = vmatpush1.msra.mxu0 0.0
    %2056 = vmatprep.subr.mxu0 0.0
    %2057 = vmatpush1.msra.mxu0 0.0
    %2058 = vmatprep.subr.mxu0 0.0
    %2059 = vmatpush1.msra.mxu0 0.0
    %2060 = vmatprep.subr.mxu0 0.0
    %2061 = vmatpush1.msra.mxu0 0.0
    %2062 = vmatprep.subr.mxu0 0.0
    %2063 = vmatpush1.msra.mxu0 0.0
    %2064 = vmatprep.subr.mxu0 0.0
    %2065 = vmatpush1.msra.mxu0 %v2029
    %2066 = vmatprep.subr.mxu0 0.0
    %2067 = vmatpush2.msra.mxu0 0.0
    %2068 = vmatprep.subr.mxu0 0.0
    %2069 = vmatpush2.msra.mxu0 0.0
    %2070 = vmatprep.subr.mxu0 0.0
    %2071 = vmatpush2.msra.mxu0 0.0
    %2072 = vmatprep.subr.mxu0 0.0
    %2073 = vmatpush2.msra.mxu0 0.0
    %2074 = vmatprep.subr.mxu0 0.0
    %2075 = vmatpush2.msra.mxu0 0.0
    %2076 = vmatprep.subr.mxu0 0.0
    %2077 = vmatpush2.msra.mxu0 0.0
    %2078 = vmatprep.subr.mxu0 0.0
    %2079 = vmatpush2.msra.mxu0 0.0
    %2080 = vmatprep.subr.mxu0 0.0
    %2081 = vmatpush2.msra.mxu0 0.0
    %2082 = vmatprep.subr.mxu0 0.0
    %2083 = vmatpush2.msra.mxu0 0.0
    %2084 = vmatprep.subr.mxu0 0.0
    %2085 = vmatpush2.msra.mxu0 0.0
    %2086 = vmatprep.subr.mxu0 0.0
    %2087 = vmatpush2.msra.mxu0 0.0
    %2088 = vmatprep.subr.mxu0 0.0
    %2089 = vmatpush2.msra.mxu0 0.0
    %2090 = vmatprep.subr.mxu0 0.0
    %2091 = vmatpush2.msra.mxu0 0.0
    %2092 = vmatprep.subr.mxu0 0.0
    %2093 = vmatpush2.msra.mxu0 0.0
    %2094 = vmatprep.subr.mxu0 0.0
    %2095 = vmatpush2.msra.mxu0 0.0
    %2096 = vmatprep.subr.mxu0 0.0
    %2097 = vmatpush2.msra.mxu0 0.0
    %2098 = vmatprep.mubr.f32.mxu0 0.0
    %2099 = vmatmul.mubr.f32.gmra.mxu0 %v2032
    %v2100 = vpop.f32.mrf.mxu0
    %v2101 = vadd.f32 0.0, %v2100
    %v2102 = vpop.f32.mrf.mxu0
    %2103 = vdwg.mxu0
    %2104 = vrot.lane.b32.xlu0 %v444, 112
    %v2105 = vpop.permute.xlu0 %2104
    %2106 = vrot.lane.b32.xlu0 %v189, 112
    %v2107 = vpop.permute.xlu0 %2106
    %v2108 = vsel %vm452, %v2105, 0
    %v2110 = vsel %vm452, %v2107, 0
    %2112 = vmatprep.subr.mxu0 0.0
    %2113 = vmatpush1.xpose.msra.mxu0 0.0
    %2114 = vmatprep.subr.mxu0 0.0
    %2115 = vmatpush1.xpose.msra.mxu0 0.0
    %2116 = vmatprep.subr.mxu0 0.0
    %2117 = vmatpush1.xpose.msra.mxu0 0.0
    %2118 = vmatprep.subr.mxu0 0.0
    %2119 = vmatpush1.xpose.msra.mxu0 0.0
    %2120 = vmatprep.subr.mxu0 0.0
    %2121 = vmatpush1.xpose.msra.mxu0 0.0
    %2122 = vmatprep.subr.mxu0 0.0
    %2123 = vmatpush1.xpose.msra.mxu0 0.0
    %2124 = vmatprep.subr.mxu0 0.0
    %2125 = vmatpush1.xpose.msra.mxu0 0.0
    %2126 = vmatprep.subr.mxu0 0.0
    %2127 = vmatpush1.xpose.msra.mxu0 0.0
    %2128 = vmatprep.subr.mxu0 0.0
    %2129 = vmatpush1.xpose.msra.mxu0 0.0
    %2130 = vmatprep.subr.mxu0 0.0
    %2131 = vmatpush1.xpose.msra.mxu0 0.0
    %2132 = vmatprep.subr.mxu0 0.0
    %2133 = vmatpush1.xpose.msra.mxu0 0.0
    %2134 = vmatprep.subr.mxu0 0.0
    %2135 = vmatpush1.xpose.msra.mxu0 0.0
    %2136 = vmatprep.subr.mxu0 0.0
    %2137 = vmatpush1.xpose.msra.mxu0 0.0
    %2138 = vmatprep.subr.mxu0 0.0
    %2139 = vmatpush1.xpose.msra.mxu0 0.0
    %2140 = vmatprep.subr.mxu0 0.0
    %2141 = vmatpush1.xpose.msra.mxu0 0.0
    %2142 = vmatprep.subr.mxu0 0.0
    %2143 = vmatpush1.xpose.msra.mxu0 %v2110
    %2144 = vmatprep.subr.mxu0 0.0
    %2145 = vmatpush2.xpose.msra.mxu0 0.0
    %2146 = vmatprep.subr.mxu0 0.0
    %2147 = vmatpush2.xpose.msra.mxu0 0.0
    %2148 = vmatprep.subr.mxu0 0.0
    %2149 = vmatpush2.xpose.msra.mxu0 0.0
    %2150 = vmatprep.subr.mxu0 0.0
    %2151 = vmatpush2.xpose.msra.mxu0 0.0
    %2152 = vmatprep.subr.mxu0 0.0
    %2153 = vmatpush2.xpose.msra.mxu0 0.0
    %2154 = vmatprep.subr.mxu0 0.0
    %2155 = vmatpush2.xpose.msra.mxu0 0.0
    %2156 = vmatprep.subr.mxu0 0.0
    %2157 = vmatpush2.xpose.msra.mxu0 0.0
    %2158 = vmatprep.subr.mxu0 0.0
    %2159 = vmatpush2.xpose.msra.mxu0 0.0
    %2160 = vmatprep.subr.mxu0 0.0
    %2161 = vmatpush2.xpose.msra.mxu0 0.0
    %2162 = vmatprep.subr.mxu0 0.0
    %2163 = vmatpush2.xpose.msra.mxu0 0.0
    %2164 = vmatprep.subr.mxu0 0.0
    %2165 = vmatpush2.xpose.msra.mxu0 0.0
    %2166 = vmatprep.subr.mxu0 0.0
    %2167 = vmatpush2.xpose.msra.mxu0 0.0
    %2168 = vmatprep.subr.mxu0 0.0
    %2169 = vmatpush2.xpose.msra.mxu0 0.0
    %2170 = vmatprep.subr.mxu0 0.0
    %2171 = vmatpush2.xpose.msra.mxu0 0.0
    %2172 = vmatprep.subr.mxu0 0.0
    %2173 = vmatpush2.xpose.msra.mxu0 0.0
    %2174 = vmatprep.subr.mxu0 0.0
    %2175 = vmatpush2.xpose.msra.mxu0 0.0
    %2176 = vmatprep.mubr.f32.mxu0 0.0
    %2177 = vmatmul.mubr.f32.gmra.mxu0 %v2108
    %v2178 = vpop.f32.mrf.mxu0
    %v2179 = vadd.f32 0.0, %v2178
    %v2180 = vpop.f32.mrf.mxu0
    %2181 = vdwg.mxu0
    %2182 = vrot.lane.b32.xlu0 %v449, 112
    %v2183 = vpop.permute.xlu0 %2182
    %2184 = vrot.lane.b32.xlu0 %v195, 112
    %v2185 = vpop.permute.xlu0 %2184
    %v2186 = vsel %vm452, %v2183, 0
    %v2188 = vsel %vm452, %v2185, 0
    %2190 = vmatprep.subr.mxu0 0.0
    %2191 = vmatpush1.xpose.msra.mxu0 0.0
    %2192 = vmatprep.subr.mxu0 0.0
    %2193 = vmatpush1.xpose.msra.mxu0 0.0
    %2194 = vmatprep.subr.mxu0 0.0
    %2195 = vmatpush1.xpose.msra.mxu0 0.0
    %2196 = vmatprep.subr.mxu0 0.0
    %2197 = vmatpush1.xpose.msra.mxu0 0.0
    %2198 = vmatprep.subr.mxu0 0.0
    %2199 = vmatpush1.xpose.msra.mxu0 0.0
    %2200 = vmatprep.subr.mxu0 0.0
    %2201 = vmatpush1.xpose.msra.mxu0 0.0
    %2202 = vmatprep.subr.mxu0 0.0
    %2203 = vmatpush1.xpose.msra.mxu0 0.0
    %2204 = vmatprep.subr.mxu0 0.0
    %2205 = vmatpush1.xpose.msra.mxu0 0.0
    %2206 = vmatprep.subr.mxu0 0.0
    %2207 = vmatpush1.xpose.msra.mxu0 0.0
    %2208 = vmatprep.subr.mxu0 0.0
    %2209 = vmatpush1.xpose.msra.mxu0 0.0
    %2210 = vmatprep.subr.mxu0 0.0
    %2211 = vmatpush1.xpose.msra.mxu0 0.0
    %2212 = vmatprep.subr.mxu0 0.0
    %2213 = vmatpush1.xpose.msra.mxu0 0.0
    %2214 = vmatprep.subr.mxu0 0.0
    %2215 = vmatpush1.xpose.msra.mxu0 0.0
    %2216 = vmatprep.subr.mxu0 0.0
    %2217 = vmatpush1.xpose.msra.mxu0 0.0
    %2218 = vmatprep.subr.mxu0 0.0
    %2219 = vmatpush1.xpose.msra.mxu0 0.0
    %2220 = vmatprep.subr.mxu0 0.0
    %2221 = vmatpush1.xpose.msra.mxu0 %v2188
    %2222 = vmatprep.subr.mxu0 0.0
    %2223 = vmatpush2.xpose.msra.mxu0 0.0
    %2224 = vmatprep.subr.mxu0 0.0
    %2225 = vmatpush2.xpose.msra.mxu0 0.0
    %2226 = vmatprep.subr.mxu0 0.0
    %2227 = vmatpush2.xpose.msra.mxu0 0.0
    %2228 = vmatprep.subr.mxu0 0.0
    %2229 = vmatpush2.xpose.msra.mxu0 0.0
    %2230 = vmatprep.subr.mxu0 0.0
    %2231 = vmatpush2.xpose.msra.mxu0 0.0
    %2232 = vmatprep.subr.mxu0 0.0
    %2233 = vmatpush2.xpose.msra.mxu0 0.0
    %2234 = vmatprep.subr.mxu0 0.0
    %2235 = vmatpush2.xpose.msra.mxu0 0.0
    %2236 = vmatprep.subr.mxu0 0.0
    %2237 = vmatpush2.xpose.msra.mxu0 0.0
    %2238 = vmatprep.subr.mxu0 0.0
    %2239 = vmatpush2.xpose.msra.mxu0 0.0
    %2240 = vmatprep.subr.mxu0 0.0
    %2241 = vmatpush2.xpose.msra.mxu0 0.0
    %2242 = vmatprep.subr.mxu0 0.0
    %2243 = vmatpush2.xpose.msra.mxu0 0.0
    %2244 = vmatprep.subr.mxu0 0.0
    %2245 = vmatpush2.xpose.msra.mxu0 0.0
    %2246 = vmatprep.subr.mxu0 0.0
    %2247 = vmatpush2.xpose.msra.mxu0 0.0
    %2248 = vmatprep.subr.mxu0 0.0
    %2249 = vmatpush2.xpose.msra.mxu0 0.0
    %2250 = vmatprep.subr.mxu0 0.0
    %2251 = vmatpush2.xpose.msra.mxu0 0.0
    %2252 = vmatprep.subr.mxu0 0.0
    %2253 = vmatpush2.xpose.msra.mxu0 0.0
    %2254 = vmatprep.mubr.f32.mxu0 0.0
    %2255 = vmatmul.mubr.f32.gmra.mxu0 %v2186
    %v2256 = vpop.f32.mrf.mxu0
    %v2257 = vadd.f32 0.0, %v2256
    %v2258 = vpop.f32.mrf.mxu0
    %2259 = vdwg.mxu0
    %v2260 = vmul.f32 %v2179, 0.25
    %v2261 = vmul.f32 %v2257, 0.25
    %v2262 = vsel %vm607, %v2260, -inf
    %2263 = vmax.xlane.f32.xlu0 %v2262
    %v2264 = vpop.xlane.xlu0 %2263
    %v2265 = vsel %vm607, %v2261, -inf
    %2266 = vmax.xlane.f32.xlu0 %v2265
    %v2267 = vpop.xlane.xlu0 %2266
    %v2268 = vsub.f32 %v2260, %v2264
    %v2269 = vsub.f32 %v2261, %v2267
    %v2270 = vmul.f32 %v2268, 1.442695
    %v2271 = vpow.pop %v2270
    %v2272 = vmul.f32 %v2269, 1.442695
    %v2273 = vpow.pop %v2272
    %v2274 = vsel %vm607, %v2271, 0.0
    %2275 = vadd.xlane.f32.xlu0 %v2274
    %v2276 = vpop.xlane.xlu0 %2275
    %v2277 = vsel %vm607, %v2273, 0.0
    %2278 = vadd.xlane.f32.xlu0 %v2277
    %v2279 = vpop.xlane.xlu0 %2278
    %v2280 = vrcp.pop %v2276
    %v2281 = vrcp.pop %v2279
    %v2282 = vmul.f32 %v2271, %v2280
    %v2283 = vmul.f32 %v2273, %v2281
    %2284 = vrot.lane.b32.xlu0 %v189, 80
    %v2285 = vpop.permute.xlu0 %2284
    %v2288 = vsel %vm607, %v2282, 0
    %2290 = vmatprep.subr.mxu0 0.0
    %2291 = vmatpush1.msra.mxu0 0.0
    %2292 = vmatprep.subr.mxu0 0.0
    %2293 = vmatpush1.msra.mxu0 0.0
    %2294 = vmatprep.subr.mxu0 0.0
    %2295 = vmatpush1.msra.mxu0 0.0
    %2296 = vmatprep.subr.mxu0 0.0
    %2297 = vmatpush1.msra.mxu0 0.0
    %2298 = vmatprep.subr.mxu0 0.0
    %2299 = vmatpush1.msra.mxu0 0.0
    %2300 = vmatprep.subr.mxu0 0.0
    %2301 = vmatpush1.msra.mxu0 0.0
    %2302 = vmatprep.subr.mxu0 0.0
    %2303 = vmatpush1.msra.mxu0 0.0
    %2304 = vmatprep.subr.mxu0 0.0
    %2305 = vmatpush1.msra.mxu0 0.0
    %2306 = vmatprep.subr.mxu0 0.0
    %2307 = vmatpush1.msra.mxu0 0.0
    %2308 = vmatprep.subr.mxu0 0.0
    %2309 = vmatpush1.msra.mxu0 0.0
    %2310 = vmatprep.subr.mxu0 0.0
    %2311 = vmatpush1.msra.mxu0 0.0
    %2312 = vmatprep.subr.mxu0 0.0
    %2313 = vmatpush1.msra.mxu0 0.0
    %2314 = vmatprep.subr.mxu0 0.0
    %2315 = vmatpush1.msra.mxu0 0.0
    %2316 = vmatprep.subr.mxu0 0.0
    %2317 = vmatpush1.msra.mxu0 0.0
    %2318 = vmatprep.subr.mxu0 0.0
    %2319 = vmatpush1.msra.mxu0 0.0
    %2320 = vmatprep.subr.mxu0 0.0
    %2321 = vmatpush1.msra.mxu0 %v2285
    %2322 = vmatprep.subr.mxu0 0.0
    %2323 = vmatpush2.msra.mxu0 0.0
    %2324 = vmatprep.subr.mxu0 0.0
    %2325 = vmatpush2.msra.mxu0 0.0
    %2326 = vmatprep.subr.mxu0 0.0
    %2327 = vmatpush2.msra.mxu0 0.0
    %2328 = vmatprep.subr.mxu0 0.0
    %2329 = vmatpush2.msra.mxu0 0.0
    %2330 = vmatprep.subr.mxu0 0.0
    %2331 = vmatpush2.msra.mxu0 0.0
    %2332 = vmatprep.subr.mxu0 0.0
    %2333 = vmatpush2.msra.mxu0 0.0
    %2334 = vmatprep.subr.mxu0 0.0
    %2335 = vmatpush2.msra.mxu0 0.0
    %2336 = vmatprep.subr.mxu0 0.0
    %2337 = vmatpush2.msra.mxu0 0.0
    %2338 = vmatprep.subr.mxu0 0.0
    %2339 = vmatpush2.msra.mxu0 0.0
    %2340 = vmatprep.subr.mxu0 0.0
    %2341 = vmatpush2.msra.mxu0 0.0
    %2342 = vmatprep.subr.mxu0 0.0
    %2343 = vmatpush2.msra.mxu0 0.0
    %2344 = vmatprep.subr.mxu0 0.0
    %2345 = vmatpush2.msra.mxu0 0.0
    %2346 = vmatprep.subr.mxu0 0.0
    %2347 = vmatpush2.msra.mxu0 0.0
    %2348 = vmatprep.subr.mxu0 0.0
    %2349 = vmatpush2.msra.mxu0 0.0
    %2350 = vmatprep.subr.mxu0 0.0
    %2351 = vmatpush2.msra.mxu0 0.0
    %2352 = vmatprep.subr.mxu0 0.0
    %2353 = vmatpush2.msra.mxu0 0.0
    %2354 = vmatprep.mubr.f32.mxu0 0.0
    %2355 = vmatmul.mubr.f32.gmra.mxu0 %v2288
    %v2356 = vpop.f32.mrf.mxu0
    %v2357 = vadd.f32 0.0, %v2356
    %v2358 = vpop.f32.mrf.mxu0
    %2359 = vdwg.mxu0
    %2360 = vrot.lane.b32.xlu0 %v195, 80
    %v2361 = vpop.permute.xlu0 %2360
    %v2364 = vsel %vm607, %v2283, 0
    %2366 = vmatprep.subr.mxu0 0.0
    %2367 = vmatpush1.msra.mxu0 0.0
    %2368 = vmatprep.subr.mxu0 0.0
    %2369 = vmatpush1.msra.mxu0 0.0
    %2370 = vmatprep.subr.mxu0 0.0
    %2371 = vmatpush1.msra.mxu0 0.0
    %2372 = vmatprep.subr.mxu0 0.0
    %2373 = vmatpush1.msra.mxu0 0.0
    %2374 = vmatprep.subr.mxu0 0.0
    %2375 = vmatpush1.msra.mxu0 0.0
    %2376 = vmatprep.subr.mxu0 0.0
    %2377 = vmatpush1.msra.mxu0 0.0
    %2378 = vmatprep.subr.mxu0 0.0
    %2379 = vmatpush1.msra.mxu0 0.0
    %2380 = vmatprep.subr.mxu0 0.0
    %2381 = vmatpush1.msra.mxu0 0.0
    %2382 = vmatprep.subr.mxu0 0.0
    %2383 = vmatpush1.msra.mxu0 0.0
    %2384 = vmatprep.subr.mxu0 0.0
    %2385 = vmatpush1.msra.mxu0 0.0
    %2386 = vmatprep.subr.mxu0 0.0
    %2387 = vmatpush1.msra.mxu0 0.0
    %2388 = vmatprep.subr.mxu0 0.0
    %2389 = vmatpush1.msra.mxu0 0.0
    %2390 = vmatprep.subr.mxu0 0.0
    %2391 = vmatpush1.msra.mxu0 0.0
    %2392 = vmatprep.subr.mxu0 0.0
    %2393 = vmatpush1.msra.mxu0 0.0
    %2394 = vmatprep.subr.mxu0 0.0
    %2395 = vmatpush1.msra.mxu0 0.0
    %2396 = vmatprep.subr.mxu0 0.0
    %2397 = vmatpush1.msra.mxu0 %v2361
    %2398 = vmatprep.subr.mxu0 0.0
    %2399 = vmatpush2.msra.mxu0 0.0
    %2400 = vmatprep.subr.mxu0 0.0
    %2401 = vmatpush2.msra.mxu0 0.0
    %2402 = vmatprep.subr.mxu0 0.0
    %2403 = vmatpush2.msra.mxu0 0.0
    %2404 = vmatprep.subr.mxu0 0.0
    %2405 = vmatpush2.msra.mxu0 0.0
    %2406 = vmatprep.subr.mxu0 0.0
    %2407 = vmatpush2.msra.mxu0 0.0
    %2408 = vmatprep.subr.mxu0 0.0
    %2409 = vmatpush2.msra.mxu0 0.0
    %2410 = vmatprep.subr.mxu0 0.0
    %2411 = vmatpush2.msra.mxu0 0.0
    %2412 = vmatprep.subr.mxu0 0.0
    %2413 = vmatpush2.msra.mxu0 0.0
    %2414 = vmatprep.subr.mxu0 0.0
    %2415 = vmatpush2.msra.mxu0 0.0
    %2416 = vmatprep.subr.mxu0 0.0
    %2417 = vmatpush2.msra.mxu0 0.0
    %2418 = vmatprep.subr.mxu0 0.0
    %2419 = vmatpush2.msra.mxu0 0.0
    %2420 = vmatprep.subr.mxu0 0.0
    %2421 = vmatpush2.msra.mxu0 0.0
    %2422 = vmatprep.subr.mxu0 0.0
    %2423 = vmatpush2.msra.mxu0 0.0
    %2424 = vmatprep.subr.mxu0 0.0
    %2425 = vmatpush2.msra.mxu0 0.0
    %2426 = vmatprep.subr.mxu0 0.0
    %2427 = vmatpush2.msra.mxu0 0.0
    %2428 = vmatprep.subr.mxu0 0.0
    %2429 = vmatpush2.msra.mxu0 0.0
    %2430 = vmatprep.mubr.f32.mxu0 0.0
    %2431 = vmatmul.mubr.f32.gmra.mxu0 %v2364
    %v2432 = vpop.f32.mrf.mxu0
    %v2433 = vadd.f32 0.0, %v2432
    %v2434 = vpop.f32.mrf.mxu0
    %2435 = vdwg.mxu0
    %v2438 = vrot.slane %v703, 1
    %v2439 = vrot.slane %v779, 1
    %2440 = vrot.lane.b32.xlu0 %v2438, 16
    %v2441 = vpop.permute.xlu0 %2440
    %2442 = vrot.lane.b32.xlu0 %v2439, 16
    %v2443 = vpop.permute.xlu0 %2442
    %v2446 = vsel %vm452, %v703, %v2441
    %v2447 = vsel %vm452, %v779, %v2443
    %v2450 = vrot.slane %v1365, 1
    %v2451 = vrot.slane %v1441, 1
    %2452 = vrot.lane.b32.xlu0 %v2450, 16
    %v2453 = vpop.permute.xlu0 %2452
    %2454 = vrot.lane.b32.xlu0 %v2451, 16
    %v2455 = vpop.permute.xlu0 %2454
    %v2458 = vsel %vm452, %v1365, %v2453
    %v2459 = vsel %vm452, %v1441, %v2455
    %v2462 = vrot.slane %v2446, 1
    %v2463 = vrot.slane %v2447, 1
    %v2466 = vrot.slane %v2446, 2
    %v2467 = vrot.slane %v2447, 2
    %v2470 = vrot.slane %v2446, 3
    %v2471 = vrot.slane %v2447, 3
    %v2476 = vrot.slane %v2458, 4
    %v2477 = vrot.slane %v2459, 4
    %v2480 = vrot.slane %v2458, 5
    %v2481 = vrot.slane %v2459, 5
    %v2484 = vrot.slane %v2458, 6
    %v2485 = vrot.slane %v2459, 6
    %v2488 = vrot.slane %v2458, 7
    %v2489 = vrot.slane %v2459, 7
    %vm2492 = vcmask 1040384
    %v2493 = vsel %vm2492, %v2446, %v2462
    %v2494 = vsel %vm2492, %v2447, %v2463
    %vm2495 = vcmask 1041408
    %v2496 = vsel %vm2495, %v2493, %v2466
    %v2497 = vsel %vm2495, %v2494, %v2467
    %vm2498 = vcmask 1042432
    %v2499 = vsel %vm2498, %v2496, %v2470
    %v2500 = vsel %vm2498, %v2497, %v2471
    %vm2501 = vcmask 1043456
    %v2502 = vsel %vm2501, %v2499, %v2476
    %v2503 = vsel %vm2501, %v2500, %v2477
    %vm2504 = vcmask 1044480
    %v2505 = vsel %vm2504, %v2502, %v2480
    %v2506 = vsel %vm2504, %v2503, %v2481
    %vm2507 = vcmask 1045504
    %v2508 = vsel %vm2507, %v2505, %v2484
    %v2509 = vsel %vm2507, %v2506, %v2485
    %vm2510 = vcmask 1046528
    %v2511 = vsel %vm2510, %v2508, %v2488
    %v2512 = vsel %vm2510, %v2509, %v2489
    %v2515 = vrot.slane %v2025, 1
    %v2516 = vrot.slane %v2101, 1
    %2517 = vrot.lane.b32.xlu0 %v2515, 16
    %v2518 = vpop.permute.xlu0 %2517
    %2519 = vrot.lane.b32.xlu0 %v2516, 16
    %v2520 = vpop.permute.xlu0 %2519
    %v2523 = vsel %vm452, %v2025, %v2518
    %v2524 = vsel %vm452, %v2101, %v2520
    %v2527 = vrot.slane %v1035, 1
    %v2528 = vrot.slane %v1111, 1
    %2529 = vrot.lane.b32.xlu0 %v2527, 16
    %v2530 = vpop.permute.xlu0 %2529
    %2531 = vrot.lane.b32.xlu0 %v2528, 16
    %v2532 = vpop.permute.xlu0 %2531
    %v2535 = vsel %vm452, %v1035, %v2530
    %v2536 = vsel %vm452, %v1111, %v2532
    %v2539 = vrot.slane %v2523, 1
    %v2540 = vrot.slane %v2524, 1
    %v2543 = vrot.slane %v2523, 2
    %v2544 = vrot.slane %v2524, 2
    %v2547 = vrot.slane %v2523, 3
    %v2548 = vrot.slane %v2524, 3
    %v2553 = vrot.slane %v2535, 4
    %v2554 = vrot.slane %v2536, 4
    %v2557 = vrot.slane %v2535, 5
    %v2558 = vrot.slane %v2536, 5
    %v2561 = vrot.slane %v2535, 6
    %v2562 = vrot.slane %v2536, 6
    %v2565 = vrot.slane %v2535, 7
    %v2566 = vrot.slane %v2536, 7
    %v2569 = vsel %vm2492, %v2523, %v2539
    %v2570 = vsel %vm2492, %v2524, %v2540
    %v2571 = vsel %vm2495, %v2569, %v2543
    %v2572 = vsel %vm2495, %v2570, %v2544
    %v2573 = vsel %vm2498, %v2571, %v2547
    %v2574 = vsel %vm2498, %v2572, %v2548
    %v2575 = vsel %vm2501, %v2573, %v2553
    %v2576 = vsel %vm2501, %v2574, %v2554
    %v2577 = vsel %vm2504, %v2575, %v2557
    %v2578 = vsel %vm2504, %v2576, %v2558
    %v2579 = vsel %vm2507, %v2577, %v2561
    %v2580 = vsel %vm2507, %v2578, %v2562
    %v2581 = vsel %vm2510, %v2579, %v2565
    %v2582 = vsel %vm2510, %v2580, %v2566
    %v2585 = vrot.slane %v1697, 1
    %v2586 = vrot.slane %v1773, 1
    %2587 = vrot.lane.b32.xlu0 %v2585, 16
    %v2588 = vpop.permute.xlu0 %2587
    %2589 = vrot.lane.b32.xlu0 %v2586, 16
    %v2590 = vpop.permute.xlu0 %2589
    %v2593 = vsel %vm452, %v1697, %v2588
    %v2594 = vsel %vm452, %v1773, %v2590
    %v2597 = vrot.slane %v2357, 1
    %v2598 = vrot.slane %v2433, 1
    %2599 = vrot.lane.b32.xlu0 %v2597, 16
    %v2600 = vpop.permute.xlu0 %2599
    %2601 = vrot.lane.b32.xlu0 %v2598, 16
    %v2602 = vpop.permute.xlu0 %2601
    %v2605 = vsel %vm452, %v2357, %v2600
    %v2606 = vsel %vm452, %v2433, %v2602
    %v2609 = vrot.slane %v2593, 1
    %v2610 = vrot.slane %v2594, 1
    %v2613 = vrot.slane %v2593, 2
    %v2614 = vrot.slane %v2594, 2
    %v2617 = vrot.slane %v2593, 3
    %v2618 = vrot.slane %v2594, 3
    %v2623 = vrot.slane %v2605, 4
    %v2624 = vrot.slane %v2606, 4
    %v2627 = vrot.slane %v2605, 5
    %v2628 = vrot.slane %v2606, 5
    %v2631 = vrot.slane %v2605, 6
    %v2632 = vrot.slane %v2606, 6
    %v2635 = vrot.slane %v2605, 7
    %v2636 = vrot.slane %v2606, 7
    %v2639 = vsel %vm2492, %v2593, %v2609
    %v2640 = vsel %vm2492, %v2594, %v2610
    %v2641 = vsel %vm2495, %v2639, %v2613
    %v2642 = vsel %vm2495, %v2640, %v2614
    %v2643 = vsel %vm2498, %v2641, %v2617
    %v2644 = vsel %vm2498, %v2642, %v2618
    %v2645 = vsel %vm2501, %v2643, %v2623
    %v2646 = vsel %vm2501, %v2644, %v2624
    %v2647 = vsel %vm2504, %v2645, %v2627
    %v2648 = vsel %vm2504, %v2646, %v2628
    %v2649 = vsel %vm2507, %v2647, %v2631
    %v2650 = vsel %vm2507, %v2648, %v2632
    %v2651 = vsel %vm2510, %v2649, %v2635
    %v2652 = vsel %vm2510, %v2650, %v2636
    %v2653 = vld [vmem:[#allocation6] sm:$0xff]
    %v2654 = vld [vmem:[#allocation6 + $0x8] sm:$0xff]
    %v2655 = vld [vmem:[#allocation6 + $0x10] sm:$0xff]
    %v2656 = vld [vmem:[#allocation6 + $0x18] sm:$0xff]
    %v2657 = vld [vmem:[#allocation6 + $0x20] sm:$0xff]
    %v2658 = vld [vmem:[#allocation6 + $0x28] sm:$0xff]
    %v2659 = vld [vmem:[#allocation6 + $0x30] sm:$0xff]
    %v2660 = vld [vmem:[#allocation6 + $0x38] sm:$0xff]
    %v2661 = vld [vmem:[#allocation6 + $0x40] sm:$0xff]
    %v2662 = vld [vmem:[#allocation6 + $0x48] sm:$0xff]
    %v2663 = vld [vmem:[#allocation6 + $0x50] sm:$0xff]
    %v2664 = vld [vmem:[#allocation6 + $0x58] sm:$0xff]
    %v2666 = vsel %vm113, %v2511, 0
    %v2669 = vsel %vm113, %v2512, 0
    %2671 = vmatprep.subr.mxu0 0.0
    %2672 = vmatpush1.msra.mxu0 0.0
    %2673 = vmatprep.subr.mxu0 0.0
    %2674 = vmatpush1.msra.mxu0 0.0
    %2675 = vmatprep.subr.mxu0 0.0
    %2676 = vmatpush1.msra.mxu0 0.0
    %2677 = vmatprep.subr.mxu0 0.0
    %2678 = vmatpush1.msra.mxu0 0.0
    %2679 = vmatprep.subr.mxu0 0.0
    %2680 = vmatpush1.msra.mxu0 0.0
    %2681 = vmatprep.subr.mxu0 0.0
    %2682 = vmatpush1.msra.mxu0 0.0
    %2683 = vmatprep.subr.mxu0 0.0
    %2684 = vmatpush1.msra.mxu0 0.0
    %2685 = vmatprep.subr.mxu0 0.0
    %2686 = vmatpush1.msra.mxu0 0.0
    %2687 = vmatprep.subr.mxu0 0.0
    %2688 = vmatpush1.msra.mxu0 0.0
    %2689 = vmatprep.subr.mxu0 0.0
    %2690 = vmatpush1.msra.mxu0 0.0
    %2691 = vmatprep.subr.mxu0 0.0
    %2692 = vmatpush1.msra.mxu0 0.0
    %2693 = vmatprep.subr.mxu0 0.0
    %2694 = vmatpush1.msra.mxu0 0.0
    %2695 = vmatprep.subr.mxu0 0.0
    %2696 = vmatpush1.msra.mxu0 %v2656
    %2697 = vmatprep.subr.mxu0 0.0
    %2698 = vmatpush1.msra.mxu0 %v2655
    %2699 = vmatprep.subr.mxu0 0.0
    %2700 = vmatpush1.msra.mxu0 %v2654
    %2701 = vmatprep.subr.mxu0 0.0
    %2702 = vmatpush1.msra.mxu0 %v2653
    %2703 = vmatprep.subr.mxu0 0.0
    %2704 = vmatpush2.msra.mxu0 0.0
    %2705 = vmatprep.subr.mxu0 0.0
    %2706 = vmatpush2.msra.mxu0 0.0
    %2707 = vmatprep.subr.mxu0 0.0
    %2708 = vmatpush2.msra.mxu0 0.0
    %2709 = vmatprep.subr.mxu0 0.0
    %2710 = vmatpush2.msra.mxu0 0.0
    %2711 = vmatprep.subr.mxu0 0.0
    %2712 = vmatpush2.msra.mxu0 0.0
    %2713 = vmatprep.subr.mxu0 0.0
    %2714 = vmatpush2.msra.mxu0 0.0
    %2715 = vmatprep.subr.mxu0 0.0
    %2716 = vmatpush2.msra.mxu0 0.0
    %2717 = vmatprep.subr.mxu0 0.0
    %2718 = vmatpush2.msra.mxu0 0.0
    %2719 = vmatprep.subr.mxu0 0.0
    %2720 = vmatpush2.msra.mxu0 0.0
    %2721 = vmatprep.subr.mxu0 0.0
    %2722 = vmatpush2.msra.mxu0 0.0
    %2723 = vmatprep.subr.mxu0 0.0
    %2724 = vmatpush2.msra.mxu0 0.0
    %2725 = vmatprep.subr.mxu0 0.0
    %2726 = vmatpush2.msra.mxu0 0.0
    %2727 = vmatprep.subr.mxu0 0.0
    %2728 = vmatpush2.msra.mxu0 0.0
    %2729 = vmatprep.subr.mxu0 0.0
    %2730 = vmatpush2.msra.mxu0 0.0
    %2731 = vmatprep.subr.mxu0 0.0
    %2732 = vmatpush2.msra.mxu0 0.0
    %2733 = vmatprep.subr.mxu0 0.0
    %2734 = vmatpush2.msra.mxu0 0.0
    %2735 = vmatprep.mubr.f32.mxu0 0.0
    %2736 = vmatmul.mubr.f32.gmra.mxu0 %v2666
    %v2737 = vpop.f32.mrf.mxu0
    %v2738 = vadd.f32 0.0, %v2737
    %v2739 = vpop.f32.mrf.mxu0
    %2740 = vmatprep.mubr.f32.mxu0 0.0
    %2741 = vmatmul.mubr.f32.gmra.mxu0 %v2669
    %v2742 = vpop.f32.mrf.mxu0
    %v2743 = vadd.f32 0.0, %v2742
    %v2744 = vpop.f32.mrf.mxu0
    %2745 = vdwg.mxu0
    %v2747 = vsel %vm113, %v2581, 0
    %v2750 = vsel %vm113, %v2582, 0
    %2752 = vmatprep.subr.mxu0 0.0
    %2753 = vmatpush1.msra.mxu0 0.0
    %2754 = vmatprep.subr.mxu0 0.0
    %2755 = vmatpush1.msra.mxu0 0.0
    %2756 = vmatprep.subr.mxu0 0.0
    %2757 = vmatpush1.msra.mxu0 0.0
    %2758 = vmatprep.subr.mxu0 0.0
    %2759 = vmatpush1.msra.mxu0 0.0
    %2760 = vmatprep.subr.mxu0 0.0
    %2761 = vmatpush1.msra.mxu0 0.0
    %2762 = vmatprep.subr.mxu0 0.0
    %2763 = vmatpush1.msra.mxu0 0.0
    %2764 = vmatprep.subr.mxu0 0.0
    %2765 = vmatpush1.msra.mxu0 0.0
    %2766 = vmatprep.subr.mxu0 0.0
    %2767 = vmatpush1.msra.mxu0 0.0
    %2768 = vmatprep.subr.mxu0 0.0
    %2769 = vmatpush1.msra.mxu0 0.0
    %2770 = vmatprep.subr.mxu0 0.0
    %2771 = vmatpush1.msra.mxu0 0.0
    %2772 = vmatprep.subr.mxu0 0.0
    %2773 = vmatpush1.msra.mxu0 0.0
    %2774 = vmatprep.subr.mxu0 0.0
    %2775 = vmatpush1.msra.mxu0 0.0
    %2776 = vmatprep.subr.mxu0 0.0
    %2777 = vmatpush1.msra.mxu0 %v2660
    %2778 = vmatprep.subr.mxu0 0.0
    %2779 = vmatpush1.msra.mxu0 %v2659
    %2780 = vmatprep.subr.mxu0 0.0
    %2781 = vmatpush1.msra.mxu0 %v2658
    %2782 = vmatprep.subr.mxu0 0.0
    %2783 = vmatpush1.msra.mxu0 %v2657
    %2784 = vmatprep.subr.mxu0 0.0
    %2785 = vmatpush2.msra.mxu0 0.0
    %2786 = vmatprep.subr.mxu0 0.0
    %2787 = vmatpush2.msra.mxu0 0.0
    %2788 = vmatprep.subr.mxu0 0.0
    %2789 = vmatpush2.msra.mxu0 0.0
    %2790 = vmatprep.subr.mxu0 0.0
    %2791 = vmatpush2.msra.mxu0 0.0
    %2792 = vmatprep.subr.mxu0 0.0
    %2793 = vmatpush2.msra.mxu0 0.0
    %2794 = vmatprep.subr.mxu0 0.0
    %2795 = vmatpush2.msra.mxu0 0.0
    %2796 = vmatprep.subr.mxu0 0.0
    %2797 = vmatpush2.msra.mxu0 0.0
    %2798 = vmatprep.subr.mxu0 0.0
    %2799 = vmatpush2.msra.mxu0 0.0
    %2800 = vmatprep.subr.mxu0 0.0
    %2801 = vmatpush2.msra.mxu0 0.0
    %2802 = vmatprep.subr.mxu0 0.0
    %2803 = vmatpush2.msra.mxu0 0.0
    %2804 = vmatprep.subr.mxu0 0.0
    %2805 = vmatpush2.msra.mxu0 0.0
    %2806 = vmatprep.subr.mxu0 0.0
    %2807 = vmatpush2.msra.mxu0 0.0
    %2808 = vmatprep.subr.mxu0 0.0
    %2809 = vmatpush2.msra.mxu0 0.0
    %2810 = vmatprep.subr.mxu0 0.0
    %2811 = vmatpush2.msra.mxu0 0.0
    %2812 = vmatprep.subr.mxu0 0.0
    %2813 = vmatpush2.msra.mxu0 0.0
    %2814 = vmatprep.subr.mxu0 0.0
    %2815 = vmatpush2.msra.mxu0 0.0
    %2816 = vmatprep.mubr.f32.mxu0 0.0
    %2817 = vmatmul.mubr.f32.gmra.mxu0 %v2747
    %v2818 = vpop.f32.mrf.mxu0
    %v2819 = vadd.f32 0.0, %v2818
    %v2820 = vpop.f32.mrf.mxu0
    %2821 = vmatprep.mubr.f32.mxu0 0.0
    %2822 = vmatmul.mubr.f32.gmra.mxu0 %v2750
    %v2823 = vpop.f32.mrf.mxu0
    %v2824 = vadd.f32 0.0, %v2823
    %v2825 = vpop.f32.mrf.mxu0
    %2826 = vdwg.mxu0
    %v2828 = vsel %vm113, %v2651, 0
    %v2831 = vsel %vm113, %v2652, 0
    %2833 = vmatprep.subr.mxu0 0.0
    %2834 = vmatpush1.msra.mxu0 0.0
    %2835 = vmatprep.subr.mxu0 0.0
    %2836 = vmatpush1.msra.mxu0 0.0
    %2837 = vmatprep.subr.mxu0 0.0
    %2838 = vmatpush1.msra.mxu0 0.0
    %2839 = vmatprep.subr.mxu0 0.0
    %2840 = vmatpush1.msra.mxu0 0.0
    %2841 = vmatprep.subr.mxu0 0.0
    %2842 = vmatpush1.msra.mxu0 0.0
    %2843 = vmatprep.subr.mxu0 0.0
    %2844 = vmatpush1.msra.mxu0 0.0
    %2845 = vmatprep.subr.mxu0 0.0
    %2846 = vmatpush1.msra.mxu0 0.0
    %2847 = vmatprep.subr.mxu0 0.0
    %2848 = vmatpush1.msra.mxu0 0.0
    %2849 = vmatprep.subr.mxu0 0.0
    %2850 = vmatpush1.msra.mxu0 0.0
    %2851 = vmatprep.subr.mxu0 0.0
    %2852 = vmatpush1.msra.mxu0 0.0
    %2853 = vmatprep.subr.mxu0 0.0
    %2854 = vmatpush1.msra.mxu0 0.0
    %2855 = vmatprep.subr.mxu0 0.0
    %2856 = vmatpush1.msra.mxu0 0.0
    %2857 = vmatprep.subr.mxu0 0.0
    %2858 = vmatpush1.msra.mxu0 %v2664
    %2859 = vmatprep.subr.mxu0 0.0
    %2860 = vmatpush1.msra.mxu0 %v2663
    %2861 = vmatprep.subr.mxu0 0.0
    %2862 = vmatpush1.msra.mxu0 %v2662
    %2863 = vmatprep.subr.mxu0 0.0
    %2864 = vmatpush1.msra.mxu0 %v2661
    %2865 = vmatprep.subr.mxu0 0.0
    %2866 = vmatpush2.msra.mxu0 0.0
    %2867 = vmatprep.subr.mxu0 0.0
    %2868 = vmatpush2.msra.mxu0 0.0
    %2869 = vmatprep.subr.mxu0 0.0
    %2870 = vmatpush2.msra.mxu0 0.0
    %2871 = vmatprep.subr.mxu0 0.0
    %2872 = vmatpush2.msra.mxu0 0.0
    %2873 = vmatprep.subr.mxu0 0.0
    %2874 = vmatpush2.msra.mxu0 0.0
    %2875 = vmatprep.subr.mxu0 0.0
    %2876 = vmatpush2.msra.mxu0 0.0
    %2877 = vmatprep.subr.mxu0 0.0
    %2878 = vmatpush2.msra.mxu0 0.0
    %2879 = vmatprep.subr.mxu0 0.0
    %2880 = vmatpush2.msra.mxu0 0.0
    %2881 = vmatprep.subr.mxu0 0.0
    %2882 = vmatpush2.msra.mxu0 0.0
    %2883 = vmatprep.subr.mxu0 0.0
    %2884 = vmatpush2.msra.mxu0 0.0
    %2885 = vmatprep.subr.mxu0 0.0
    %2886 = vmatpush2.msra.mxu0 0.0
    %2887 = vmatprep.subr.mxu0 0.0
    %2888 = vmatpush2.msra.mxu0 0.0
    %2889 = vmatprep.subr.mxu0 0.0
    %2890 = vmatpush2.msra.mxu0 0.0
    %2891 = vmatprep.subr.mxu0 0.0
    %2892 = vmatpush2.msra.mxu0 0.0
    %2893 = vmatprep.subr.mxu0 0.0
    %2894 = vmatpush2.msra.mxu0 0.0
    %2895 = vmatprep.subr.mxu0 0.0
    %2896 = vmatpush2.msra.mxu0 0.0
    %2897 = vmatprep.mubr.f32.mxu0 0.0
    %2898 = vmatmul.mubr.f32.gmra.mxu0 %v2828
    %v2899 = vpop.f32.mrf.mxu0
    %v2900 = vadd.f32 0.0, %v2899
    %v2901 = vpop.f32.mrf.mxu0
    %2902 = vmatprep.mubr.f32.mxu0 0.0
    %2903 = vmatmul.mubr.f32.gmra.mxu0 %v2831
    %v2904 = vpop.f32.mrf.mxu0
    %v2905 = vadd.f32 0.0, %v2904
    %v2906 = vpop.f32.mrf.mxu0
    %2907 = vdwg.mxu0
    %v2908 = vadd.f32 %v97, %v2738
    %v2909 = vadd.f32 %v98, %v2743
    %v2910 = vadd.f32 %v99, %v2819
    %v2911 = vadd.f32 %v100, %v2824
    %v2912 = vadd.f32 %v101, %v2900
    %v2913 = vadd.f32 %v102, %v2905
    %v2914 = vsel %vm113, %v2908, 0.0
    %2915 = vadd.xlane.f32.xlu0 %v2914
    %v2916 = vpop.xlane.xlu0 %2915
    %v2917 = vsel %vm113, %v2909, 0.0
    %2918 = vadd.xlane.f32.xlu0 %v2917
    %v2919 = vpop.xlane.xlu0 %2918
    %v2920 = vsel %vm113, %v2910, 0.0
    %2921 = vadd.xlane.f32.xlu0 %v2920
    %v2922 = vpop.xlane.xlu0 %2921
    %v2923 = vsel %vm113, %v2911, 0.0
    %2924 = vadd.xlane.f32.xlu0 %v2923
    %v2925 = vpop.xlane.xlu0 %2924
    %v2926 = vsel %vm113, %v2912, 0.0
    %2927 = vadd.xlane.f32.xlu0 %v2926
    %v2928 = vpop.xlane.xlu0 %2927
    %v2929 = vsel %vm113, %v2913, 0.0
    %2930 = vadd.xlane.f32.xlu0 %v2929
    %v2931 = vpop.xlane.xlu0 %2930
    %v2932 = vrcp.pop 32.0
    %v2933 = vmul.f32 %v2916, %v2932
    %v2934 = vmul.f32 %v2919, %v2932
    %v2935 = vmul.f32 %v2922, %v2932
    %v2936 = vmul.f32 %v2925, %v2932
    %v2937 = vmul.f32 %v2928, %v2932
    %v2938 = vmul.f32 %v2931, %v2932
    %v2939 = vsub.f32 %v2908, %v2933
    %v2940 = vsub.f32 %v2909, %v2934
    %v2941 = vsub.f32 %v2910, %v2935
    %v2942 = vsub.f32 %v2911, %v2936
    %v2943 = vsub.f32 %v2912, %v2937
    %v2944 = vsub.f32 %v2913, %v2938
    %v2945 = vmul.f32 %v2939, %v2939
    %v2946 = vmul.f32 %v2940, %v2940
    %v2947 = vmul.f32 %v2941, %v2941
    %v2948 = vmul.f32 %v2942, %v2942
    %v2949 = vmul.f32 %v2943, %v2943
    %v2950 = vmul.f32 %v2944, %v2944
    %v2951 = vsel %vm113, %v2945, 0.0
    %2952 = vadd.xlane.f32.xlu0 %v2951
    %v2953 = vpop.xlane.xlu0 %2952
    %v2954 = vsel %vm113, %v2946, 0.0
    %2955 = vadd.xlane.f32.xlu0 %v2954
    %v2956 = vpop.xlane.xlu0 %2955
    %v2957 = vsel %vm113, %v2947, 0.0
    %2958 = vadd.xlane.f32.xlu0 %v2957
    %v2959 = vpop.xlane.xlu0 %2958
    %v2960 = vsel %vm113, %v2948, 0.0
    %2961 = vadd.xlane.f32.xlu0 %v2960
    %v2962 = vpop.xlane.xlu0 %2961
    %v2963 = vsel %vm113, %v2949, 0.0
    %2964 = vadd.xlane.f32.xlu0 %v2963
    %v2965 = vpop.xlane.xlu0 %2964
    %v2966 = vsel %vm113, %v2950, 0.0
    %2967 = vadd.xlane.f32.xlu0 %v2966
    %v2968 = vpop.xlane.xlu0 %2967
    %v2969 = vmul.f32 %v2953, %v2932
    %v2970 = vmul.f32 %v2956, %v2932
    %v2971 = vmul.f32 %v2959, %v2932
    %v2972 = vmul.f32 %v2962, %v2932
    %v2973 = vmul.f32 %v2965, %v2932
    %v2974 = vmul.f32 %v2968, %v2932
    %v2975 = vadd.f32 %v2969, 1e-05
    %v2976 = vadd.f32 %v2970, 1e-05
    %v2977 = vadd.f32 %v2971, 1e-05
    %v2978 = vadd.f32 %v2972, 1e-05
    %v2979 = vadd.f32 %v2973, 1e-05
    %v2980 = vadd.f32 %v2974, 1e-05
    %v2981 = vrsqrt.pop %v2975
    %v2982 = vrsqrt.pop %v2976
    %v2983 = vrsqrt.pop %v2977
    %v2984 = vrsqrt.pop %v2978
    %v2985 = vrsqrt.pop %v2979
    %v2986 = vrsqrt.pop %v2980
    %v2987 = vmul.f32 %v2939, %v2981
    %v2988 = vmul.f32 %v2940, %v2982
    %v2989 = vmul.f32 %v2941, %v2983
    %v2990 = vmul.f32 %v2942, %v2984
    %v2991 = vmul.f32 %v2943, %v2985
    %v2992 = vmul.f32 %v2944, %v2986
    %v2993 = vld [vmem:[%s5] sm:$0x1]
    %v2995 = vlaneseq
    %v2996 = vshrl.u32 %v2995, 7
    %v2997 = vsub.s32 0, %v2996
    %v2998 = vrot.slane %v2993, %v2997
    %v3000 = vmul.f32 %v2987, %v2998
    %v3001 = vmul.f32 %v2988, %v2998
    %v3002 = vmul.f32 %v2989, %v2998
    %v3003 = vmul.f32 %v2990, %v2998
    %v3004 = vmul.f32 %v2991, %v2998
    %v3005 = vmul.f32 %v2992, %v2998
    %v3006 = vld [vmem:[#allocation7] sm:$0xff]
    %v3007 = vld [vmem:[#allocation7 + $0x8] sm:$0xff]
    %v3008 = vld [vmem:[#allocation7 + $0x10] sm:$0xff]
    %v3009 = vld [vmem:[#allocation7 + $0x18] sm:$0xff]
    %v3011 = vsel %vm113, %v3000, 0
    %v3014 = vsel %vm113, %v3001, 0
    %v3017 = vsel %vm113, %v3002, 0
    %v3020 = vsel %vm113, %v3003, 0
    %v3023 = vsel %vm113, %v3004, 0
    %v3026 = vsel %vm113, %v3005, 0
    %3028 = vmatprep.subr.mxu0 0.0
    %3029 = vmatpush1.msra.mxu0 0.0
    %3030 = vmatprep.subr.mxu0 0.0
    %3031 = vmatpush1.msra.mxu0 0.0
    %3032 = vmatprep.subr.mxu0 0.0
    %3033 = vmatpush1.msra.mxu0 0.0
    %3034 = vmatprep.subr.mxu0 0.0
    %3035 = vmatpush1.msra.mxu0 0.0
    %3036 = vmatprep.subr.mxu0 0.0
    %3037 = vmatpush1.msra.mxu0 0.0
    %3038 = vmatprep.subr.mxu0 0.0
    %3039 = vmatpush1.msra.mxu0 0.0
    %3040 = vmatprep.subr.mxu0 0.0
    %3041 = vmatpush1.msra.mxu0 0.0
    %3042 = vmatprep.subr.mxu0 0.0
    %3043 = vmatpush1.msra.mxu0 0.0
    %3044 = vmatprep.subr.mxu0 0.0
    %3045 = vmatpush1.msra.mxu0 0.0
    %3046 = vmatprep.subr.mxu0 0.0
    %3047 = vmatpush1.msra.mxu0 0.0
    %3048 = vmatprep.subr.mxu0 0.0
    %3049 = vmatpush1.msra.mxu0 0.0
    %3050 = vmatprep.subr.mxu0 0.0
    %3051 = vmatpush1.msra.mxu0 0.0
    %3052 = vmatprep.subr.mxu0 0.0
    %3053 = vmatpush1.msra.mxu0 %v3009
    %3054 = vmatprep.subr.mxu0 0.0
    %3055 = vmatpush1.msra.mxu0 %v3008
    %3056 = vmatprep.subr.mxu0 0.0
    %3057 = vmatpush1.msra.mxu0 %v3007
    %3058 = vmatprep.subr.mxu0 0.0
    %3059 = vmatpush1.msra.mxu0 %v3006
    %3060 = vmatprep.subr.mxu0 0.0
    %3061 = vmatpush2.msra.mxu0 0.0
    %3062 = vmatprep.subr.mxu0 0.0
    %3063 = vmatpush2.msra.mxu0 0.0
    %3064 = vmatprep.subr.mxu0 0.0
    %3065 = vmatpush2.msra.mxu0 0.0
    %3066 = vmatprep.subr.mxu0 0.0
    %3067 = vmatpush2.msra.mxu0 0.0
    %3068 = vmatprep.subr.mxu0 0.0
    %3069 = vmatpush2.msra.mxu0 0.0
    %3070 = vmatprep.subr.mxu0 0.0
    %3071 = vmatpush2.msra.mxu0 0.0
    %3072 = vmatprep.subr.mxu0 0.0
    %3073 = vmatpush2.msra.mxu0 0.0
    %3074 = vmatprep.subr.mxu0 0.0
    %3075 = vmatpush2.msra.mxu0 0.0
    %3076 = vmatprep.subr.mxu0 0.0
    %3077 = vmatpush2.msra.mxu0 0.0
    %3078 = vmatprep.subr.mxu0 0.0
    %3079 = vmatpush2.msra.mxu0 0.0
    %3080 = vmatprep.subr.mxu0 0.0
    %3081 = vmatpush2.msra.mxu0 0.0
    %3082 = vmatprep.subr.mxu0 0.0
    %3083 = vmatpush2.msra.mxu0 0.0
    %3084 = vmatprep.subr.mxu0 0.0
    %3085 = vmatpush2.msra.mxu0 0.0
    %3086 = vmatprep.subr.mxu0 0.0
    %3087 = vmatpush2.msra.mxu0 0.0
    %3088 = vmatprep.subr.mxu0 0.0
    %3089 = vmatpush2.msra.mxu0 0.0
    %3090 = vmatprep.subr.mxu0 0.0
    %3091 = vmatpush2.msra.mxu0 0.0
    %3092 = vmatprep.mubr.f32.mxu0 0.0
    %3093 = vmatmul.mubr.f32.gmra.mxu0 %v3011
    %v3094 = vpop.f32.mrf.mxu0
    %v3095 = vadd.f32 0.0, %v3094
    %v3096 = vpop.f32.mrf.mxu0
    %3097 = vmatprep.mubr.f32.mxu0 0.0
    %3098 = vmatmul.mubr.f32.gmra.mxu0 %v3014
    %v3099 = vpop.f32.mrf.mxu0
    %v3100 = vadd.f32 0.0, %v3099
    %v3101 = vpop.f32.mrf.mxu0
    %3102 = vmatprep.mubr.f32.mxu0 0.0
    %3103 = vmatmul.mubr.f32.gmra.mxu0 %v3017
    %v3104 = vpop.f32.mrf.mxu0
    %v3105 = vadd.f32 0.0, %v3104
    %v3106 = vpop.f32.mrf.mxu0
    %3107 = vmatprep.mubr.f32.mxu0 0.0
    %3108 = vmatmul.mubr.f32.gmra.mxu0 %v3020
    %v3109 = vpop.f32.mrf.mxu0
    %v3110 = vadd.f32 0.0, %v3109
    %v3111 = vpop.f32.mrf.mxu0
    %3112 = vmatprep.mubr.f32.mxu0 0.0
    %3113 = vmatmul.mubr.f32.gmra.mxu0 %v3023
    %v3114 = vpop.f32.mrf.mxu0
    %v3115 = vadd.f32 0.0, %v3114
    %v3116 = vpop.f32.mrf.mxu0
    %3117 = vmatprep.mubr.f32.mxu0 0.0
    %3118 = vmatmul.mubr.f32.gmra.mxu0 %v3026
    %v3119 = vpop.f32.mrf.mxu0
    %v3120 = vadd.f32 0.0, %v3119
    %v3121 = vpop.f32.mrf.mxu0
    %3122 = vdwg.mxu0
    %v3123 = vmul.f32 %v3095, 0.5
    %v3124 = vmul.f32 %v3100, 0.5
    %v3125 = vmul.f32 %v3105, 0.5
    %v3126 = vmul.f32 %v3110, 0.5
    %v3127 = vmul.f32 %v3115, 0.5
    %v3128 = vmul.f32 %v3120, 0.5
    %v3129 = vmul.f32 %v3095, 0.70710677
    %v3130 = vmul.f32 %v3100, 0.70710677
    %v3131 = vmul.f32 %v3105, 0.70710677
    %v3132 = vmul.f32 %v3110, 0.70710677
    %v3133 = vmul.f32 %v3115, 0.70710677
    %v3134 = vmul.f32 %v3120, 0.70710677
    %v3135 = verf.f32.pop %v3129
    %v3136 = verf.f32.pop %v3130
    %v3137 = verf.f32.pop %v3131
    %v3138 = verf.f32.pop %v3132
    %v3139 = verf.f32.pop %v3133
    %v3140 = verf.f32.pop %v3134
    %v3141 = vadd.f32 %v3135, 1.0
    %v3142 = vadd.f32 %v3136, 1.0
    %v3143 = vadd.f32 %v3137, 1.0
    %v3144 = vadd.f32 %v3138, 1.0
    %v3145 = vadd.f32 %v3139, 1.0
    %v3146 = vadd.f32 %v3140, 1.0
    %v3147 = vmul.f32 %v3123, %v3141
    %v3148 = vmul.f32 %v3124, %v3142
    %v3149 = vmul.f32 %v3125, %v3143
    %v3150 = vmul.f32 %v3126, %v3144
    %v3151 = vmul.f32 %v3127, %v3145
    %v3152 = vmul.f32 %v3128, %v3146
    %v3153 = vld [vmem:[#allocation9] sm:$0xff]
    %v3154 = vld [vmem:[#allocation9 + $0x8] sm:$0xff]
    %v3155 = vld [vmem:[#allocation9 + $0x10] sm:$0xff]
    %v3156 = vld [vmem:[#allocation9 + $0x18] sm:$0xff]
    %v3158 = vsel %vm113, %v3147, 0
    %v3161 = vsel %vm113, %v3148, 0
    %v3164 = vsel %vm113, %v3149, 0
    %v3167 = vsel %vm113, %v3150, 0
    %v3170 = vsel %vm113, %v3151, 0
    %v3173 = vsel %vm113, %v3152, 0
    %3175 = vmatprep.subr.mxu0 0.0
    %3176 = vmatpush1.msra.mxu0 0.0
    %3177 = vmatprep.subr.mxu0 0.0
    %3178 = vmatpush1.msra.mxu0 0.0
    %3179 = vmatprep.subr.mxu0 0.0
    %3180 = vmatpush1.msra.mxu0 0.0
    %3181 = vmatprep.subr.mxu0 0.0
    %3182 = vmatpush1.msra.mxu0 0.0
    %3183 = vmatprep.subr.mxu0 0.0
    %3184 = vmatpush1.msra.mxu0 0.0
    %3185 = vmatprep.subr.mxu0 0.0
    %3186 = vmatpush1.msra.mxu0 0.0
    %3187 = vmatprep.subr.mxu0 0.0
    %3188 = vmatpush1.msra.mxu0 0.0
    %3189 = vmatprep.subr.mxu0 0.0
    %3190 = vmatpush1.msra.mxu0 0.0
    %3191 = vmatprep.subr.mxu0 0.0
    %3192 = vmatpush1.msra.mxu0 0.0
    %3193 = vmatprep.subr.mxu0 0.0
    %3194 = vmatpush1.msra.mxu0 0.0
    %3195 = vmatprep.subr.mxu0 0.0
    %3196 = vmatpush1.msra.mxu0 0.0
    %3197 = vmatprep.subr.mxu0 0.0
    %3198 = vmatpush1.msra.mxu0 0.0
    %3199 = vmatprep.subr.mxu0 0.0
    %3200 = vmatpush1.msra.mxu0 %v3156
    %3201 = vmatprep.subr.mxu0 0.0
    %3202 = vmatpush1.msra.mxu0 %v3155
    %3203 = vmatprep.subr.mxu0 0.0
    %3204 = vmatpush1.msra.mxu0 %v3154
    %3205 = vmatprep.subr.mxu0 0.0
    %3206 = vmatpush1.msra.mxu0 %v3153
    %3207 = vmatprep.subr.mxu0 0.0
    %3208 = vmatpush2.msra.mxu0 0.0
    %3209 = vmatprep.subr.mxu0 0.0
    %3210 = vmatpush2.msra.mxu0 0.0
    %3211 = vmatprep.subr.mxu0 0.0
    %3212 = vmatpush2.msra.mxu0 0.0
    %3213 = vmatprep.subr.mxu0 0.0
    %3214 = vmatpush2.msra.mxu0 0.0
    %3215 = vmatprep.subr.mxu0 0.0
    %3216 = vmatpush2.msra.mxu0 0.0
    %3217 = vmatprep.subr.mxu0 0.0
    %3218 = vmatpush2.msra.mxu0 0.0
    %3219 = vmatprep.subr.mxu0 0.0
    %3220 = vmatpush2.msra.mxu0 0.0
    %3221 = vmatprep.subr.mxu0 0.0
    %3222 = vmatpush2.msra.mxu0 0.0
    %3223 = vmatprep.subr.mxu0 0.0
    %3224 = vmatpush2.msra.mxu0 0.0
    %3225 = vmatprep.subr.mxu0 0.0
    %3226 = vmatpush2.msra.mxu0 0.0
    %3227 = vmatprep.subr.mxu0 0.0
    %3228 = vmatpush2.msra.mxu0 0.0
    %3229 = vmatprep.subr.mxu0 0.0
    %3230 = vmatpush2.msra.mxu0 0.0
    %3231 = vmatprep.subr.mxu0 0.0
    %3232 = vmatpush2.msra.mxu0 0.0
    %3233 = vmatprep.subr.mxu0 0.0
    %3234 = vmatpush2.msra.mxu0 0.0
    %3235 = vmatprep.subr.mxu0 0.0
    %3236 = vmatpush2.msra.mxu0 0.0
    %3237 = vmatprep.subr.mxu0 0.0
    %3238 = vmatpush2.msra.mxu0 0.0
    %3239 = vmatprep.mubr.f32.mxu0 0.0
    %3240 = vmatmul.mubr.f32.gmra.mxu0 %v3158
    %v3241 = vpop.f32.mrf.mxu0
    %v3242 = vadd.f32 0.0, %v3241
    %v3243 = vpop.f32.mrf.mxu0
    %3244 = vmatprep.mubr.f32.mxu0 0.0
    %3245 = vmatmul.mubr.f32.gmra.mxu0 %v3161
    %v3246 = vpop.f32.mrf.mxu0
    %v3247 = vadd.f32 0.0, %v3246
    %v3248 = vpop.f32.mrf.mxu0
    %3249 = vmatprep.mubr.f32.mxu0 0.0
    %3250 = vmatmul.mubr.f32.gmra.mxu0 %v3164
    %v3251 = vpop.f32.mrf.mxu0
    %v3252 = vadd.f32 0.0, %v3251
    %v3253 = vpop.f32.mrf.mxu0
    %3254 = vmatprep.mubr.f32.mxu0 0.0
    %3255 = vmatmul.mubr.f32.gmra.mxu0 %v3167
    %v3256 = vpop.f32.mrf.mxu0
    %v3257 = vadd.f32 0.0, %v3256
    %v3258 = vpop.f32.mrf.mxu0
    %3259 = vmatprep.mubr.f32.mxu0 0.0
    %3260 = vmatmul.mubr.f32.gmra.mxu0 %v3170
    %v3261 = vpop.f32.mrf.mxu0
    %v3262 = vadd.f32 0.0, %v3261
    %v3263 = vpop.f32.mrf.mxu0
    %3264 = vmatprep.mubr.f32.mxu0 0.0
    %3265 = vmatmul.mubr.f32.gmra.mxu0 %v3173
    %v3266 = vpop.f32.mrf.mxu0
    %v3267 = vadd.f32 0.0, %v3266
    %v3268 = vpop.f32.mrf.mxu0
    %3269 = vdwg.mxu0
    %v3270 = vadd.f32 %v2908, %v3242
    %v3271 = vadd.f32 %v2909, %v3247
    %v3272 = vadd.f32 %v2910, %v3252
    %v3273 = vadd.f32 %v2911, %v3257
    %v3274 = vadd.f32 %v2912, %v3262
    %v3275 = vadd.f32 %v2913, %v3267
    %3276 = vst.msk [vmem:[%s8] sm:$0xff] %vm113, %v3270
    %3277 = vst.msk [vmem:[%s8 + $0x8] sm:$0xff] %vm113, %v3271
    %3278 = vst.msk [vmem:[%s8 + $0x10] sm:$0xff] %vm113, %v3272
    %3279 = vst.msk [vmem:[%s8 + $0x18] sm:$0xff] %vm113, %v3273
    %3280 = vst.msk [vmem:[%s8 + $0x20] sm:$0xff] %vm113, %v3274
    %3281 = vst.msk [vmem:[%s8 + $0x28] sm:$0xff] %vm113, %v3275
    // Predicated region
    $region54: #{_fused_forward.1} parent=1 // pred_check
      _
    $region55: #{_fused_forward.1} parent=1 // pred_check_branch
      %3283 = sbr.rel (0) target = $region57
    $region56: #{_fused_forward.1} parent=1 // pred_region
      _
    $region57: #{_fused_forward.1} parent=1 // pred_fallthru
      _
    // Predicated region
    $region58: #{_fused_forward.1} parent=1 // pred_check
      _
    $region59: #{_fused_forward.1} parent=1 // pred_check_branch
      %3285 = sbr.rel (0) target = $region61
    $region60: #{_fused_forward.1} parent=1 // pred_region
      _
    $region61: #{_fused_forward.1} parent=1 // pred_fallthru
      _
    %3286 = vsyncpa [#allocation3], 1
    %3287 = vsyncpa [#allocation5], 1
    %3288 = vsyncpa [#allocation8], 1

</llo_original>
